<compile_context>
chip_gen: v6e
topology: v6e:2x2x1
jax: 0.10.0
libtpu: 0.0.40
codegen_flags: <defaults>
</compile_context>

<pallas_src>
import functools

import jax
import jax.numpy as jnp
from jax.experimental import pallas as pl
from jax.experimental.pallas import tpu as pltpu  # noqa: F401  (TPU backend)

EPS = 1e-5      # nn.BatchNorm2d default eps
LANES = 128     # TPU vreg lane width


def _round_up(x, m):
    return ((x + m - 1) // m) * m


# ---------------------------------------------------------------------------
# Fused Pallas kernel: im2col GEMM + BatchNorm (batch stats) [+residual] [+act]
# ---------------------------------------------------------------------------
def _conv_fused_kernel(*refs, bn, groups, has_res, act, count):
    """Ref order: a (M,Kp) bf16, w (Kp,128) bf16,
                  [gamma (1,128) f32, beta (1,128) f32, [fold (128,128) f32]],
                  [residual (M,128) f32], out (M,128) f32."""
    it = iter(refs)
    a_ref = next(it)
    w_ref = next(it)
    if bn:
        g_ref = next(it)
        b_ref = next(it)
        if groups > 1:
            f_ref = next(it)
    if has_res:
        r_ref = next(it)
    o_ref = next(it)

    # MXU GEMM with f32 accumulation.
    y = jnp.dot(a_ref[...], w_ref[...], preferred_element_type=jnp.float32)

    if bn:
        if groups > 1:
            # Sub-pixel deconv: each channel occupies `groups` column groups.
            # fold[i, j] = 1 iff columns i and j hold the same channel, so
            # (X @ fold) broadcasts each channel's column-group sum back to
            # every one of its columns; padded (zero) columns stay zero.
            fold = f_ref[...]
            mean = jnp.sum(jnp.dot(y, fold, preferred_element_type=jnp.float32),
                           axis=0, keepdims=True) / count
            cen = y - mean
            var = jnp.sum(jnp.dot(cen * cen, fold,
                                  preferred_element_type=jnp.float32),
                          axis=0, keepdims=True) / count
        else:
            mean = jnp.sum(y, axis=0, keepdims=True) / count
            cen = y - mean
            var = jnp.sum(cen * cen, axis=0, keepdims=True) / count
        y = cen * jax.lax.rsqrt(var + EPS) * g_ref[...] + b_ref[...]

    if has_res:
        y = y + r_ref[...]          # ResnetBlock: x + BN(conv(x))

    if act == "relu":
        y = jnp.maximum(y, 0.0)
    elif act == "tanh_tanh":
        y = jnp.tanh(jnp.tanh(y))   # nn.Tanh() inside deconv2, then F.tanh

    o_ref[...] = y


def conv_fused(patches, wmat, cout, *, gamma=None, beta=None, residual=None,
               act=None, groups=1):
    """(M, K) @ (K, groups*cout) GEMM with fused BN / residual / activation.

    Returns an (M, 128) f32 slab: first groups*cout lanes real, rest zero.
    Single grid step, whole-array VMEM blocks, lane-dense stores.
    """
    M, K = patches.shape
    n_real = groups * cout
    assert n_real <= LANES
    Kp = _round_up(K, LANES)

    a = jnp.pad(patches.astype(jnp.bfloat16), ((0, 0), (0, Kp - K)))
    w = jnp.pad(wmat.astype(jnp.bfloat16), ((0, Kp - K), (0, LANES - n_real)))

    bn = gamma is not None
    has_res = residual is not None
    inputs = [a, w]
    if bn:
        g = jnp.pad(jnp.tile(gamma.astype(jnp.float32), groups),
                    (0, LANES - n_real)).reshape(1, LANES)
        b = jnp.pad(jnp.tile(beta.astype(jnp.float32), groups),
                    (0, LANES - n_real)).reshape(1, LANES)
        inputs += [g, b]
        if groups > 1:
            ii = jnp.arange(LANES)
            same_ch = (ii[:, None] % cout) == (ii[None, :] % cout)
            valid = (ii[:, None] < n_real) & (ii[None, :] < n_real)
            inputs.append(jnp.where(same_ch & valid, 1.0, 0.0))
    if has_res:
        inputs.append(residual.astype(jnp.float32))

    kernel = functools.partial(_conv_fused_kernel, bn=bn, groups=groups,
                               has_res=has_res, act=act,
                               count=float(M * groups))
    return pl.pallas_call(
        kernel,
        out_shape=jax.ShapeDtypeStruct((M, LANES), jnp.float32),
    )(*inputs)


# ---------------------------------------------------------------------------
# Plain-XLA layout glue: padding, im2col, sub-pixel weight/interleave
# ---------------------------------------------------------------------------
def reflect_pad(x, p):  # x NHWC
    return jnp.pad(x, ((0, 0), (p, p), (p, p), (0, 0)), mode="reflect")


def im2col(x, kh, kw, stride=1):
    B, H, W, C = x.shape
    Ho = (H - kh) // stride + 1
    Wo = (W - kw) // stride + 1
    cols = []
    for dy in range(kh):
        for dx in range(kw):
            cols.append(x[:, dy:dy + stride * (Ho - 1) + 1:stride,
                          dx:dx + stride * (Wo - 1) + 1:stride, :])
    patches = jnp.stack(cols, axis=3)                 # (B, Ho, Wo, kh*kw, C)
    return patches.reshape(B * Ho * Wo, kh * kw * C), (B, Ho, Wo)


def conv_layer(x, w, *, stride=1, pad=0, gamma=None, beta=None,
               residual=None, act=None):
    """x NHWC f32; w PyTorch layout (Cout, Cin, kh, kw).  One fused kernel."""
    if pad:
        x = jnp.pad(x, ((0, 0), (pad, pad), (pad, pad), (0, 0)))
    Cout, Cin, kh, kw = w.shape
    patches, (B, Ho, Wo) = im2col(x, kh, kw, stride)
    wm = jnp.transpose(w, (2, 3, 1, 0)).reshape(kh * kw * Cin, Cout)
    out_pad = conv_fused(patches, wm, Cout, gamma=gamma, beta=beta,
                         residual=residual, act=act)
    return out_pad, (B, Ho, Wo, Cout)


def deconv1_layer(x, w_t, gamma, beta, act="relu"):
    """ConvTranspose2d(k=4, s=2, p=1) + BN + act via sub-pixel decomposition.

    x: (B, H, W, Cin) NHWC; w_t: PyTorch layout (Cin, Cout, 4, 4).
    out[b, 2m+ay, 2n+ax, c] = sum_{i,j in {0,1}} x_pad[b, m+ay+i, n+ax+j, :]
                              . w_t[:, c, 3-(ay+2i), 3-(ax+2j)]
    with x_pad = x zero-padded by 1 on each spatial side.
    """
    B, H, W, Cin = x.shape
    Cout = w_t.shape[1]
    xp = jnp.pad(x, ((0, 0), (1, 1), (1, 1), (0, 0)))
    patches, _ = im2col(xp, 3, 3, 1)                  # (B*H*W, 9*Cin)

    # (9*Cin, 4*Cout) sub-pixel weight matrix; columns are parity-major.
    wmat = jnp.zeros((9 * Cin, 4 * Cout), jnp.float32)
    for ay in range(2):
        for ax in range(2):
            p = ay * 2 + ax
            for i in range(2):
                for j in range(2):
                    ip, jp = ay + i, ax + j           # tap in the 3x3 im2col
                    ky, kx = 3 - (ay + 2 * i), 3 - (ax + 2 * j)
                    tap = (ip * 3 + jp) * Cin
                    wmat = wmat.at[tap:tap + Cin,
                                   p * Cout:(p + 1) * Cout].set(w_t[:, :, ky, kx])

    out_pad = conv_fused(patches, wmat, Cout, gamma=gamma, beta=beta,
                         act=act, groups=4)

    # Interleave parities: (B*H*W, 4*Cout) -> (B, 2H, 2W, Cout).
    y = out_pad[:, :4 * Cout].reshape(B, H, W, 2, 2, Cout)
    y = jnp.transpose(y, (0, 1, 3, 2, 4, 5)).reshape(B, 2 * H, 2 * W, Cout)
    return y, (B, 2 * H, 2 * W, Cout)


# ---------------------------------------------------------------------------
# CycleGenerator parameters + forward
# ---------------------------------------------------------------------------
def init_params(key, conv_dim=8):
    C = conv_dim
    ks = jax.random.split(key, 10)
    sc = 0.05
    return {
        "conv1_w": jax.random.normal(ks[0], (C, 3, 7, 7), jnp.float32) * sc,
        "conv1_g": jnp.ones((C,), jnp.float32),
        "conv1_b": jnp.zeros((C,), jnp.float32),
        "conv2_w": jax.random.normal(ks[1], (2 * C, C, 3, 3), jnp.float32) * sc,
        "conv2_g": jnp.ones((2 * C,), jnp.float32),
        "conv2_b": jnp.zeros((2 * C,), jnp.float32),
        "res_w": [jax.random.normal(ks[2 + i], (2 * C, 2 * C, 3, 3),
                                    jnp.float32) * sc for i in range(6)],
        "res_g": [jnp.ones((2 * C,), jnp.float32) for _ in range(6)],
        "res_b": [jnp.zeros((2 * C,), jnp.float32) for _ in range(6)],
        "deconv1_w": jax.random.normal(ks[8], (2 * C, C, 4, 4), jnp.float32) * sc,
        "deconv1_g": jnp.ones((C,), jnp.float32),
        "deconv1_b": jnp.zeros((C,), jnp.float32),
        "deconv2_w": jax.random.normal(ks[9], (3, C, 7, 7), jnp.float32) * sc,
    }


def cycle_generator_forward(params, x_nchw):
    x = jnp.transpose(x_nchw, (0, 2, 3, 1)).astype(jnp.float32)   # -> NHWC

    # conv1: ReflectionPad2d(3) + Conv 7x7 s1 p0 + BN + ReLU (one fused kernel)
    h = reflect_pad(x, 3)
    out_pad, (B, Ho, Wo, C) = conv_layer(h, params["conv1_w"], stride=1, pad=0,
                                         gamma=params["conv1_g"],
                                         beta=params["conv1_b"], act="relu")
    h = out_pad[:, :C].reshape(B, Ho, Wo, C)

    # conv2: Conv 3x3 s2 p1 + BN + ReLU
    out_pad, (B, Ho, Wo, C) = conv_layer(h, params["conv2_w"], stride=2, pad=1,
                                         gamma=params["conv2_g"],
                                         beta=params["conv2_b"], act="relu")
    h = out_pad[:, :C].reshape(B, Ho, Wo, C)

    # 6 ResnetBlocks: x + BN(Conv 3x3 s1 p1 (x)); the single post-stack ReLU is
    # fused into the last block's kernel.  Residual fed as the previous fused
    # kernel's lane-padded output (padded lanes stay zero through the chain).
    for i in range(6):
        act = "relu" if i == 5 else None
        out_pad, _ = conv_layer(h, params["res_w"][i], stride=1, pad=1,
                                gamma=params["res_g"][i],
                                beta=params["res_b"][i],
                                residual=out_pad, act=act)
        h = out_pad[:, :C].reshape(B, Ho, Wo, C)

    # deconv1: ConvTranspose2d(2C->C, k4, s2, p1) + BN + ReLU (sub-pixel GEMM)
    h, (B, Ho, Wo, C) = deconv1_layer(h, params["deconv1_w"],
                                      params["deconv1_g"], params["deconv1_b"],
                                      act="relu")

    # deconv2: ReflectionPad2d(3) + Conv 7x7 (no bias) + Tanh, then F.tanh again
    hp = reflect_pad(h, 3)
    out_pad, (B, Ho, Wo, C) = conv_layer(hp, params["deconv2_w"], stride=1,
                                         pad=0, act="tanh_tanh")
    h = out_pad[:, :C].reshape(B, Ho, Wo, C)

    return jnp.transpose(h, (0, 3, 1, 2))   # -> NCHW


if __name__ == "__main__":
    key = jax.random.PRNGKey(0)
    k_x, k_p = jax.random.split(key)

    conv_dim = 8
    x = jax.random.normal(k_x, (2, 3, 16, 16), jnp.float32)   # NCHW like PyTorch
    params = init_params(k_p, conv_dim=conv_dim)

    fwd = jax.jit(cycle_generator_forward)
    out = jax.block_until_ready(fwd(params, x))

    assert out.shape == (2, 3, 16, 16), out.shape
    assert bool(jnp.all(jnp.isfinite(out)))
    # tanh(tanh(.)) output must lie strictly inside (-1, 1)
    assert bool(jnp.all(jnp.abs(out) < 1.0))
    print("KERNEL_OK")
</pallas_src>

<mosaic_0001>
module attributes {stable_mosaic.version = 11 : i64} {
  func.func @_conv_fused_kernel(%arg0: memref<512x256xbf16, #tpu.memory_space<vmem>>, %arg1: memref<256x128xbf16, #tpu.memory_space<vmem>>, %arg2: memref<1x128xf32, #tpu.memory_space<vmem>>, %arg3: memref<1x128xf32, #tpu.memory_space<vmem>>, %arg4: memref<512x128xf32, #tpu.memory_space<vmem>>) attributes {dimension_semantics = [], scalar_prefetch = 0 : i64, scratch_operands = 0 : i64, tpu.core_type = #tpu.core_type<tc>} {
    %c0 = arith.constant 0 : index
    %c0_0 = arith.constant 0 : index
    %0 = vector.load %arg0[%c0, %c0_0] : memref<512x256xbf16, #tpu.memory_space<vmem>>, vector<512x256xbf16>
    %c0_1 = arith.constant 0 : index
    %c0_2 = arith.constant 0 : index
    %1 = vector.load %arg1[%c0_1, %c0_2] : memref<256x128xbf16, #tpu.memory_space<vmem>>, vector<256x128xbf16>
    %cst = arith.constant dense<0.000000e+00> : vector<512x128xf32>
    %2 = tpu.matmul %0, %1, %cst {dimension_numbers = #tpu.dot_dimension_numbers<[1], [0], [0], [1], [0, 0, 1, 1], [], []>} : vector<512x256xbf16>, vector<256x128xbf16>, vector<512x128xf32> -> vector<512x128xf32>
    %cst_3 = arith.constant dense<0.000000e+00> : vector<128xf32>
    %3 = vector.multi_reduction <add>, %2, %cst_3 [0] : vector<512x128xf32> to vector<128xf32>
    %4 = vector.shape_cast %3 : vector<128xf32> to vector<1x128xf32>
    %cst_4 = arith.constant 5.120000e+02 : f32
    %5 = vector.broadcast %cst_4 : f32 to vector<1x128xf32>
    %6 = arith.divf %4, %5 : vector<1x128xf32>
    %7 = vector.broadcast %6 : vector<1x128xf32> to vector<512x128xf32>
    %8 = arith.subf %2, %7 : vector<512x128xf32>
    %9 = arith.mulf %8, %8 : vector<512x128xf32>
    %cst_5 = arith.constant dense<0.000000e+00> : vector<128xf32>
    %10 = vector.multi_reduction <add>, %9, %cst_5 [0] : vector<512x128xf32> to vector<128xf32>
    %11 = vector.shape_cast %10 : vector<128xf32> to vector<1x128xf32>
    %cst_6 = arith.constant 5.120000e+02 : f32
    %12 = vector.broadcast %cst_6 : f32 to vector<1x128xf32>
    %13 = arith.divf %11, %12 : vector<1x128xf32>
    %cst_7 = arith.constant 9.99999974E-6 : f32
    %14 = vector.broadcast %cst_7 : f32 to vector<1x128xf32>
    %15 = arith.addf %13, %14 : vector<1x128xf32>
    %16 = math.rsqrt %15 : vector<1x128xf32>
    %17 = vector.broadcast %16 : vector<1x128xf32> to vector<512x128xf32>
    %18 = arith.mulf %8, %17 : vector<512x128xf32>
    %c0_8 = arith.constant 0 : index
    %c0_9 = arith.constant 0 : index
    %19 = vector.load %arg2[%c0_8, %c0_9] : memref<1x128xf32, #tpu.memory_space<vmem>>, vector<1x128xf32>
    %20 = vector.broadcast %19 : vector<1x128xf32> to vector<512x128xf32>
    %21 = arith.mulf %18, %20 : vector<512x128xf32>
    %c0_10 = arith.constant 0 : index
    %c0_11 = arith.constant 0 : index
    %22 = vector.load %arg3[%c0_10, %c0_11] : memref<1x128xf32, #tpu.memory_space<vmem>>, vector<1x128xf32>
    %23 = vector.broadcast %22 : vector<1x128xf32> to vector<512x128xf32>
    %24 = arith.addf %21, %23 : vector<512x128xf32>
    %cst_12 = arith.constant 0.000000e+00 : f32
    %25 = vector.broadcast %cst_12 : f32 to vector<512x128xf32>
    %26 = arith.maximumf %24, %25 : vector<512x128xf32>
    %c0_13 = arith.constant 0 : index
    %c0_14 = arith.constant 0 : index
    %27 = vector.load %arg4[%c0_13, %c0_14] : memref<512x128xf32, #tpu.memory_space<vmem>>, vector<512x128xf32>
    tpu.vector_store %arg4[%c0_13, %c0_14], %26 {strides = array<i32>} : memref<512x128xf32, #tpu.memory_space<vmem>>, vector<512x128xf32>,
    return
  }
}

module attributes {stable_mosaic.version = 11 : i64} {
  func.func @_conv_fused_kernel(%arg0: memref<128x128xbf16, #tpu.memory_space<vmem>>, %arg1: memref<128x128xbf16, #tpu.memory_space<vmem>>, %arg2: memref<1x128xf32, #tpu.memory_space<vmem>>, %arg3: memref<1x128xf32, #tpu.memory_space<vmem>>, %arg4: memref<128x128xf32, #tpu.memory_space<vmem>>) attributes {dimension_semantics = [], scalar_prefetch = 0 : i64, scratch_operands = 0 : i64, tpu.core_type = #tpu.core_type<tc>} {
    %c0 = arith.constant 0 : index
    %c0_0 = arith.constant 0 : index
    %0 = vector.load %arg0[%c0, %c0_0] : memref<128x128xbf16, #tpu.memory_space<vmem>>, vector<128x128xbf16>
    %c0_1 = arith.constant 0 : index
    %c0_2 = arith.constant 0 : index
    %1 = vector.load %arg1[%c0_1, %c0_2] : memref<128x128xbf16, #tpu.memory_space<vmem>>, vector<128x128xbf16>
    %cst = arith.constant dense<0.000000e+00> : vector<128x128xf32>
    %2 = tpu.matmul %0, %1, %cst {dimension_numbers = #tpu.dot_dimension_numbers<[1], [0], [0], [1], [0, 0, 1, 1], [], []>} : vector<128x128xbf16>, vector<128x128xbf16>, vector<128x128xf32> -> vector<128x128xf32>
    %cst_3 = arith.constant dense<0.000000e+00> : vector<128xf32>
    %3 = vector.multi_reduction <add>, %2, %cst_3 [0] : vector<128x128xf32> to vector<128xf32>
    %4 = vector.shape_cast %3 : vector<128xf32> to vector<1x128xf32>
    %cst_4 = arith.constant 1.280000e+02 : f32
    %5 = vector.broadcast %cst_4 : f32 to vector<1x128xf32>
    %6 = arith.divf %4, %5 : vector<1x128xf32>
    %7 = vector.broadcast %6 : vector<1x128xf32> to vector<128x128xf32>
    %8 = arith.subf %2, %7 : vector<128x128xf32>
    %9 = arith.mulf %8, %8 : vector<128x128xf32>
    %cst_5 = arith.constant dense<0.000000e+00> : vector<128xf32>
    %10 = vector.multi_reduction <add>, %9, %cst_5 [0] : vector<128x128xf32> to vector<128xf32>
    %11 = vector.shape_cast %10 : vector<128xf32> to vector<1x128xf32>
    %cst_6 = arith.constant 1.280000e+02 : f32
    %12 = vector.broadcast %cst_6 : f32 to vector<1x128xf32>
    %13 = arith.divf %11, %12 : vector<1x128xf32>
    %cst_7 = arith.constant 9.99999974E-6 : f32
    %14 = vector.broadcast %cst_7 : f32 to vector<1x128xf32>
    %15 = arith.addf %13, %14 : vector<1x128xf32>
    %16 = math.rsqrt %15 : vector<1x128xf32>
    %17 = vector.broadcast %16 : vector<1x128xf32> to vector<128x128xf32>
    %18 = arith.mulf %8, %17 : vector<128x128xf32>
    %c0_8 = arith.constant 0 : index
    %c0_9 = arith.constant 0 : index
    %19 = vector.load %arg2[%c0_8, %c0_9] : memref<1x128xf32, #tpu.memory_space<vmem>>, vector<1x128xf32>
    %20 = vector.broadcast %19 : vector<1x128xf32> to vector<128x128xf32>
    %21 = arith.mulf %18, %20 : vector<128x128xf32>
    %c0_10 = arith.constant 0 : index
    %c0_11 = arith.constant 0 : index
    %22 = vector.load %arg3[%c0_10, %c0_11] : memref<1x128xf32, #tpu.memory_space<vmem>>, vector<1x128xf32>
    %23 = vector.broadcast %22 : vector<1x128xf32> to vector<128x128xf32>
    %24 = arith.addf %21, %23 : vector<128x128xf32>
    %cst_12 = arith.constant 0.000000e+00 : f32
    %25 = vector.broadcast %cst_12 : f32 to vector<128x128xf32>
    %26 = arith.maximumf %24, %25 : vector<128x128xf32>
    %c0_13 = arith.constant 0 : index
    %c0_14 = arith.constant 0 : index
    %27 = vector.load %arg4[%c0_13, %c0_14] : memref<128x128xf32, #tpu.memory_space<vmem>>, vector<128x128xf32>
    tpu.vector_store %arg4[%c0_13, %c0_14], %26 {strides = array<i32>} : memref<128x128xf32, #tpu.memory_space<vmem>>, vector<128x128xf32>,
    return
  }
}

module attributes {stable_mosaic.version = 11 : i64} {
  func.func @_conv_fused_kernel(%arg0: memref<128x256xbf16, #tpu.memory_space<vmem>>, %arg1: memref<256x128xbf16, #tpu.memory_space<vmem>>, %arg2: memref<1x128xf32, #tpu.memory_space<vmem>>, %arg3: memref<1x128xf32, #tpu.memory_space<vmem>>, %arg4: memref<128x128xf32, #tpu.memory_space<vmem>>, %arg5: memref<128x128xf32, #tpu.memory_space<vmem>>) attributes {dimension_semantics = [], scalar_prefetch = 0 : i64, scratch_operands = 0 : i64, tpu.core_type = #tpu.core_type<tc>} {
    %c0 = arith.constant 0 : index
    %c0_0 = arith.constant 0 : index
    %0 = vector.load %arg0[%c0, %c0_0] : memref<128x256xbf16, #tpu.memory_space<vmem>>, vector<128x256xbf16>
    %c0_1 = arith.constant 0 : index
    %c0_2 = arith.constant 0 : index
    %1 = vector.load %arg1[%c0_1, %c0_2] : memref<256x128xbf16, #tpu.memory_space<vmem>>, vector<256x128xbf16>
    %cst = arith.constant dense<0.000000e+00> : vector<128x128xf32>
    %2 = tpu.matmul %0, %1, %cst {dimension_numbers = #tpu.dot_dimension_numbers<[1], [0], [0], [1], [0, 0, 1, 1], [], []>} : vector<128x256xbf16>, vector<256x128xbf16>, vector<128x128xf32> -> vector<128x128xf32>
    %cst_3 = arith.constant dense<0.000000e+00> : vector<128xf32>
    %3 = vector.multi_reduction <add>, %2, %cst_3 [0] : vector<128x128xf32> to vector<128xf32>
    %4 = vector.shape_cast %3 : vector<128xf32> to vector<1x128xf32>
    %cst_4 = arith.constant 1.280000e+02 : f32
    %5 = vector.broadcast %cst_4 : f32 to vector<1x128xf32>
    %6 = arith.divf %4, %5 : vector<1x128xf32>
    %7 = vector.broadcast %6 : vector<1x128xf32> to vector<128x128xf32>
    %8 = arith.subf %2, %7 : vector<128x128xf32>
    %9 = arith.mulf %8, %8 : vector<128x128xf32>
    %cst_5 = arith.constant dense<0.000000e+00> : vector<128xf32>
    %10 = vector.multi_reduction <add>, %9, %cst_5 [0] : vector<128x128xf32> to vector<128xf32>
    %11 = vector.shape_cast %10 : vector<128xf32> to vector<1x128xf32>
    %cst_6 = arith.constant 1.280000e+02 : f32
    %12 = vector.broadcast %cst_6 : f32 to vector<1x128xf32>
    %13 = arith.divf %11, %12 : vector<1x128xf32>
    %cst_7 = arith.constant 9.99999974E-6 : f32
    %14 = vector.broadcast %cst_7 : f32 to vector<1x128xf32>
    %15 = arith.addf %13, %14 : vector<1x128xf32>
    %16 = math.rsqrt %15 : vector<1x128xf32>
    %17 = vector.broadcast %16 : vector<1x128xf32> to vector<128x128xf32>
    %18 = arith.mulf %8, %17 : vector<128x128xf32>
    %c0_8 = arith.constant 0 : index
    %c0_9 = arith.constant 0 : index
    %19 = vector.load %arg2[%c0_8, %c0_9] : memref<1x128xf32, #tpu.memory_space<vmem>>, vector<1x128xf32>
    %20 = vector.broadcast %19 : vector<1x128xf32> to vector<128x128xf32>
    %21 = arith.mulf %18, %20 : vector<128x128xf32>
    %c0_10 = arith.constant 0 : index
    %c0_11 = arith.constant 0 : index
    %22 = vector.load %arg3[%c0_10, %c0_11] : memref<1x128xf32, #tpu.memory_space<vmem>>, vector<1x128xf32>
    %23 = vector.broadcast %22 : vector<1x128xf32> to vector<128x128xf32>
    %24 = arith.addf %21, %23 : vector<128x128xf32>
    %c0_12 = arith.constant 0 : index
    %c0_13 = arith.constant 0 : index
    %25 = vector.load %arg4[%c0_12, %c0_13] : memref<128x128xf32, #tpu.memory_space<vmem>>, vector<128x128xf32>
    %26 = arith.addf %24, %25 : vector<128x128xf32>
    %c0_14 = arith.constant 0 : index
    %c0_15 = arith.constant 0 : index
    %27 = vector.load %arg5[%c0_14, %c0_15] : memref<128x128xf32, #tpu.memory_space<vmem>>, vector<128x128xf32>
    tpu.vector_store %arg5[%c0_14, %c0_15], %26 {strides = array<i32>} : memref<128x128xf32, #tpu.memory_space<vmem>>, vector<128x128xf32>,
    return
  }
}

module attributes {stable_mosaic.version = 11 : i64} {
  func.func @_conv_fused_kernel(%arg0: memref<128x256xbf16, #tpu.memory_space<vmem>>, %arg1: memref<256x128xbf16, #tpu.memory_space<vmem>>, %arg2: memref<1x128xf32, #tpu.memory_space<vmem>>, %arg3: memref<1x128xf32, #tpu.memory_space<vmem>>, %arg4: memref<128x128xf32, #tpu.memory_space<vmem>>, %arg5: memref<128x128xf32, #tpu.memory_space<vmem>>) attributes {dimension_semantics = [], scalar_prefetch = 0 : i64, scratch_operands = 0 : i64, tpu.core_type = #tpu.core_type<tc>} {
    %c0 = arith.constant 0 : index
    %c0_0 = arith.constant 0 : index
    %0 = vector.load %arg0[%c0, %c0_0] : memref<128x256xbf16, #tpu.memory_space<vmem>>, vector<128x256xbf16>
    %c0_1 = arith.constant 0 : index
    %c0_2 = arith.constant 0 : index
    %1 = vector.load %arg1[%c0_1, %c0_2] : memref<256x128xbf16, #tpu.memory_space<vmem>>, vector<256x128xbf16>
    %cst = arith.constant dense<0.000000e+00> : vector<128x128xf32>
    %2 = tpu.matmul %0, %1, %cst {dimension_numbers = #tpu.dot_dimension_numbers<[1], [0], [0], [1], [0, 0, 1, 1], [], []>} : vector<128x256xbf16>, vector<256x128xbf16>, vector<128x128xf32> -> vector<128x128xf32>
    %cst_3 = arith.constant dense<0.000000e+00> : vector<128xf32>
    %3 = vector.multi_reduction <add>, %2, %cst_3 [0] : vector<128x128xf32> to vector<128xf32>
    %4 = vector.shape_cast %3 : vector<128xf32> to vector<1x128xf32>
    %cst_4 = arith.constant 1.280000e+02 : f32
    %5 = vector.broadcast %cst_4 : f32 to vector<1x128xf32>
    %6 = arith.divf %4, %5 : vector<1x128xf32>
    %7 = vector.broadcast %6 : vector<1x128xf32> to vector<128x128xf32>
    %8 = arith.subf %2, %7 : vector<128x128xf32>
    %9 = arith.mulf %8, %8 : vector<128x128xf32>
    %cst_5 = arith.constant dense<0.000000e+00> : vector<128xf32>
    %10 = vector.multi_reduction <add>, %9, %cst_5 [0] : vector<128x128xf32> to vector<128xf32>
    %11 = vector.shape_cast %10 : vector<128xf32> to vector<1x128xf32>
    %cst_6 = arith.constant 1.280000e+02 : f32
    %12 = vector.broadcast %cst_6 : f32 to vector<1x128xf32>
    %13 = arith.divf %11, %12 : vector<1x128xf32>
    %cst_7 = arith.constant 9.99999974E-6 : f32
    %14 = vector.broadcast %cst_7 : f32 to vector<1x128xf32>
    %15 = arith.addf %13, %14 : vector<1x128xf32>
    %16 = math.rsqrt %15 : vector<1x128xf32>
    %17 = vector.broadcast %16 : vector<1x128xf32> to vector<128x128xf32>
    %18 = arith.mulf %8, %17 : vector<128x128xf32>
    %c0_8 = arith.constant 0 : index
    %c0_9 = arith.constant 0 : index
    %19 = vector.load %arg2[%c0_8, %c0_9] : memref<1x128xf32, #tpu.memory_space<vmem>>, vector<1x128xf32>
    %20 = vector.broadcast %19 : vector<1x128xf32> to vector<128x128xf32>
    %21 = arith.mulf %18, %20 : vector<128x128xf32>
    %c0_10 = arith.constant 0 : index
    %c0_11 = arith.constant 0 : index
    %22 = vector.load %arg3[%c0_10, %c0_11] : memref<1x128xf32, #tpu.memory_space<vmem>>, vector<1x128xf32>
    %23 = vector.broadcast %22 : vector<1x128xf32> to vector<128x128xf32>
    %24 = arith.addf %21, %23 : vector<128x128xf32>
    %c0_12 = arith.constant 0 : index
    %c0_13 = arith.constant 0 : index
    %25 = vector.load %arg4[%c0_12, %c0_13] : memref<128x128xf32, #tpu.memory_space<vmem>>, vector<128x128xf32>
    %26 = arith.addf %24, %25 : vector<128x128xf32>
    %cst_14 = arith.constant 0.000000e+00 : f32
    %27 = vector.broadcast %cst_14 : f32 to vector<128x128xf32>
    %28 = arith.maximumf %26, %27 : vector<128x128xf32>
    %c0_15 = arith.constant 0 : index
    %c0_16 = arith.constant 0 : index
    %29 = vector.load %arg5[%c0_15, %c0_16] : memref<128x128xf32, #tpu.memory_space<vmem>>, vector<128x128xf32>
    tpu.vector_store %arg5[%c0_15, %c0_16], %28 {strides = array<i32>} : memref<128x128xf32, #tpu.memory_space<vmem>>, vector<128x128xf32>,
    return
  }
}

module attributes {stable_mosaic.version = 11 : i64} {
  func.func @_conv_fused_kernel(%arg0: memref<128x256xbf16, #tpu.memory_space<vmem>>, %arg1: memref<256x128xbf16, #tpu.memory_space<vmem>>, %arg2: memref<1x128xf32, #tpu.memory_space<vmem>>, %arg3: memref<1x128xf32, #tpu.memory_space<vmem>>, %arg4: memref<128x128xf32, #tpu.memory_space<vmem>>, %arg5: memref<128x128xf32, #tpu.memory_space<vmem>>) attributes {dimension_semantics = [], scalar_prefetch = 0 : i64, scratch_operands = 0 : i64, tpu.core_type = #tpu.core_type<tc>} {
    %c0 = arith.constant 0 : index
    %c0_0 = arith.constant 0 : index
    %0 = vector.load %arg0[%c0, %c0_0] : memref<128x256xbf16, #tpu.memory_space<vmem>>, vector<128x256xbf16>
    %c0_1 = arith.constant 0 : index
    %c0_2 = arith.constant 0 : index
    %1 = vector.load %arg1[%c0_1, %c0_2] : memref<256x128xbf16, #tpu.memory_space<vmem>>, vector<256x128xbf16>
    %cst = arith.constant dense<0.000000e+00> : vector<128x128xf32>
    %2 = tpu.matmul %0, %1, %cst {dimension_numbers = #tpu.dot_dimension_numbers<[1], [0], [0], [1], [0, 0, 1, 1], [], []>} : vector<128x256xbf16>, vector<256x128xbf16>, vector<128x128xf32> -> vector<128x128xf32>
    %c0_3 = arith.constant 0 : index
    %c0_4 = arith.constant 0 : index
    %3 = vector.load %arg4[%c0_3, %c0_4] : memref<128x128xf32, #tpu.memory_space<vmem>>, vector<128x128xf32>
    %4 = vector.shape_cast %3 : vector<128x128xf32> to vector<128x128xf32>
    %cst_5 = arith.constant dense<0.000000e+00> : vector<128x128xf32>
    %5 = tpu.matmul %2, %4, %cst_5 {dimension_numbers = #tpu.dot_dimension_numbers<[1], [0], [0], [1], [0, 0, 1, 1], [], []>} : vector<128x128xf32>, vector<128x128xf32>, vector<128x128xf32> -> vector<128x128xf32>
    %cst_6 = arith.constant dense<0.000000e+00> : vector<128xf32>
    %6 = vector.multi_reduction <add>, %5, %cst_6 [0] : vector<128x128xf32> to vector<128xf32>
    %7 = vector.shape_cast %6 : vector<128xf32> to vector<1x128xf32>
    %cst_7 = arith.constant 5.120000e+02 : f32
    %8 = vector.broadcast %cst_7 : f32 to vector<1x128xf32>
    %9 = arith.divf %7, %8 : vector<1x128xf32>
    %10 = vector.broadcast %9 : vector<1x128xf32> to vector<128x128xf32>
    %11 = arith.subf %2, %10 : vector<128x128xf32>
    %12 = arith.mulf %11, %11 : vector<128x128xf32>
    %cst_8 = arith.constant dense<0.000000e+00> : vector<128x128xf32>
    %13 = tpu.matmul %12, %4, %cst_8 {dimension_numbers = #tpu.dot_dimension_numbers<[1], [0], [0], [1], [0, 0, 1, 1], [], []>} : vector<128x128xf32>, vector<128x128xf32>, vector<128x128xf32> -> vector<128x128xf32>
    %cst_9 = arith.constant dense<0.000000e+00> : vector<128xf32>
    %14 = vector.multi_reduction <add>, %13, %cst_9 [0] : vector<128x128xf32> to vector<128xf32>
    %15 = vector.shape_cast %14 : vector<128xf32> to vector<1x128xf32>
    %cst_10 = arith.constant 5.120000e+02 : f32
    %16 = vector.broadcast %cst_10 : f32 to vector<1x128xf32>
    %17 = arith.divf %15, %16 : vector<1x128xf32>
    %cst_11 = arith.constant 9.99999974E-6 : f32
    %18 = vector.broadcast %cst_11 : f32 to vector<1x128xf32>
    %19 = arith.addf %17, %18 : vector<1x128xf32>
    %20 = math.rsqrt %19 : vector<1x128xf32>
    %21 = vector.broadcast %20 : vector<1x128xf32> to vector<128x128xf32>
    %22 = arith.mulf %11, %21 : vector<128x128xf32>
    %c0_12 = arith.constant 0 : index
    %c0_13 = arith.constant 0 : index
    %23 = vector.load %arg2[%c0_12, %c0_13] : memref<1x128xf32, #tpu.memory_space<vmem>>, vector<1x128xf32>
    %24 = vector.broadcast %23 : vector<1x128xf32> to vector<128x128xf32>
    %25 = arith.mulf %22, %24 : vector<128x128xf32>
    %c0_14 = arith.constant 0 : index
    %c0_15 = arith.constant 0 : index
    %26 = vector.load %arg3[%c0_14, %c0_15] : memref<1x128xf32, #tpu.memory_space<vmem>>, vector<1x128xf32>
    %27 = vector.broadcast %26 : vector<1x128xf32> to vector<128x128xf32>
    %28 = arith.addf %25, %27 : vector<128x128xf32>
    %cst_16 = arith.constant 0.000000e+00 : f32
    %29 = vector.broadcast %cst_16 : f32 to vector<128x128xf32>
    %30 = arith.maximumf %28, %29 : vector<128x128xf32>
    %c0_17 = arith.constant 0 : index
    %c0_18 = arith.constant 0 : index
    %31 = vector.load %arg5[%c0_17, %c0_18] : memref<128x128xf32, #tpu.memory_space<vmem>>, vector<128x128xf32>
    tpu.vector_store %arg5[%c0_17, %c0_18], %30 {strides = array<i32>} : memref<128x128xf32, #tpu.memory_space<vmem>>, vector<128x128xf32>,
    return
  }
}

module attributes {stable_mosaic.version = 11 : i64} {
  func.func @_conv_fused_kernel(%arg0: memref<512x512xbf16, #tpu.memory_space<vmem>>, %arg1: memref<512x128xbf16, #tpu.memory_space<vmem>>, %arg2: memref<512x128xf32, #tpu.memory_space<vmem>>) attributes {dimension_semantics = [], scalar_prefetch = 0 : i64, scratch_operands = 0 : i64, tpu.core_type = #tpu.core_type<tc>} {
    %c0 = arith.constant 0 : index
    %c0_0 = arith.constant 0 : index
    %0 = vector.load %arg0[%c0, %c0_0] : memref<512x512xbf16, #tpu.memory_space<vmem>>, vector<512x512xbf16>
    %c0_1 = arith.constant 0 : index
    %c0_2 = arith.constant 0 : index
    %1 = vector.load %arg1[%c0_1, %c0_2] : memref<512x128xbf16, #tpu.memory_space<vmem>>, vector<512x128xbf16>
    %cst = arith.constant dense<0.000000e+00> : vector<512x128xf32>
    %2 = tpu.matmul %0, %1, %cst {dimension_numbers = #tpu.dot_dimension_numbers<[1], [0], [0], [1], [0, 0, 1, 1], [], []>} : vector<512x512xbf16>, vector<512x128xbf16>, vector<512x128xf32> -> vector<512x128xf32>
    %3 = math.tanh %2 : vector<512x128xf32>
    %4 = math.tanh %3 : vector<512x128xf32>
    %c0_3 = arith.constant 0 : index
    %c0_4 = arith.constant 0 : index
    %5 = vector.load %arg2[%c0_3, %c0_4] : memref<512x128xf32, #tpu.memory_space<vmem>>, vector<512x128xf32>
    tpu.vector_store %arg2[%c0_3, %c0_4], %4 {strides = array<i32>} : memref<512x128xf32, #tpu.memory_space<vmem>>, vector<512x128xf32>,
    return
  }
}

</mosaic_0001>

<llo_original>
// kernel: cycle_generator_forward.10
$region0: #{cycle_generator_forward.10}
  #allocation0 [shape = 'u32[]', space=smem, size = 0x4, offset = 0x4, fixed_abs, tag = 'smem constant byte address 0x4 - core index']
  #allocation1 [shape = 'u32[144,128]{1,0:T(1,128)}', space=vmem, size = 0x12000, scoped, tag = 'internal scratch']
  %s0 = inlined_call_operand.vmem [shape: bf16[512,256], index: 0, kind: input, shape index: {}]
  %s1 = inlined_call_operand.vmem [shape: bf16[256,128], index: 1, kind: input, shape index: {}]
  %s2 = inlined_call_operand.vmem [shape: f32[1,128], index: 2, kind: input, shape index: {}]
  %s3 = inlined_call_operand.vmem [shape: f32[1,128], index: 3, kind: input, shape index: {}]
  %s4 = inlined_call_operand.vmem [shape: f32[512,128], index: 4, kind: output, shape index: {}]
  %s5 = sld [smem:[#allocation0]]
  $region26: #{cycle_generator_forward.10} parent=0
    _
  %s7 = ssub.s32 1, %s5
  %s8 = scalar_select 0, %s7, %s5
  // Predicated region
  $region2: #{cycle_generator_forward.10} parent=0 // pred_check
    _
  $region3: #{cycle_generator_forward.10} parent=0 // pred_check_branch
    %10 = sbr.rel (0) target = $region5
  $region4: #{cycle_generator_forward.10} parent=0 // pred_region
    _
  $region5: #{cycle_generator_forward.10} parent=0 // pred_fallthru
    _
  // Predicated region
  $region6: #{cycle_generator_forward.10} parent=0 // pred_check
    _
  $region7: #{cycle_generator_forward.10} parent=0 // pred_check_branch
    %12 = sbr.rel (0) target = $region9
  $region8: #{cycle_generator_forward.10} parent=0 // pred_region
    _
  $region9: #{cycle_generator_forward.10} parent=0 // pred_fallthru
    _
  // Predicated region
  $region10: #{cycle_generator_forward.10} parent=0 // pred_check
    _
  $region11: #{cycle_generator_forward.10} parent=0 // pred_check_branch
    %14 = sbr.rel (0) target = $region13
  $region12: #{cycle_generator_forward.10} parent=0 // pred_region
    _
  $region13: #{cycle_generator_forward.10} parent=0 // pred_fallthru
    _
  // Predicated region
  $region14: #{cycle_generator_forward.10} parent=0 // pred_check
    _
  $region15: #{cycle_generator_forward.10} parent=0 // pred_check_branch
    %16 = sbr.rel (0) target = $region17
  $region16: #{cycle_generator_forward.10} parent=0 // pred_region
    _
  $region17: #{cycle_generator_forward.10} parent=0 // pred_fallthru
    _
  %v18 = vld [vmem:[%s0] sm:$0xff]
  %v19 = vld [vmem:[%s0 + $0x8] sm:$0xff]
  %v20 = vld [vmem:[%s0 + $0x10] sm:$0xff]
  %v21 = vld [vmem:[%s0 + $0x18] sm:$0xff]
  %v22 = vld [vmem:[%s0 + $0x20] sm:$0xff]
  %v23 = vld [vmem:[%s0 + $0x28] sm:$0xff]
  %v24 = vld [vmem:[%s0 + $0x30] sm:$0xff]
  %v25 = vld [vmem:[%s0 + $0x38] sm:$0xff]
  %v26 = vld [vmem:[%s0 + $0x40] sm:$0xff]
  %v27 = vld [vmem:[%s0 + $0x48] sm:$0xff]
  %v28 = vld [vmem:[%s0 + $0x50] sm:$0xff]
  %v29 = vld [vmem:[%s0 + $0x58] sm:$0xff]
  %v30 = vld [vmem:[%s0 + $0x60] sm:$0xff]
  %v31 = vld [vmem:[%s0 + $0x68] sm:$0xff]
  %v32 = vld [vmem:[%s0 + $0x70] sm:$0xff]
  %v33 = vld [vmem:[%s0 + $0x78] sm:$0xff]
  %v34 = vld [vmem:[%s0 + $0x80] sm:$0xff]
  %v35 = vld [vmem:[%s0 + $0x88] sm:$0xff]
  %v36 = vld [vmem:[%s0 + $0x90] sm:$0xff]
  %v37 = vld [vmem:[%s0 + $0x98] sm:$0xff]
  %v38 = vld [vmem:[%s0 + $0xa0] sm:$0xff]
  %v39 = vld [vmem:[%s0 + $0xa8] sm:$0xff]
  %v40 = vld [vmem:[%s0 + $0xb0] sm:$0xff]
  %v41 = vld [vmem:[%s0 + $0xb8] sm:$0xff]
  %v42 = vld [vmem:[%s0 + $0xc0] sm:$0xff]
  %v43 = vld [vmem:[%s0 + $0xc8] sm:$0xff]
  %v44 = vld [vmem:[%s0 + $0xd0] sm:$0xff]
  %v45 = vld [vmem:[%s0 + $0xd8] sm:$0xff]
  %v46 = vld [vmem:[%s0 + $0xe0] sm:$0xff]
  %v47 = vld [vmem:[%s0 + $0xe8] sm:$0xff]
  %v48 = vld [vmem:[%s0 + $0xf0] sm:$0xff]
  %v49 = vld [vmem:[%s0 + $0xf8] sm:$0xff]
  %v50 = vld [vmem:[%s0 + $0x100] sm:$0xff]
  %v51 = vld [vmem:[%s0 + $0x108] sm:$0xff]
  %v52 = vld [vmem:[%s0 + $0x110] sm:$0xff]
  %v53 = vld [vmem:[%s0 + $0x118] sm:$0xff]
  %v54 = vld [vmem:[%s0 + $0x120] sm:$0xff]
  %v55 = vld [vmem:[%s0 + $0x128] sm:$0xff]
  %v56 = vld [vmem:[%s0 + $0x130] sm:$0xff]
  %v57 = vld [vmem:[%s0 + $0x138] sm:$0xff]
  %v58 = vld [vmem:[%s0 + $0x140] sm:$0xff]
  %v59 = vld [vmem:[%s0 + $0x148] sm:$0xff]
  %v60 = vld [vmem:[%s0 + $0x150] sm:$0xff]
  %v61 = vld [vmem:[%s0 + $0x158] sm:$0xff]
  %v62 = vld [vmem:[%s0 + $0x160] sm:$0xff]
  %v63 = vld [vmem:[%s0 + $0x168] sm:$0xff]
  %v64 = vld [vmem:[%s0 + $0x170] sm:$0xff]
  %v65 = vld [vmem:[%s0 + $0x178] sm:$0xff]
  %v66 = vld [vmem:[%s0 + $0x180] sm:$0xff]
  %v67 = vld [vmem:[%s0 + $0x188] sm:$0xff]
  %v68 = vld [vmem:[%s0 + $0x190] sm:$0xff]
  %v69 = vld [vmem:[%s0 + $0x198] sm:$0xff]
  %v70 = vld [vmem:[%s0 + $0x1a0] sm:$0xff]
  %v71 = vld [vmem:[%s0 + $0x1a8] sm:$0xff]
  %v72 = vld [vmem:[%s0 + $0x1b0] sm:$0xff]
  %v73 = vld [vmem:[%s0 + $0x1b8] sm:$0xff]
  %v74 = vld [vmem:[%s0 + $0x1c0] sm:$0xff]
  %v75 = vld [vmem:[%s0 + $0x1c8] sm:$0xff]
  %v76 = vld [vmem:[%s0 + $0x1d0] sm:$0xff]
  %v77 = vld [vmem:[%s0 + $0x1d8] sm:$0xff]
  %v78 = vld [vmem:[%s0 + $0x1e0] sm:$0xff]
  %v79 = vld [vmem:[%s0 + $0x1e8] sm:$0xff]
  %v80 = vld [vmem:[%s0 + $0x1f0] sm:$0xff]
  %v81 = vld [vmem:[%s0 + $0x1f8] sm:$0xff]
  %v82 = vld [vmem:[%s1] sm:$0xf]
  %v83 = vld [vmem:[%s1 + $0x4] sm:$0xf]
  %v84 = vld [vmem:[%s1 + $0x8] sm:$0xf]
  %v85 = vld [vmem:[%s1 + $0xc] sm:$0xf]
  %v86 = vld [vmem:[%s1 + $0x10] sm:$0xf]
  %v87 = vld [vmem:[%s1 + $0x14] sm:$0xf]
  %v88 = vld [vmem:[%s1 + $0x18] sm:$0xf]
  %v89 = vld [vmem:[%s1 + $0x1c] sm:$0xf]
  %v90 = vld [vmem:[%s1 + $0x20] sm:$0xf]
  %v91 = vld [vmem:[%s1 + $0x24] sm:$0xf]
  %v92 = vld [vmem:[%s1 + $0x28] sm:$0xf]
  %v93 = vld [vmem:[%s1 + $0x2c] sm:$0xf]
  %v94 = vld [vmem:[%s1 + $0x30] sm:$0xf]
  %v95 = vld [vmem:[%s1 + $0x34] sm:$0xf]
  %v96 = vld [vmem:[%s1 + $0x38] sm:$0xf]
  %v97 = vld [vmem:[%s1 + $0x3c] sm:$0xf]
  %v98 = vld [vmem:[%s1 + $0x40] sm:$0xf]
  %v99 = vld [vmem:[%s1 + $0x44] sm:$0xf]
  %v100 = vld [vmem:[%s1 + $0x48] sm:$0xf]
  %v101 = vld [vmem:[%s1 + $0x4c] sm:$0xf]
  %v102 = vld [vmem:[%s1 + $0x50] sm:$0xf]
  %v103 = vld [vmem:[%s1 + $0x54] sm:$0xf]
  %v104 = vld [vmem:[%s1 + $0x58] sm:$0xf]
  %v105 = vld [vmem:[%s1 + $0x5c] sm:$0xf]
  %v106 = vld [vmem:[%s1 + $0x60] sm:$0xf]
  %v107 = vld [vmem:[%s1 + $0x64] sm:$0xf]
  %v108 = vld [vmem:[%s1 + $0x68] sm:$0xf]
  %v109 = vld [vmem:[%s1 + $0x6c] sm:$0xf]
  %v110 = vld [vmem:[%s1 + $0x70] sm:$0xf]
  %v111 = vld [vmem:[%s1 + $0x74] sm:$0xf]
  %v112 = vld [vmem:[%s1 + $0x78] sm:$0xf]
  %v113 = vld [vmem:[%s1 + $0x7c] sm:$0xf]
  %v178 = vunpack.c.l.b16 %v18
  %v179 = vunpack.c.h.b16 %v18
  %v180 = vunpack.c.l.b16 %v19
  %v181 = vunpack.c.h.b16 %v19
  %v182 = vunpack.c.l.b16 %v20
  %v183 = vunpack.c.h.b16 %v20
  %v184 = vunpack.c.l.b16 %v21
  %v185 = vunpack.c.h.b16 %v21
  %v186 = vunpack.c.l.b16 %v22
  %v187 = vunpack.c.h.b16 %v22
  %v188 = vunpack.c.l.b16 %v23
  %v189 = vunpack.c.h.b16 %v23
  %v190 = vunpack.c.l.b16 %v24
  %v191 = vunpack.c.h.b16 %v24
  %v192 = vunpack.c.l.b16 %v25
  %v193 = vunpack.c.h.b16 %v25
  %v194 = vunpack.c.l.b16 %v26
  %v195 = vunpack.c.h.b16 %v26
  %v196 = vunpack.c.l.b16 %v27
  %v197 = vunpack.c.h.b16 %v27
  %v198 = vunpack.c.l.b16 %v28
  %v199 = vunpack.c.h.b16 %v28
  %v200 = vunpack.c.l.b16 %v29
  %v201 = vunpack.c.h.b16 %v29
  %v202 = vunpack.c.l.b16 %v30
  %v203 = vunpack.c.h.b16 %v30
  %v204 = vunpack.c.l.b16 %v31
  %v205 = vunpack.c.h.b16 %v31
  %v206 = vunpack.c.l.b16 %v32
  %v207 = vunpack.c.h.b16 %v32
  %v208 = vunpack.c.l.b16 %v33
  %v209 = vunpack.c.h.b16 %v33
  %v210 = vunpack.c.l.b16 %v34
  %v211 = vunpack.c.h.b16 %v34
  %v212 = vunpack.c.l.b16 %v35
  %v213 = vunpack.c.h.b16 %v35
  %v214 = vunpack.c.l.b16 %v36
  %v215 = vunpack.c.h.b16 %v36
  %v216 = vunpack.c.l.b16 %v37
  %v217 = vunpack.c.h.b16 %v37
  %v218 = vunpack.c.l.b16 %v38
  %v219 = vunpack.c.h.b16 %v38
  %v220 = vunpack.c.l.b16 %v39
  %v221 = vunpack.c.h.b16 %v39
  %v222 = vunpack.c.l.b16 %v40
  %v223 = vunpack.c.h.b16 %v40
  %v224 = vunpack.c.l.b16 %v41
  %v225 = vunpack.c.h.b16 %v41
  %v226 = vunpack.c.l.b16 %v42
  %v227 = vunpack.c.h.b16 %v42
  %v228 = vunpack.c.l.b16 %v43
  %v229 = vunpack.c.h.b16 %v43
  %v230 = vunpack.c.l.b16 %v44
  %v231 = vunpack.c.h.b16 %v44
  %v232 = vunpack.c.l.b16 %v45
  %v233 = vunpack.c.h.b16 %v45
  %v234 = vunpack.c.l.b16 %v46
  %v235 = vunpack.c.h.b16 %v46
  %v236 = vunpack.c.l.b16 %v47
  %v237 = vunpack.c.h.b16 %v47
  %v238 = vunpack.c.l.b16 %v48
  %v239 = vunpack.c.h.b16 %v48
  %v240 = vunpack.c.l.b16 %v49
  %v241 = vunpack.c.h.b16 %v49
  %v242 = vunpack.c.l.b16 %v50
  %v243 = vunpack.c.h.b16 %v50
  %v244 = vunpack.c.l.b16 %v51
  %v245 = vunpack.c.h.b16 %v51
  %v246 = vunpack.c.l.b16 %v52
  %v247 = vunpack.c.h.b16 %v52
  %v248 = vunpack.c.l.b16 %v53
  %v249 = vunpack.c.h.b16 %v53
  %v250 = vunpack.c.l.b16 %v54
  %v251 = vunpack.c.h.b16 %v54
  %v252 = vunpack.c.l.b16 %v55
  %v253 = vunpack.c.h.b16 %v55
  %v254 = vunpack.c.l.b16 %v56
  %v255 = vunpack.c.h.b16 %v56
  %v256 = vunpack.c.l.b16 %v57
  %v257 = vunpack.c.h.b16 %v57
  %v258 = vunpack.c.l.b16 %v58
  %v259 = vunpack.c.h.b16 %v58
  %v260 = vunpack.c.l.b16 %v59
  %v261 = vunpack.c.h.b16 %v59
  %v262 = vunpack.c.l.b16 %v60
  %v263 = vunpack.c.h.b16 %v60
  %v264 = vunpack.c.l.b16 %v61
  %v265 = vunpack.c.h.b16 %v61
  %v266 = vunpack.c.l.b16 %v62
  %v267 = vunpack.c.h.b16 %v62
  %v268 = vunpack.c.l.b16 %v63
  %v269 = vunpack.c.h.b16 %v63
  %v270 = vunpack.c.l.b16 %v64
  %v271 = vunpack.c.h.b16 %v64
  %v272 = vunpack.c.l.b16 %v65
  %v273 = vunpack.c.h.b16 %v65
  %v274 = vunpack.c.l.b16 %v66
  %v275 = vunpack.c.h.b16 %v66
  %v276 = vunpack.c.l.b16 %v67
  %v277 = vunpack.c.h.b16 %v67
  %v278 = vunpack.c.l.b16 %v68
  %v279 = vunpack.c.h.b16 %v68
  %v280 = vunpack.c.l.b16 %v69
  %v281 = vunpack.c.h.b16 %v69
  %v282 = vunpack.c.l.b16 %v70
  %v283 = vunpack.c.h.b16 %v70
  %v284 = vunpack.c.l.b16 %v71
  %v285 = vunpack.c.h.b16 %v71
  %v286 = vunpack.c.l.b16 %v72
  %v287 = vunpack.c.h.b16 %v72
  %v288 = vunpack.c.l.b16 %v73
  %v289 = vunpack.c.h.b16 %v73
  %v290 = vunpack.c.l.b16 %v74
  %v291 = vunpack.c.h.b16 %v74
  %v292 = vunpack.c.l.b16 %v75
  %v293 = vunpack.c.h.b16 %v75
  %v294 = vunpack.c.l.b16 %v76
  %v295 = vunpack.c.h.b16 %v76
  %v296 = vunpack.c.l.b16 %v77
  %v297 = vunpack.c.h.b16 %v77
  %v298 = vunpack.c.l.b16 %v78
  %v299 = vunpack.c.h.b16 %v78
  %v300 = vunpack.c.l.b16 %v79
  %v301 = vunpack.c.h.b16 %v79
  %v302 = vunpack.c.l.b16 %v80
  %v303 = vunpack.c.h.b16 %v80
  %v304 = vunpack.c.l.b16 %v81
  %v305 = vunpack.c.h.b16 %v81
  %v306 = vpack.c.b16 %v180, %v178
  %v307 = vpack.c.b16 %v181, %v179
  %v308 = vpack.c.b16 %v184, %v182
  %v309 = vpack.c.b16 %v185, %v183
  %v310 = vpack.c.b16 %v188, %v186
  %v311 = vpack.c.b16 %v189, %v187
  %v312 = vpack.c.b16 %v192, %v190
  %v313 = vpack.c.b16 %v193, %v191
  %v314 = vpack.c.b16 %v196, %v194
  %v315 = vpack.c.b16 %v197, %v195
  %v316 = vpack.c.b16 %v200, %v198
  %v317 = vpack.c.b16 %v201, %v199
  %v318 = vpack.c.b16 %v204, %v202
  %v319 = vpack.c.b16 %v205, %v203
  %v320 = vpack.c.b16 %v208, %v206
  %v321 = vpack.c.b16 %v209, %v207
  %v322 = vpack.c.b16 %v212, %v210
  %v323 = vpack.c.b16 %v213, %v211
  %v324 = vpack.c.b16 %v216, %v214
  %v325 = vpack.c.b16 %v217, %v215
  %v326 = vpack.c.b16 %v220, %v218
  %v327 = vpack.c.b16 %v221, %v219
  %v328 = vpack.c.b16 %v224, %v222
  %v329 = vpack.c.b16 %v225, %v223
  %v330 = vpack.c.b16 %v228, %v226
  %v331 = vpack.c.b16 %v229, %v227
  %v332 = vpack.c.b16 %v232, %v230
  %v333 = vpack.c.b16 %v233, %v231
  %v334 = vpack.c.b16 %v236, %v234
  %v335 = vpack.c.b16 %v237, %v235
  %v336 = vpack.c.b16 %v240, %v238
  %v337 = vpack.c.b16 %v241, %v239
  %v338 = vpack.c.b16 %v244, %v242
  %v339 = vpack.c.b16 %v245, %v243
  %v340 = vpack.c.b16 %v248, %v246
  %v341 = vpack.c.b16 %v249, %v247
  %v342 = vpack.c.b16 %v252, %v250
  %v343 = vpack.c.b16 %v253, %v251
  %v344 = vpack.c.b16 %v256, %v254
  %v345 = vpack.c.b16 %v257, %v255
  %v346 = vpack.c.b16 %v260, %v258
  %v347 = vpack.c.b16 %v261, %v259
  %v348 = vpack.c.b16 %v264, %v262
  %v349 = vpack.c.b16 %v265, %v263
  %v350 = vpack.c.b16 %v268, %v266
  %v351 = vpack.c.b16 %v269, %v267
  %v352 = vpack.c.b16 %v272, %v270
  %v353 = vpack.c.b16 %v273, %v271
  %v354 = vpack.c.b16 %v276, %v274
  %v355 = vpack.c.b16 %v277, %v275
  %v356 = vpack.c.b16 %v280, %v278
  %v357 = vpack.c.b16 %v281, %v279
  %v358 = vpack.c.b16 %v284, %v282
  %v359 = vpack.c.b16 %v285, %v283
  %v360 = vpack.c.b16 %v288, %v286
  %v361 = vpack.c.b16 %v289, %v287
  %v362 = vpack.c.b16 %v292, %v290
  %v363 = vpack.c.b16 %v293, %v291
  %v364 = vpack.c.b16 %v296, %v294
  %v365 = vpack.c.b16 %v297, %v295
  %v366 = vpack.c.b16 %v300, %v298
  %v367 = vpack.c.b16 %v301, %v299
  %v368 = vpack.c.b16 %v304, %v302
  %v369 = vpack.c.b16 %v305, %v303
  %v466 = vunpack.c.l.b16 %v82
  %v467 = vunpack.c.l.b16 %v83
  %v468 = vunpack.c.l.b16 %v84
  %v469 = vunpack.c.l.b16 %v85
  %v470 = vunpack.c.l.b16 %v86
  %v471 = vunpack.c.l.b16 %v87
  %v472 = vunpack.c.l.b16 %v88
  %v473 = vunpack.c.l.b16 %v89
  %v474 = vunpack.c.l.b16 %v90
  %v475 = vunpack.c.l.b16 %v91
  %v476 = vunpack.c.l.b16 %v92
  %v477 = vunpack.c.l.b16 %v93
  %v478 = vunpack.c.l.b16 %v94
  %v479 = vunpack.c.l.b16 %v95
  %v480 = vunpack.c.l.b16 %v96
  %v481 = vunpack.c.l.b16 %v97
  %v482 = vunpack.c.l.b16 %v98
  %v483 = vunpack.c.l.b16 %v99
  %v484 = vunpack.c.l.b16 %v100
  %v485 = vunpack.c.l.b16 %v101
  %v486 = vunpack.c.l.b16 %v102
  %v487 = vunpack.c.l.b16 %v103
  %v488 = vunpack.c.l.b16 %v104
  %v489 = vunpack.c.l.b16 %v105
  %v490 = vunpack.c.l.b16 %v106
  %v491 = vunpack.c.l.b16 %v107
  %v492 = vunpack.c.l.b16 %v108
  %v493 = vunpack.c.l.b16 %v109
  %v494 = vunpack.c.l.b16 %v110
  %v495 = vunpack.c.l.b16 %v111
  %v496 = vunpack.c.l.b16 %v112
  %v497 = vunpack.c.l.b16 %v113
  %v498 = vpack.c.b16 %v467, %v466
  %v499 = vpack.c.b16 %v469, %v468
  %v500 = vpack.c.b16 %v471, %v470
  %v501 = vpack.c.b16 %v473, %v472
  %v502 = vpack.c.b16 %v475, %v474
  %v503 = vpack.c.b16 %v477, %v476
  %v504 = vpack.c.b16 %v479, %v478
  %v505 = vpack.c.b16 %v481, %v480
  %v506 = vpack.c.b16 %v483, %v482
  %v507 = vpack.c.b16 %v485, %v484
  %v508 = vpack.c.b16 %v487, %v486
  %v509 = vpack.c.b16 %v489, %v488
  %v510 = vpack.c.b16 %v491, %v490
  %v511 = vpack.c.b16 %v493, %v492
  %v512 = vpack.c.b16 %v495, %v494
  %v513 = vpack.c.b16 %v497, %v496
  %530 = vmatprep.subr.bf16.mxu0 0
  %531 = vmatpush1.bf16.msra.mxu0 %v505
  %532 = vmatprep.subr.bf16.mxu0 0
  %533 = vmatpush1.bf16.msra.mxu0 %v504
  %534 = vmatprep.subr.bf16.mxu0 0
  %535 = vmatpush1.bf16.msra.mxu0 %v503
  %536 = vmatprep.subr.bf16.mxu0 0
  %537 = vmatpush1.bf16.msra.mxu0 %v502
  %538 = vmatprep.subr.bf16.mxu0 0
  %539 = vmatpush1.bf16.msra.mxu0 %v501
  %540 = vmatprep.subr.bf16.mxu0 0
  %541 = vmatpush1.bf16.msra.mxu0 %v500
  %542 = vmatprep.subr.bf16.mxu0 0
  %543 = vmatpush1.bf16.msra.mxu0 %v499
  %544 = vmatprep.subr.bf16.mxu0 0
  %545 = vmatpush1.bf16.msra.mxu0 %v498
  %546 = vmatprep.subr.bf16.mxu0 0
  %547 = vmatpush2.bf16.msra.mxu0 %v513
  %548 = vmatprep.subr.bf16.mxu0 0
  %549 = vmatpush2.bf16.msra.mxu0 %v512
  %550 = vmatprep.subr.bf16.mxu0 0
  %551 = vmatpush2.bf16.msra.mxu0 %v511
  %552 = vmatprep.subr.bf16.mxu0 0
  %553 = vmatpush2.bf16.msra.mxu0 %v510
  %554 = vmatprep.subr.bf16.mxu0 0
  %555 = vmatpush2.bf16.msra.mxu0 %v509
  %556 = vmatprep.subr.bf16.mxu0 0
  %557 = vmatpush2.bf16.msra.mxu0 %v508
  %558 = vmatprep.subr.bf16.mxu0 0
  %559 = vmatpush2.bf16.msra.mxu0 %v507
  %560 = vmatprep.subr.bf16.mxu0 0
  %561 = vmatpush2.bf16.msra.mxu0 %v506
  %562 = vmatprep.mubr.bf16.mxu0 %v307
  %563 = vmatmul.mubr.bf16.gmra.mxu0 %v306
  %v564 = vpop.f32.mrf.mxu0
  %v565 = vadd.f32 0.0, %v564
  %v566 = vpop.f32.mrf.mxu0
  %v567 = vpop.f32.mrf.mxu0
  %v568 = vadd.f32 0.0, %v567
  %v569 = vpop.f32.mrf.mxu0
  %570 = vmatprep.mubr.bf16.mxu0 %v309
  %571 = vmatmul.mubr.bf16.gmra.mxu0 %v308
  %v572 = vpop.f32.mrf.mxu0
  %v573 = vadd.f32 0.0, %v572
  %v574 = vpop.f32.mrf.mxu0
  %v575 = vpop.f32.mrf.mxu0
  %v576 = vadd.f32 0.0, %v575
  %v577 = vpop.f32.mrf.mxu0
  %578 = vmatprep.mubr.bf16.mxu0 %v311
  %579 = vmatmul.mubr.bf16.gmra.mxu0 %v310
  %v580 = vpop.f32.mrf.mxu0
  %v581 = vadd.f32 0.0, %v580
  %v582 = vpop.f32.mrf.mxu0
  %v583 = vpop.f32.mrf.mxu0
  %v584 = vadd.f32 0.0, %v583
  %v585 = vpop.f32.mrf.mxu0
  %586 = vmatprep.mubr.bf16.mxu0 %v313
  %587 = vmatmul.mubr.bf16.gmra.mxu0 %v312
  %v588 = vpop.f32.mrf.mxu0
  %v589 = vadd.f32 0.0, %v588
  %v590 = vpop.f32.mrf.mxu0
  %v591 = vpop.f32.mrf.mxu0
  %v592 = vadd.f32 0.0, %v591
  %v593 = vpop.f32.mrf.mxu0
  %594 = vmatprep.mubr.bf16.mxu0 %v315
  %595 = vmatmul.mubr.bf16.gmra.mxu0 %v314
  %v596 = vpop.f32.mrf.mxu0
  %v597 = vadd.f32 0.0, %v596
  %v598 = vpop.f32.mrf.mxu0
  %v599 = vpop.f32.mrf.mxu0
  %v600 = vadd.f32 0.0, %v599
  %v601 = vpop.f32.mrf.mxu0
  %602 = vmatprep.mubr.bf16.mxu0 %v317
  %603 = vmatmul.mubr.bf16.gmra.mxu0 %v316
  %v604 = vpop.f32.mrf.mxu0
  %v605 = vadd.f32 0.0, %v604
  %v606 = vpop.f32.mrf.mxu0
  %v607 = vpop.f32.mrf.mxu0
  %v608 = vadd.f32 0.0, %v607
  %v609 = vpop.f32.mrf.mxu0
  %610 = vmatprep.mubr.bf16.mxu0 %v319
  %611 = vmatmul.mubr.bf16.gmra.mxu0 %v318
  %v612 = vpop.f32.mrf.mxu0
  %v613 = vadd.f32 0.0, %v612
  %v614 = vpop.f32.mrf.mxu0
  %v615 = vpop.f32.mrf.mxu0
  %v616 = vadd.f32 0.0, %v615
  %v617 = vpop.f32.mrf.mxu0
  %618 = vmatprep.mubr.bf16.mxu0 %v321
  %619 = vmatmul.mubr.bf16.gmra.mxu0 %v320
  %v620 = vpop.f32.mrf.mxu0
  %v621 = vadd.f32 0.0, %v620
  %v622 = vpop.f32.mrf.mxu0
  %v623 = vpop.f32.mrf.mxu0
  %v624 = vadd.f32 0.0, %v623
  %v625 = vpop.f32.mrf.mxu0
  %626 = vmatprep.mubr.bf16.mxu0 %v323
  %627 = vmatmul.mubr.bf16.gmra.mxu0 %v322
  %v628 = vpop.f32.mrf.mxu0
  %v629 = vadd.f32 0.0, %v628
  %v630 = vpop.f32.mrf.mxu0
  %v631 = vpop.f32.mrf.mxu0
  %v632 = vadd.f32 0.0, %v631
  %v633 = vpop.f32.mrf.mxu0
  %634 = vmatprep.mubr.bf16.mxu0 %v325
  %635 = vmatmul.mubr.bf16.gmra.mxu0 %v324
  %v636 = vpop.f32.mrf.mxu0
  %v637 = vadd.f32 0.0, %v636
  %v638 = vpop.f32.mrf.mxu0
  %v639 = vpop.f32.mrf.mxu0
  %v640 = vadd.f32 0.0, %v639
  %v641 = vpop.f32.mrf.mxu0
  %642 = vmatprep.mubr.bf16.mxu0 %v327
  %643 = vmatmul.mubr.bf16.gmra.mxu0 %v326
  %v644 = vpop.f32.mrf.mxu0
  %v645 = vadd.f32 0.0, %v644
  %v646 = vpop.f32.mrf.mxu0
  %v647 = vpop.f32.mrf.mxu0
  %v648 = vadd.f32 0.0, %v647
  %v649 = vpop.f32.mrf.mxu0
  %650 = vmatprep.mubr.bf16.mxu0 %v329
  %651 = vmatmul.mubr.bf16.gmra.mxu0 %v328
  %v652 = vpop.f32.mrf.mxu0
  %v653 = vadd.f32 0.0, %v652
  %v654 = vpop.f32.mrf.mxu0
  %v655 = vpop.f32.mrf.mxu0
  %v656 = vadd.f32 0.0, %v655
  %v657 = vpop.f32.mrf.mxu0
  %658 = vmatprep.mubr.bf16.mxu0 %v331
  %659 = vmatmul.mubr.bf16.gmra.mxu0 %v330
  %v660 = vpop.f32.mrf.mxu0
  %v661 = vadd.f32 0.0, %v660
  %v662 = vpop.f32.mrf.mxu0
  %v663 = vpop.f32.mrf.mxu0
  %v664 = vadd.f32 0.0, %v663
  %v665 = vpop.f32.mrf.mxu0
  %666 = vmatprep.mubr.bf16.mxu0 %v333
  %667 = vmatmul.mubr.bf16.gmra.mxu0 %v332
  %v668 = vpop.f32.mrf.mxu0
  %v669 = vadd.f32 0.0, %v668
  %v670 = vpop.f32.mrf.mxu0
  %v671 = vpop.f32.mrf.mxu0
  %v672 = vadd.f32 0.0, %v671
  %v673 = vpop.f32.mrf.mxu0
  %674 = vmatprep.mubr.bf16.mxu0 %v335
  %675 = vmatmul.mubr.bf16.gmra.mxu0 %v334
  %v676 = vpop.f32.mrf.mxu0
  %v677 = vadd.f32 0.0, %v676
  %v678 = vpop.f32.mrf.mxu0
  %v679 = vpop.f32.mrf.mxu0
  %v680 = vadd.f32 0.0, %v679
  %v681 = vpop.f32.mrf.mxu0
  %682 = vmatprep.mubr.bf16.mxu0 %v337
  %683 = vmatmul.mubr.bf16.gmra.mxu0 %v336
  %v684 = vpop.f32.mrf.mxu0
  %v685 = vadd.f32 0.0, %v684
  %v686 = vpop.f32.mrf.mxu0
  %v687 = vpop.f32.mrf.mxu0
  %v688 = vadd.f32 0.0, %v687
  %v689 = vpop.f32.mrf.mxu0
  %690 = vmatprep.mubr.bf16.mxu0 %v339
  %691 = vmatmul.mubr.bf16.gmra.mxu0 %v338
  %v692 = vpop.f32.mrf.mxu0
  %v693 = vadd.f32 0.0, %v692
  %v694 = vpop.f32.mrf.mxu0
  %v695 = vpop.f32.mrf.mxu0
  %v696 = vadd.f32 0.0, %v695
  %v697 = vpop.f32.mrf.mxu0
  %698 = vmatprep.mubr.bf16.mxu0 %v341
  %699 = vmatmul.mubr.bf16.gmra.mxu0 %v340
  %v700 = vpop.f32.mrf.mxu0
  %v701 = vadd.f32 0.0, %v700
  %v702 = vpop.f32.mrf.mxu0
  %v703 = vpop.f32.mrf.mxu0
  %v704 = vadd.f32 0.0, %v703
  %v705 = vpop.f32.mrf.mxu0
  %706 = vmatprep.mubr.bf16.mxu0 %v343
  %707 = vmatmul.mubr.bf16.gmra.mxu0 %v342
  %v708 = vpop.f32.mrf.mxu0
  %v709 = vadd.f32 0.0, %v708
  %v710 = vpop.f32.mrf.mxu0
  %v711 = vpop.f32.mrf.mxu0
  %v712 = vadd.f32 0.0, %v711
  %v713 = vpop.f32.mrf.mxu0
  %714 = vmatprep.mubr.bf16.mxu0 %v345
  %715 = vmatmul.mubr.bf16.gmra.mxu0 %v344
  %v716 = vpop.f32.mrf.mxu0
  %v717 = vadd.f32 0.0, %v716
  %v718 = vpop.f32.mrf.mxu0
  %v719 = vpop.f32.mrf.mxu0
  %v720 = vadd.f32 0.0, %v719
  %v721 = vpop.f32.mrf.mxu0
  %722 = vmatprep.mubr.bf16.mxu0 %v347
  %723 = vmatmul.mubr.bf16.gmra.mxu0 %v346
  %v724 = vpop.f32.mrf.mxu0
  %v725 = vadd.f32 0.0, %v724
  %v726 = vpop.f32.mrf.mxu0
  %v727 = vpop.f32.mrf.mxu0
  %v728 = vadd.f32 0.0, %v727
  %v729 = vpop.f32.mrf.mxu0
  %730 = vmatprep.mubr.bf16.mxu0 %v349
  %731 = vmatmul.mubr.bf16.gmra.mxu0 %v348
  %v732 = vpop.f32.mrf.mxu0
  %v733 = vadd.f32 0.0, %v732
  %v734 = vpop.f32.mrf.mxu0
  %v735 = vpop.f32.mrf.mxu0
  %v736 = vadd.f32 0.0, %v735
  %v737 = vpop.f32.mrf.mxu0
  %738 = vmatprep.mubr.bf16.mxu0 %v351
  %739 = vmatmul.mubr.bf16.gmra.mxu0 %v350
  %v740 = vpop.f32.mrf.mxu0
  %v741 = vadd.f32 0.0, %v740
  %v742 = vpop.f32.mrf.mxu0
  %v743 = vpop.f32.mrf.mxu0
  %v744 = vadd.f32 0.0, %v743
  %v745 = vpop.f32.mrf.mxu0
  %746 = vmatprep.mubr.bf16.mxu0 %v353
  %747 = vmatmul.mubr.bf16.gmra.mxu0 %v352
  %v748 = vpop.f32.mrf.mxu0
  %v749 = vadd.f32 0.0, %v748
  %v750 = vpop.f32.mrf.mxu0
  %v751 = vpop.f32.mrf.mxu0
  %v752 = vadd.f32 0.0, %v751
  %v753 = vpop.f32.mrf.mxu0
  %754 = vmatprep.mubr.bf16.mxu0 %v355
  %755 = vmatmul.mubr.bf16.gmra.mxu0 %v354
  %v756 = vpop.f32.mrf.mxu0
  %v757 = vadd.f32 0.0, %v756
  %v758 = vpop.f32.mrf.mxu0
  %v759 = vpop.f32.mrf.mxu0
  %v760 = vadd.f32 0.0, %v759
  %v761 = vpop.f32.mrf.mxu0
  %762 = vmatprep.mubr.bf16.mxu0 %v357
  %763 = vmatmul.mubr.bf16.gmra.mxu0 %v356
  %v764 = vpop.f32.mrf.mxu0
  %v765 = vadd.f32 0.0, %v764
  %v766 = vpop.f32.mrf.mxu0
  %v767 = vpop.f32.mrf.mxu0
  %v768 = vadd.f32 0.0, %v767
  %v769 = vpop.f32.mrf.mxu0
  %770 = vmatprep.mubr.bf16.mxu0 %v359
  %771 = vmatmul.mubr.bf16.gmra.mxu0 %v358
  %v772 = vpop.f32.mrf.mxu0
  %v773 = vadd.f32 0.0, %v772
  %v774 = vpop.f32.mrf.mxu0
  %v775 = vpop.f32.mrf.mxu0
  %v776 = vadd.f32 0.0, %v775
  %v777 = vpop.f32.mrf.mxu0
  %778 = vmatprep.mubr.bf16.mxu0 %v361
  %779 = vmatmul.mubr.bf16.gmra.mxu0 %v360
  %v780 = vpop.f32.mrf.mxu0
  %v781 = vadd.f32 0.0, %v780
  %v782 = vpop.f32.mrf.mxu0
  %v783 = vpop.f32.mrf.mxu0
  %v784 = vadd.f32 0.0, %v783
  %v785 = vpop.f32.mrf.mxu0
  %786 = vmatprep.mubr.bf16.mxu0 %v363
  %787 = vmatmul.mubr.bf16.gmra.mxu0 %v362
  %v788 = vpop.f32.mrf.mxu0
  %v789 = vadd.f32 0.0, %v788
  %v790 = vpop.f32.mrf.mxu0
  %v791 = vpop.f32.mrf.mxu0
  %v792 = vadd.f32 0.0, %v791
  %v793 = vpop.f32.mrf.mxu0
  %794 = vmatprep.mubr.bf16.mxu0 %v365
  %795 = vmatmul.mubr.bf16.gmra.mxu0 %v364
  %v796 = vpop.f32.mrf.mxu0
  %v797 = vadd.f32 0.0, %v796
  %v798 = vpop.f32.mrf.mxu0
  %v799 = vpop.f32.mrf.mxu0
  %v800 = vadd.f32 0.0, %v799
  %v801 = vpop.f32.mrf.mxu0
  %802 = vmatprep.mubr.bf16.mxu0 %v367
  %803 = vmatmul.mubr.bf16.gmra.mxu0 %v366
  %v804 = vpop.f32.mrf.mxu0
  %v805 = vadd.f32 0.0, %v804
  %v806 = vpop.f32.mrf.mxu0
  %v807 = vpop.f32.mrf.mxu0
  %v808 = vadd.f32 0.0, %v807
  %v809 = vpop.f32.mrf.mxu0
  %810 = vmatprep.mubr.bf16.mxu0 %v369
  %811 = vmatmul.mubr.bf16.gmra.mxu0 %v368
  %v812 = vpop.f32.mrf.mxu0
  %v813 = vadd.f32 0.0, %v812
  %v814 = vpop.f32.mrf.mxu0
  %v815 = vpop.f32.mrf.mxu0
  %v816 = vadd.f32 0.0, %v815
  %v817 = vpop.f32.mrf.mxu0
  %818 = vdwg.mxu0
  %v819 = vadd.f32 %v565, %v568
  %v820 = vadd.f32 %v819, %v573
  %v821 = vadd.f32 %v820, %v576
  %v822 = vadd.f32 %v821, %v581
  %v823 = vadd.f32 %v822, %v584
  %v824 = vadd.f32 %v823, %v589
  %v825 = vadd.f32 %v824, %v592
  %v826 = vadd.f32 %v825, %v597
  %v827 = vadd.f32 %v826, %v600
  %v828 = vadd.f32 %v827, %v605
  %v829 = vadd.f32 %v828, %v608
  %v830 = vadd.f32 %v829, %v613
  %v831 = vadd.f32 %v830, %v616
  %v832 = vadd.f32 %v831, %v621
  %v833 = vadd.f32 %v832, %v624
  %v834 = vadd.f32 %v833, %v629
  %v835 = vadd.f32 %v834, %v632
  %v836 = vadd.f32 %v835, %v637
  %v837 = vadd.f32 %v836, %v640
  %v838 = vadd.f32 %v837, %v645
  %v839 = vadd.f32 %v838, %v648
  %v840 = vadd.f32 %v839, %v653
  %v841 = vadd.f32 %v840, %v656
  %v842 = vadd.f32 %v841, %v661
  %v843 = vadd.f32 %v842, %v664
  %v844 = vadd.f32 %v843, %v669
  %v845 = vadd.f32 %v844, %v672
  %v846 = vadd.f32 %v845, %v677
  %v847 = vadd.f32 %v846, %v680
  %v848 = vadd.f32 %v847, %v685
  %v849 = vadd.f32 %v848, %v688
  %v850 = vadd.f32 %v849, %v693
  %v851 = vadd.f32 %v850, %v696
  %v852 = vadd.f32 %v851, %v701
  %v853 = vadd.f32 %v852, %v704
  %v854 = vadd.f32 %v853, %v709
  %v855 = vadd.f32 %v854, %v712
  %v856 = vadd.f32 %v855, %v717
  %v857 = vadd.f32 %v856, %v720
  %v858 = vadd.f32 %v857, %v725
  %v859 = vadd.f32 %v858, %v728
  %v860 = vadd.f32 %v859, %v733
  %v861 = vadd.f32 %v860, %v736
  %v862 = vadd.f32 %v861, %v741
  %v863 = vadd.f32 %v862, %v744
  %v864 = vadd.f32 %v863, %v749
  %v865 = vadd.f32 %v864, %v752
  %v866 = vadd.f32 %v865, %v757
  %v867 = vadd.f32 %v866, %v760
  %v868 = vadd.f32 %v867, %v765
  %v869 = vadd.f32 %v868, %v768
  %v870 = vadd.f32 %v869, %v773
  %v871 = vadd.f32 %v870, %v776
  %v872 = vadd.f32 %v871, %v781
  %v873 = vadd.f32 %v872, %v784
  %v874 = vadd.f32 %v873, %v789
  %v875 = vadd.f32 %v874, %v792
  %v876 = vadd.f32 %v875, %v797
  %v877 = vadd.f32 %v876, %v800
  %v878 = vadd.f32 %v877, %v805
  %v879 = vadd.f32 %v878, %v808
  %v880 = vadd.f32 %v879, %v813
  %v881 = vadd.f32 %v880, %v816
  %v882 = vrot.slane %v881, 4
  %v883 = vadd.f32 %v881, %v882
  %v884 = vrot.slane %v883, 2
  %v885 = vadd.f32 %v883, %v884
  %v886 = vrot.slane %v885, 1
  %v887 = vadd.f32 %v885, %v886
  %v888 = vrcp.pop 512.0
  %v889 = vmul.f32 %v887, %v888
  %v890 = vsub.f32 %v565, %v889
  %v891 = vsub.f32 %v568, %v889
  %v892 = vsub.f32 %v573, %v889
  %v893 = vsub.f32 %v576, %v889
  %v894 = vsub.f32 %v581, %v889
  %v895 = vsub.f32 %v584, %v889
  %v896 = vsub.f32 %v589, %v889
  %v897 = vsub.f32 %v592, %v889
  %v898 = vsub.f32 %v597, %v889
  %v899 = vsub.f32 %v600, %v889
  %v900 = vsub.f32 %v605, %v889
  %v901 = vsub.f32 %v608, %v889
  %v902 = vsub.f32 %v613, %v889
  %v903 = vsub.f32 %v616, %v889
  %v904 = vsub.f32 %v621, %v889
  %v905 = vsub.f32 %v624, %v889
  %v906 = vsub.f32 %v629, %v889
  %v907 = vsub.f32 %v632, %v889
  %v908 = vsub.f32 %v637, %v889
  %v909 = vsub.f32 %v640, %v889
  %v910 = vsub.f32 %v645, %v889
  %v911 = vsub.f32 %v648, %v889
  %v912 = vsub.f32 %v653, %v889
  %v913 = vsub.f32 %v656, %v889
  %v914 = vsub.f32 %v661, %v889
  %v915 = vsub.f32 %v664, %v889
  %v916 = vsub.f32 %v669, %v889
  %v917 = vsub.f32 %v672, %v889
  %v918 = vsub.f32 %v677, %v889
  %v919 = vsub.f32 %v680, %v889
  %v920 = vsub.f32 %v685, %v889
  %v921 = vsub.f32 %v688, %v889
  %v922 = vsub.f32 %v693, %v889
  %v923 = vsub.f32 %v696, %v889
  %v924 = vsub.f32 %v701, %v889
  %v925 = vsub.f32 %v704, %v889
  %v926 = vsub.f32 %v709, %v889
  %v927 = vsub.f32 %v712, %v889
  %v928 = vsub.f32 %v717, %v889
  %v929 = vsub.f32 %v720, %v889
  %v930 = vsub.f32 %v725, %v889
  %v931 = vsub.f32 %v728, %v889
  %v932 = vsub.f32 %v733, %v889
  %v933 = vsub.f32 %v736, %v889
  %v934 = vsub.f32 %v741, %v889
  %v935 = vsub.f32 %v744, %v889
  %v936 = vsub.f32 %v749, %v889
  %v937 = vsub.f32 %v752, %v889
  %v938 = vsub.f32 %v757, %v889
  %v939 = vsub.f32 %v760, %v889
  %v940 = vsub.f32 %v765, %v889
  %v941 = vsub.f32 %v768, %v889
  %v942 = vsub.f32 %v773, %v889
  %v943 = vsub.f32 %v776, %v889
  %v944 = vsub.f32 %v781, %v889
  %v945 = vsub.f32 %v784, %v889
  %v946 = vsub.f32 %v789, %v889
  %v947 = vsub.f32 %v792, %v889
  %v948 = vsub.f32 %v797, %v889
  %v949 = vsub.f32 %v800, %v889
  %v950 = vsub.f32 %v805, %v889
  %v951 = vsub.f32 %v808, %v889
  %v952 = vsub.f32 %v813, %v889
  %v953 = vsub.f32 %v816, %v889
  %v954 = vmul.f32 %v890, %v890
  %v955 = vmul.f32 %v891, %v891
  %v956 = vmul.f32 %v892, %v892
  %v957 = vmul.f32 %v893, %v893
  %v958 = vmul.f32 %v894, %v894
  %v959 = vmul.f32 %v895, %v895
  %v960 = vmul.f32 %v896, %v896
  %v961 = vmul.f32 %v897, %v897
  %v962 = vmul.f32 %v898, %v898
  %v963 = vmul.f32 %v899, %v899
  %v964 = vmul.f32 %v900, %v900
  %v965 = vmul.f32 %v901, %v901
  %v966 = vmul.f32 %v902, %v902
  %v967 = vmul.f32 %v903, %v903
  %v968 = vmul.f32 %v904, %v904
  %v969 = vmul.f32 %v905, %v905
  %v970 = vmul.f32 %v906, %v906
  %v971 = vmul.f32 %v907, %v907
  %v972 = vmul.f32 %v908, %v908
  %v973 = vmul.f32 %v909, %v909
  %v974 = vmul.f32 %v910, %v910
  %v975 = vmul.f32 %v911, %v911
  %v976 = vmul.f32 %v912, %v912
  %v977 = vmul.f32 %v913, %v913
  %v978 = vmul.f32 %v914, %v914
  %v979 = vmul.f32 %v915, %v915
  %v980 = vmul.f32 %v916, %v916
  %v981 = vmul.f32 %v917, %v917
  %v982 = vmul.f32 %v918, %v918
  %v983 = vmul.f32 %v919, %v919
  %v984 = vmul.f32 %v920, %v920
  %v985 = vmul.f32 %v921, %v921
  %v986 = vmul.f32 %v922, %v922
  %v987 = vmul.f32 %v923, %v923
  %v988 = vmul.f32 %v924, %v924
  %v989 = vmul.f32 %v925, %v925
  %v990 = vmul.f32 %v926, %v926
  %v991 = vmul.f32 %v927, %v927
  %v992 = vmul.f32 %v928, %v928
  %v993 = vmul.f32 %v929, %v929
  %v994 = vmul.f32 %v930, %v930
  %v995 = vmul.f32 %v931, %v931
  %v996 = vmul.f32 %v932, %v932
  %v997 = vmul.f32 %v933, %v933
  %v998 = vmul.f32 %v934, %v934
  %v999 = vmul.f32 %v935, %v935
  %v1000 = vmul.f32 %v936, %v936
  %v1001 = vmul.f32 %v937, %v937
  %v1002 = vmul.f32 %v938, %v938
  %v1003 = vmul.f32 %v939, %v939
  %v1004 = vmul.f32 %v940, %v940
  %v1005 = vmul.f32 %v941, %v941
  %v1006 = vmul.f32 %v942, %v942
  %v1007 = vmul.f32 %v943, %v943
  %v1008 = vmul.f32 %v944, %v944
  %v1009 = vmul.f32 %v945, %v945
  %v1010 = vmul.f32 %v946, %v946
  %v1011 = vmul.f32 %v947, %v947
  %v1012 = vmul.f32 %v948, %v948
  %v1013 = vmul.f32 %v949, %v949
  %v1014 = vmul.f32 %v950, %v950
  %v1015 = vmul.f32 %v951, %v951
  %v1016 = vmul.f32 %v952, %v952
  %v1017 = vmul.f32 %v953, %v953
  %v1018 = vadd.f32 %v954, %v955
  %v1019 = vadd.f32 %v1018, %v956
  %v1020 = vadd.f32 %v1019, %v957
  %v1021 = vadd.f32 %v1020, %v958
  %v1022 = vadd.f32 %v1021, %v959
  %v1023 = vadd.f32 %v1022, %v960
  %v1024 = vadd.f32 %v1023, %v961
  %v1025 = vadd.f32 %v1024, %v962
  %v1026 = vadd.f32 %v1025, %v963
  %v1027 = vadd.f32 %v1026, %v964
  %v1028 = vadd.f32 %v1027, %v965
  %v1029 = vadd.f32 %v1028, %v966
  %v1030 = vadd.f32 %v1029, %v967
  %v1031 = vadd.f32 %v1030, %v968
  %v1032 = vadd.f32 %v1031, %v969
  %v1033 = vadd.f32 %v1032, %v970
  %v1034 = vadd.f32 %v1033, %v971
  %v1035 = vadd.f32 %v1034, %v972
  %v1036 = vadd.f32 %v1035, %v973
  %v1037 = vadd.f32 %v1036, %v974
  %v1038 = vadd.f32 %v1037, %v975
  %v1039 = vadd.f32 %v1038, %v976
  %v1040 = vadd.f32 %v1039, %v977
  %v1041 = vadd.f32 %v1040, %v978
  %v1042 = vadd.f32 %v1041, %v979
  %v1043 = vadd.f32 %v1042, %v980
  %v1044 = vadd.f32 %v1043, %v981
  %v1045 = vadd.f32 %v1044, %v982
  %v1046 = vadd.f32 %v1045, %v983
  %v1047 = vadd.f32 %v1046, %v984
  %v1048 = vadd.f32 %v1047, %v985
  %v1049 = vadd.f32 %v1048, %v986
  %v1050 = vadd.f32 %v1049, %v987
  %v1051 = vadd.f32 %v1050, %v988
  %v1052 = vadd.f32 %v1051, %v989
  %v1053 = vadd.f32 %v1052, %v990
  %v1054 = vadd.f32 %v1053, %v991
  %v1055 = vadd.f32 %v1054, %v992
  %v1056 = vadd.f32 %v1055, %v993
  %v1057 = vadd.f32 %v1056, %v994
  %v1058 = vadd.f32 %v1057, %v995
  %v1059 = vadd.f32 %v1058, %v996
  %v1060 = vadd.f32 %v1059, %v997
  %v1061 = vadd.f32 %v1060, %v998
  %v1062 = vadd.f32 %v1061, %v999
  %v1063 = vadd.f32 %v1062, %v1000
  %v1064 = vadd.f32 %v1063, %v1001
  %v1065 = vadd.f32 %v1064, %v1002
  %v1066 = vadd.f32 %v1065, %v1003
  %v1067 = vadd.f32 %v1066, %v1004
  %v1068 = vadd.f32 %v1067, %v1005
  %v1069 = vadd.f32 %v1068, %v1006
  %v1070 = vadd.f32 %v1069, %v1007
  %v1071 = vadd.f32 %v1070, %v1008
  %v1072 = vadd.f32 %v1071, %v1009
  %v1073 = vadd.f32 %v1072, %v1010
  %v1074 = vadd.f32 %v1073, %v1011
  %v1075 = vadd.f32 %v1074, %v1012
  %v1076 = vadd.f32 %v1075, %v1013
  %v1077 = vadd.f32 %v1076, %v1014
  %v1078 = vadd.f32 %v1077, %v1015
  %v1079 = vadd.f32 %v1078, %v1016
  %v1080 = vadd.f32 %v1079, %v1017
  %v1081 = vrot.slane %v1080, 4
  %v1082 = vadd.f32 %v1080, %v1081
  %v1083 = vrot.slane %v1082, 2
  %v1084 = vadd.f32 %v1082, %v1083
  %v1085 = vrot.slane %v1084, 1
  %v1086 = vadd.f32 %v1084, %v1085
  %v1087 = vmul.f32 %v1086, %v888
  %v1088 = vadd.f32 %v1087, 1e-05
  %v1089 = vrsqrt.pop %v1088
  %v1090 = vmul.f32 %v890, %v1089
  %v1091 = vmul.f32 %v891, %v1089
  %v1092 = vmul.f32 %v892, %v1089
  %v1093 = vmul.f32 %v893, %v1089
  %v1094 = vmul.f32 %v894, %v1089
  %v1095 = vmul.f32 %v895, %v1089
  %v1096 = vmul.f32 %v896, %v1089
  %v1097 = vmul.f32 %v897, %v1089
  %v1098 = vmul.f32 %v898, %v1089
  %v1099 = vmul.f32 %v899, %v1089
  %v1100 = vmul.f32 %v900, %v1089
  %v1101 = vmul.f32 %v901, %v1089
  %v1102 = vmul.f32 %v902, %v1089
  %v1103 = vmul.f32 %v903, %v1089
  %v1104 = vmul.f32 %v904, %v1089
  %v1105 = vmul.f32 %v905, %v1089
  %v1106 = vmul.f32 %v906, %v1089
  %v1107 = vmul.f32 %v907, %v1089
  %v1108 = vmul.f32 %v908, %v1089
  %v1109 = vmul.f32 %v909, %v1089
  %v1110 = vmul.f32 %v910, %v1089
  %v1111 = vmul.f32 %v911, %v1089
  %v1112 = vmul.f32 %v912, %v1089
  %v1113 = vmul.f32 %v913, %v1089
  %v1114 = vmul.f32 %v914, %v1089
  %v1115 = vmul.f32 %v915, %v1089
  %v1116 = vmul.f32 %v916, %v1089
  %v1117 = vmul.f32 %v917, %v1089
  %v1118 = vmul.f32 %v918, %v1089
  %v1119 = vmul.f32 %v919, %v1089
  %v1120 = vmul.f32 %v920, %v1089
  %v1121 = vmul.f32 %v921, %v1089
  %v1122 = vmul.f32 %v922, %v1089
  %v1123 = vmul.f32 %v923, %v1089
  %v1124 = vmul.f32 %v924, %v1089
  %v1125 = vmul.f32 %v925, %v1089
  %v1126 = vmul.f32 %v926, %v1089
  %v1127 = vmul.f32 %v927, %v1089
  %v1128 = vmul.f32 %v928, %v1089
  %v1129 = vmul.f32 %v929, %v1089
  %v1130 = vmul.f32 %v930, %v1089
  %v1131 = vmul.f32 %v931, %v1089
  %v1132 = vmul.f32 %v932, %v1089
  %v1133 = vmul.f32 %v933, %v1089
  %v1134 = vmul.f32 %v934, %v1089
  %v1135 = vmul.f32 %v935, %v1089
  %v1136 = vmul.f32 %v936, %v1089
  %v1137 = vmul.f32 %v937, %v1089
  %v1138 = vmul.f32 %v938, %v1089
  %v1139 = vmul.f32 %v939, %v1089
  %v1140 = vmul.f32 %v940, %v1089
  %v1141 = vmul.f32 %v941, %v1089
  %v1142 = vmul.f32 %v942, %v1089
  %v1143 = vmul.f32 %v943, %v1089
  %v1144 = vmul.f32 %v944, %v1089
  %v1145 = vmul.f32 %v945, %v1089
  %v1146 = vmul.f32 %v946, %v1089
  %v1147 = vmul.f32 %v947, %v1089
  %v1148 = vmul.f32 %v948, %v1089
  %v1149 = vmul.f32 %v949, %v1089
  %v1150 = vmul.f32 %v950, %v1089
  %v1151 = vmul.f32 %v951, %v1089
  %v1152 = vmul.f32 %v952, %v1089
  %v1153 = vmul.f32 %v953, %v1089
  %v1154 = vld [vmem:[%s2] sm:$0x1]
  %v1156 = vlaneseq
  %v1157 = vshrl.u32 %v1156, 7
  %v1158 = vsub.s32 0, %v1157
  %v1159 = vrot.slane %v1154, %v1158
  %v1161 = vmul.f32 %v1090, %v1159
  %v1162 = vmul.f32 %v1091, %v1159
  %v1163 = vmul.f32 %v1092, %v1159
  %v1164 = vmul.f32 %v1093, %v1159
  %v1165 = vmul.f32 %v1094, %v1159
  %v1166 = vmul.f32 %v1095, %v1159
  %v1167 = vmul.f32 %v1096, %v1159
  %v1168 = vmul.f32 %v1097, %v1159
  %v1169 = vmul.f32 %v1098, %v1159
  %v1170 = vmul.f32 %v1099, %v1159
  %v1171 = vmul.f32 %v1100, %v1159
  %v1172 = vmul.f32 %v1101, %v1159
  %v1173 = vmul.f32 %v1102, %v1159
  %v1174 = vmul.f32 %v1103, %v1159
  %v1175 = vmul.f32 %v1104, %v1159
  %v1176 = vmul.f32 %v1105, %v1159
  %v1177 = vmul.f32 %v1106, %v1159
  %v1178 = vmul.f32 %v1107, %v1159
  %v1179 = vmul.f32 %v1108, %v1159
  %v1180 = vmul.f32 %v1109, %v1159
  %v1181 = vmul.f32 %v1110, %v1159
  %v1182 = vmul.f32 %v1111, %v1159
  %v1183 = vmul.f32 %v1112, %v1159
  %v1184 = vmul.f32 %v1113, %v1159
  %v1185 = vmul.f32 %v1114, %v1159
  %v1186 = vmul.f32 %v1115, %v1159
  %v1187 = vmul.f32 %v1116, %v1159
  %v1188 = vmul.f32 %v1117, %v1159
  %v1189 = vmul.f32 %v1118, %v1159
  %v1190 = vmul.f32 %v1119, %v1159
  %v1191 = vmul.f32 %v1120, %v1159
  %v1192 = vmul.f32 %v1121, %v1159
  %v1193 = vmul.f32 %v1122, %v1159
  %v1194 = vmul.f32 %v1123, %v1159
  %v1195 = vmul.f32 %v1124, %v1159
  %v1196 = vmul.f32 %v1125, %v1159
  %v1197 = vmul.f32 %v1126, %v1159
  %v1198 = vmul.f32 %v1127, %v1159
  %v1199 = vmul.f32 %v1128, %v1159
  %v1200 = vmul.f32 %v1129, %v1159
  %v1201 = vmul.f32 %v1130, %v1159
  %v1202 = vmul.f32 %v1131, %v1159
  %v1203 = vmul.f32 %v1132, %v1159
  %v1204 = vmul.f32 %v1133, %v1159
  %v1205 = vmul.f32 %v1134, %v1159
  %v1206 = vmul.f32 %v1135, %v1159
  %v1207 = vmul.f32 %v1136, %v1159
  %v1208 = vmul.f32 %v1137, %v1159
  %v1209 = vmul.f32 %v1138, %v1159
  %v1210 = vmul.f32 %v1139, %v1159
  %v1211 = vmul.f32 %v1140, %v1159
  %v1212 = vmul.f32 %v1141, %v1159
  %v1213 = vmul.f32 %v1142, %v1159
  %v1214 = vmul.f32 %v1143, %v1159
  %v1215 = vmul.f32 %v1144, %v1159
  %v1216 = vmul.f32 %v1145, %v1159
  %v1217 = vmul.f32 %v1146, %v1159
  %v1218 = vmul.f32 %v1147, %v1159
  %v1219 = vmul.f32 %v1148, %v1159
  %v1220 = vmul.f32 %v1149, %v1159
  %v1221 = vmul.f32 %v1150, %v1159
  %v1222 = vmul.f32 %v1151, %v1159
  %v1223 = vmul.f32 %v1152, %v1159
  %v1224 = vmul.f32 %v1153, %v1159
  %v1225 = vld [vmem:[%s3] sm:$0x1]
  %v1227 = vlaneseq
  %v1228 = vshrl.u32 %v1227, 7
  %v1229 = vsub.s32 0, %v1228
  %v1230 = vrot.slane %v1225, %v1229
  %v1232 = vadd.f32 %v1161, %v1230
  %v1233 = vadd.f32 %v1162, %v1230
  %v1234 = vadd.f32 %v1163, %v1230
  %v1235 = vadd.f32 %v1164, %v1230
  %v1236 = vadd.f32 %v1165, %v1230
  %v1237 = vadd.f32 %v1166, %v1230
  %v1238 = vadd.f32 %v1167, %v1230
  %v1239 = vadd.f32 %v1168, %v1230
  %v1240 = vadd.f32 %v1169, %v1230
  %v1241 = vadd.f32 %v1170, %v1230
  %v1242 = vadd.f32 %v1171, %v1230
  %v1243 = vadd.f32 %v1172, %v1230
  %v1244 = vadd.f32 %v1173, %v1230
  %v1245 = vadd.f32 %v1174, %v1230
  %v1246 = vadd.f32 %v1175, %v1230
  %v1247 = vadd.f32 %v1176, %v1230
  %v1248 = vadd.f32 %v1177, %v1230
  %v1249 = vadd.f32 %v1178, %v1230
  %v1250 = vadd.f32 %v1179, %v1230
  %v1251 = vadd.f32 %v1180, %v1230
  %v1252 = vadd.f32 %v1181, %v1230
  %v1253 = vadd.f32 %v1182, %v1230
  %v1254 = vadd.f32 %v1183, %v1230
  %v1255 = vadd.f32 %v1184, %v1230
  %v1256 = vadd.f32 %v1185, %v1230
  %v1257 = vadd.f32 %v1186, %v1230
  %v1258 = vadd.f32 %v1187, %v1230
  %v1259 = vadd.f32 %v1188, %v1230
  %v1260 = vadd.f32 %v1189, %v1230
  %v1261 = vadd.f32 %v1190, %v1230
  %v1262 = vadd.f32 %v1191, %v1230
  %v1263 = vadd.f32 %v1192, %v1230
  %v1264 = vadd.f32 %v1193, %v1230
  %v1265 = vadd.f32 %v1194, %v1230
  %v1266 = vadd.f32 %v1195, %v1230
  %v1267 = vadd.f32 %v1196, %v1230
  %v1268 = vadd.f32 %v1197, %v1230
  %v1269 = vadd.f32 %v1198, %v1230
  %v1270 = vadd.f32 %v1199, %v1230
  %v1271 = vadd.f32 %v1200, %v1230
  %v1272 = vadd.f32 %v1201, %v1230
  %v1273 = vadd.f32 %v1202, %v1230
  %v1274 = vadd.f32 %v1203, %v1230
  %v1275 = vadd.f32 %v1204, %v1230
  %v1276 = vadd.f32 %v1205, %v1230
  %v1277 = vadd.f32 %v1206, %v1230
  %v1278 = vadd.f32 %v1207, %v1230
  %v1279 = vadd.f32 %v1208, %v1230
  %v1280 = vadd.f32 %v1209, %v1230
  %v1281 = vadd.f32 %v1210, %v1230
  %v1282 = vadd.f32 %v1211, %v1230
  %v1283 = vadd.f32 %v1212, %v1230
  %v1284 = vadd.f32 %v1213, %v1230
  %v1285 = vadd.f32 %v1214, %v1230
  %v1286 = vadd.f32 %v1215, %v1230
  %v1287 = vadd.f32 %v1216, %v1230
  %v1288 = vadd.f32 %v1217, %v1230
  %v1289 = vadd.f32 %v1218, %v1230
  %v1290 = vadd.f32 %v1219, %v1230
  %v1291 = vadd.f32 %v1220, %v1230
  %v1292 = vadd.f32 %v1221, %v1230
  %v1293 = vadd.f32 %v1222, %v1230
  %v1294 = vadd.f32 %v1223, %v1230
  %v1295 = vadd.f32 %v1224, %v1230
  %v1296 = vmax.f32 %v1232, 0.0
  %v1297 = vmax.f32 %v1233, 0.0
  %v1298 = vmax.f32 %v1234, 0.0
  %v1299 = vmax.f32 %v1235, 0.0
  %v1300 = vmax.f32 %v1236, 0.0
  %v1301 = vmax.f32 %v1237, 0.0
  %v1302 = vmax.f32 %v1238, 0.0
  %v1303 = vmax.f32 %v1239, 0.0
  %v1304 = vmax.f32 %v1240, 0.0
  %v1305 = vmax.f32 %v1241, 0.0
  %v1306 = vmax.f32 %v1242, 0.0
  %v1307 = vmax.f32 %v1243, 0.0
  %v1308 = vmax.f32 %v1244, 0.0
  %v1309 = vmax.f32 %v1245, 0.0
  %v1310 = vmax.f32 %v1246, 0.0
  %v1311 = vmax.f32 %v1247, 0.0
  %v1312 = vmax.f32 %v1248, 0.0
  %v1313 = vmax.f32 %v1249, 0.0
  %v1314 = vmax.f32 %v1250, 0.0
  %v1315 = vmax.f32 %v1251, 0.0
  %v1316 = vmax.f32 %v1252, 0.0
  %v1317 = vmax.f32 %v1253, 0.0
  %v1318 = vmax.f32 %v1254, 0.0
  %v1319 = vmax.f32 %v1255, 0.0
  %v1320 = vmax.f32 %v1256, 0.0
  %v1321 = vmax.f32 %v1257, 0.0
  %v1322 = vmax.f32 %v1258, 0.0
  %v1323 = vmax.f32 %v1259, 0.0
  %v1324 = vmax.f32 %v1260, 0.0
  %v1325 = vmax.f32 %v1261, 0.0
  %v1326 = vmax.f32 %v1262, 0.0
  %v1327 = vmax.f32 %v1263, 0.0
  %v1328 = vmax.f32 %v1264, 0.0
  %v1329 = vmax.f32 %v1265, 0.0
  %v1330 = vmax.f32 %v1266, 0.0
  %v1331 = vmax.f32 %v1267, 0.0
  %v1332 = vmax.f32 %v1268, 0.0
  %v1333 = vmax.f32 %v1269, 0.0
  %v1334 = vmax.f32 %v1270, 0.0
  %v1335 = vmax.f32 %v1271, 0.0
  %v1336 = vmax.f32 %v1272, 0.0
  %v1337 = vmax.f32 %v1273, 0.0
  %v1338 = vmax.f32 %v1274, 0.0
  %v1339 = vmax.f32 %v1275, 0.0
  %v1340 = vmax.f32 %v1276, 0.0
  %v1341 = vmax.f32 %v1277, 0.0
  %v1342 = vmax.f32 %v1278, 0.0
  %v1343 = vmax.f32 %v1279, 0.0
  %v1344 = vmax.f32 %v1280, 0.0
  %v1345 = vmax.f32 %v1281, 0.0
  %v1346 = vmax.f32 %v1282, 0.0
  %v1347 = vmax.f32 %v1283, 0.0
  %v1348 = vmax.f32 %v1284, 0.0
  %v1349 = vmax.f32 %v1285, 0.0
  %v1350 = vmax.f32 %v1286, 0.0
  %v1351 = vmax.f32 %v1287, 0.0
  %v1352 = vmax.f32 %v1288, 0.0
  %v1353 = vmax.f32 %v1289, 0.0
  %v1354 = vmax.f32 %v1290, 0.0
  %v1355 = vmax.f32 %v1291, 0.0
  %v1356 = vmax.f32 %v1292, 0.0
  %v1357 = vmax.f32 %v1293, 0.0
  %v1358 = vmax.f32 %v1294, 0.0
  %v1359 = vmax.f32 %v1295, 0.0
  %1360 = vst [vmem:[%s4] sm:$0xff] %v1296
  %1361 = vst [vmem:[%s4 + $0x8] sm:$0xff] %v1297
  %1362 = vst [vmem:[%s4 + $0x10] sm:$0xff] %v1298
  %1363 = vst [vmem:[%s4 + $0x18] sm:$0xff] %v1299
  %1364 = vst [vmem:[%s4 + $0x20] sm:$0xff] %v1300
  %1365 = vst [vmem:[%s4 + $0x28] sm:$0xff] %v1301
  %1366 = vst [vmem:[%s4 + $0x30] sm:$0xff] %v1302
  %1367 = vst [vmem:[%s4 + $0x38] sm:$0xff] %v1303
  %1368 = vst [vmem:[%s4 + $0x40] sm:$0xff] %v1304
  %1369 = vst [vmem:[%s4 + $0x48] sm:$0xff] %v1305
  %1370 = vst [vmem:[%s4 + $0x50] sm:$0xff] %v1306
  %1371 = vst [vmem:[%s4 + $0x58] sm:$0xff] %v1307
  %1372 = vst [vmem:[%s4 + $0x60] sm:$0xff] %v1308
  %1373 = vst [vmem:[%s4 + $0x68] sm:$0xff] %v1309
  %1374 = vst [vmem:[%s4 + $0x70] sm:$0xff] %v1310
  %1375 = vst [vmem:[%s4 + $0x78] sm:$0xff] %v1311
  %1376 = vst [vmem:[%s4 + $0x80] sm:$0xff] %v1312
  %1377 = vst [vmem:[%s4 + $0x88] sm:$0xff] %v1313
  %1378 = vst [vmem:[%s4 + $0x90] sm:$0xff] %v1314
  %1379 = vst [vmem:[%s4 + $0x98] sm:$0xff] %v1315
  %1380 = vst [vmem:[%s4 + $0xa0] sm:$0xff] %v1316
  %1381 = vst [vmem:[%s4 + $0xa8] sm:$0xff] %v1317
  %1382 = vst [vmem:[%s4 + $0xb0] sm:$0xff] %v1318
  %1383 = vst [vmem:[%s4 + $0xb8] sm:$0xff] %v1319
  %1384 = vst [vmem:[%s4 + $0xc0] sm:$0xff] %v1320
  %1385 = vst [vmem:[%s4 + $0xc8] sm:$0xff] %v1321
  %1386 = vst [vmem:[%s4 + $0xd0] sm:$0xff] %v1322
  %1387 = vst [vmem:[%s4 + $0xd8] sm:$0xff] %v1323
  %1388 = vst [vmem:[%s4 + $0xe0] sm:$0xff] %v1324
  %1389 = vst [vmem:[%s4 + $0xe8] sm:$0xff] %v1325
  %1390 = vst [vmem:[%s4 + $0xf0] sm:$0xff] %v1326
  %1391 = vst [vmem:[%s4 + $0xf8] sm:$0xff] %v1327
  %1392 = vst [vmem:[%s4 + $0x100] sm:$0xff] %v1328
  %1393 = vst [vmem:[%s4 + $0x108] sm:$0xff] %v1329
  %1394 = vst [vmem:[%s4 + $0x110] sm:$0xff] %v1330
  %1395 = vst [vmem:[%s4 + $0x118] sm:$0xff] %v1331
  %1396 = vst [vmem:[%s4 + $0x120] sm:$0xff] %v1332
  %1397 = vst [vmem:[%s4 + $0x128] sm:$0xff] %v1333
  %1398 = vst [vmem:[%s4 + $0x130] sm:$0xff] %v1334
  %1399 = vst [vmem:[%s4 + $0x138] sm:$0xff] %v1335
  %1400 = vst [vmem:[%s4 + $0x140] sm:$0xff] %v1336
  %1401 = vst [vmem:[%s4 + $0x148] sm:$0xff] %v1337
  %1402 = vst [vmem:[%s4 + $0x150] sm:$0xff] %v1338
  %1403 = vst [vmem:[%s4 + $0x158] sm:$0xff] %v1339
  %1404 = vst [vmem:[%s4 + $0x160] sm:$0xff] %v1340
  %1405 = vst [vmem:[%s4 + $0x168] sm:$0xff] %v1341
  %1406 = vst [vmem:[%s4 + $0x170] sm:$0xff] %v1342
  %1407 = vst [vmem:[%s4 + $0x178] sm:$0xff] %v1343
  %1408 = vst [vmem:[%s4 + $0x180] sm:$0xff] %v1344
  %1409 = vst [vmem:[%s4 + $0x188] sm:$0xff] %v1345
  %1410 = vst [vmem:[%s4 + $0x190] sm:$0xff] %v1346
  %1411 = vst [vmem:[%s4 + $0x198] sm:$0xff] %v1347
  %1412 = vst [vmem:[%s4 + $0x1a0] sm:$0xff] %v1348
  %1413 = vst [vmem:[%s4 + $0x1a8] sm:$0xff] %v1349
  %1414 = vst [vmem:[%s4 + $0x1b0] sm:$0xff] %v1350
  %1415 = vst [vmem:[%s4 + $0x1b8] sm:$0xff] %v1351
  %1416 = vst [vmem:[%s4 + $0x1c0] sm:$0xff] %v1352
  %1417 = vst [vmem:[%s4 + $0x1c8] sm:$0xff] %v1353
  %1418 = vst [vmem:[%s4 + $0x1d0] sm:$0xff] %v1354
  %1419 = vst [vmem:[%s4 + $0x1d8] sm:$0xff] %v1355
  %1420 = vst [vmem:[%s4 + $0x1e0] sm:$0xff] %v1356
  %1421 = vst [vmem:[%s4 + $0x1e8] sm:$0xff] %v1357
  %1422 = vst [vmem:[%s4 + $0x1f0] sm:$0xff] %v1358
  %1423 = vst [vmem:[%s4 + $0x1f8] sm:$0xff] %v1359
  // Predicated region
  $region18: #{cycle_generator_forward.10} parent=0 // pred_check
    _
  $region19: #{cycle_generator_forward.10} parent=0 // pred_check_branch
    %1425 = sbr.rel (0) target = $region21
  $region20: #{cycle_generator_forward.10} parent=0 // pred_region
    _
  $region21: #{cycle_generator_forward.10} parent=0 // pred_fallthru
    _
  // Predicated region
  $region22: #{cycle_generator_forward.10} parent=0 // pred_check
    _
  $region23: #{cycle_generator_forward.10} parent=0 // pred_check_branch
    %1427 = sbr.rel (0) target = $region25
  $region24: #{cycle_generator_forward.10} parent=0 // pred_region
    _
  $region25: #{cycle_generator_forward.10} parent=0 // pred_fallthru
    _

// kernel: cycle_generator_forward.11
$region0: #{cycle_generator_forward.11}
  #allocation0 [shape = 'u32[]', space=smem, size = 0x4, offset = 0x4, fixed_abs, tag = 'smem constant byte address 0x4 - core index']
  #allocation1 [shape = 'u32[144,128]{1,0:T(1,128)}', space=vmem, size = 0x12000, scoped, tag = 'internal scratch']
  %s0 = inlined_call_operand.vmem [shape: bf16[128,128], index: 0, kind: input, shape index: {}]
  %s1 = inlined_call_operand.vmem [shape: bf16[128,128], index: 1, kind: input, shape index: {}]
  %s2 = inlined_call_operand.vmem [shape: f32[1,128], index: 2, kind: input, shape index: {}]
  %s3 = inlined_call_operand.vmem [shape: f32[1,128], index: 3, kind: input, shape index: {}]
  %s4 = inlined_call_operand.vmem [shape: f32[128,128], index: 4, kind: output, shape index: {}]
  %s5 = sld [smem:[#allocation0]]
  $region26: #{cycle_generator_forward.11} parent=0
    _
  %s7 = ssub.s32 1, %s5
  %s8 = scalar_select 0, %s7, %s5
  // Predicated region
  $region2: #{cycle_generator_forward.11} parent=0 // pred_check
    _
  $region3: #{cycle_generator_forward.11} parent=0 // pred_check_branch
    %10 = sbr.rel (0) target = $region5
  $region4: #{cycle_generator_forward.11} parent=0 // pred_region
    _
  $region5: #{cycle_generator_forward.11} parent=0 // pred_fallthru
    _
  // Predicated region
  $region6: #{cycle_generator_forward.11} parent=0 // pred_check
    _
  $region7: #{cycle_generator_forward.11} parent=0 // pred_check_branch
    %12 = sbr.rel (0) target = $region9
  $region8: #{cycle_generator_forward.11} parent=0 // pred_region
    _
  $region9: #{cycle_generator_forward.11} parent=0 // pred_fallthru
    _
  // Predicated region
  $region10: #{cycle_generator_forward.11} parent=0 // pred_check
    _
  $region11: #{cycle_generator_forward.11} parent=0 // pred_check_branch
    %14 = sbr.rel (0) target = $region13
  $region12: #{cycle_generator_forward.11} parent=0 // pred_region
    _
  $region13: #{cycle_generator_forward.11} parent=0 // pred_fallthru
    _
  // Predicated region
  $region14: #{cycle_generator_forward.11} parent=0 // pred_check
    _
  $region15: #{cycle_generator_forward.11} parent=0 // pred_check_branch
    %16 = sbr.rel (0) target = $region17
  $region16: #{cycle_generator_forward.11} parent=0 // pred_region
    _
  $region17: #{cycle_generator_forward.11} parent=0 // pred_fallthru
    _
  %v18 = vld [vmem:[%s0] sm:$0xf]
  %v19 = vld [vmem:[%s0 + $0x4] sm:$0xf]
  %v20 = vld [vmem:[%s0 + $0x8] sm:$0xf]
  %v21 = vld [vmem:[%s0 + $0xc] sm:$0xf]
  %v22 = vld [vmem:[%s0 + $0x10] sm:$0xf]
  %v23 = vld [vmem:[%s0 + $0x14] sm:$0xf]
  %v24 = vld [vmem:[%s0 + $0x18] sm:$0xf]
  %v25 = vld [vmem:[%s0 + $0x1c] sm:$0xf]
  %v26 = vld [vmem:[%s0 + $0x20] sm:$0xf]
  %v27 = vld [vmem:[%s0 + $0x24] sm:$0xf]
  %v28 = vld [vmem:[%s0 + $0x28] sm:$0xf]
  %v29 = vld [vmem:[%s0 + $0x2c] sm:$0xf]
  %v30 = vld [vmem:[%s0 + $0x30] sm:$0xf]
  %v31 = vld [vmem:[%s0 + $0x34] sm:$0xf]
  %v32 = vld [vmem:[%s0 + $0x38] sm:$0xf]
  %v33 = vld [vmem:[%s0 + $0x3c] sm:$0xf]
  %v34 = vld [vmem:[%s1] sm:$0xf]
  %v35 = vld [vmem:[%s1 + $0x4] sm:$0xf]
  %v36 = vld [vmem:[%s1 + $0x8] sm:$0xf]
  %v37 = vld [vmem:[%s1 + $0xc] sm:$0xf]
  %v38 = vld [vmem:[%s1 + $0x10] sm:$0xf]
  %v39 = vld [vmem:[%s1 + $0x14] sm:$0xf]
  %v40 = vld [vmem:[%s1 + $0x18] sm:$0xf]
  %v41 = vld [vmem:[%s1 + $0x1c] sm:$0xf]
  %v42 = vld [vmem:[%s1 + $0x20] sm:$0xf]
  %v43 = vld [vmem:[%s1 + $0x24] sm:$0xf]
  %v44 = vld [vmem:[%s1 + $0x28] sm:$0xf]
  %v45 = vld [vmem:[%s1 + $0x2c] sm:$0xf]
  %v46 = vld [vmem:[%s1 + $0x30] sm:$0xf]
  %v47 = vld [vmem:[%s1 + $0x34] sm:$0xf]
  %v48 = vld [vmem:[%s1 + $0x38] sm:$0xf]
  %v49 = vld [vmem:[%s1 + $0x3c] sm:$0xf]
  %v66 = vunpack.c.l.b16 %v18
  %v67 = vunpack.c.l.b16 %v19
  %v68 = vunpack.c.l.b16 %v20
  %v69 = vunpack.c.l.b16 %v21
  %v70 = vunpack.c.l.b16 %v22
  %v71 = vunpack.c.l.b16 %v23
  %v72 = vunpack.c.l.b16 %v24
  %v73 = vunpack.c.l.b16 %v25
  %v74 = vunpack.c.l.b16 %v26
  %v75 = vunpack.c.l.b16 %v27
  %v76 = vunpack.c.l.b16 %v28
  %v77 = vunpack.c.l.b16 %v29
  %v78 = vunpack.c.l.b16 %v30
  %v79 = vunpack.c.l.b16 %v31
  %v80 = vunpack.c.l.b16 %v32
  %v81 = vunpack.c.l.b16 %v33
  %v82 = vpack.c.b16 %v67, %v66
  %v83 = vpack.c.b16 %v69, %v68
  %v84 = vpack.c.b16 %v71, %v70
  %v85 = vpack.c.b16 %v73, %v72
  %v86 = vpack.c.b16 %v75, %v74
  %v87 = vpack.c.b16 %v77, %v76
  %v88 = vpack.c.b16 %v79, %v78
  %v89 = vpack.c.b16 %v81, %v80
  %v114 = vunpack.c.l.b16 %v34
  %v115 = vunpack.c.l.b16 %v35
  %v116 = vunpack.c.l.b16 %v36
  %v117 = vunpack.c.l.b16 %v37
  %v118 = vunpack.c.l.b16 %v38
  %v119 = vunpack.c.l.b16 %v39
  %v120 = vunpack.c.l.b16 %v40
  %v121 = vunpack.c.l.b16 %v41
  %v122 = vunpack.c.l.b16 %v42
  %v123 = vunpack.c.l.b16 %v43
  %v124 = vunpack.c.l.b16 %v44
  %v125 = vunpack.c.l.b16 %v45
  %v126 = vunpack.c.l.b16 %v46
  %v127 = vunpack.c.l.b16 %v47
  %v128 = vunpack.c.l.b16 %v48
  %v129 = vunpack.c.l.b16 %v49
  %v130 = vpack.c.b16 %v115, %v114
  %v131 = vpack.c.b16 %v117, %v116
  %v132 = vpack.c.b16 %v119, %v118
  %v133 = vpack.c.b16 %v121, %v120
  %v134 = vpack.c.b16 %v123, %v122
  %v135 = vpack.c.b16 %v125, %v124
  %v136 = vpack.c.b16 %v127, %v126
  %v137 = vpack.c.b16 %v129, %v128
  %146 = vmatprep.subr.bf16.mxu0 0
  %147 = vmatpush1.bf16.msra.mxu0 %v137
  %148 = vmatprep.subr.bf16.mxu0 0
  %149 = vmatpush1.bf16.msra.mxu0 %v136
  %150 = vmatprep.subr.bf16.mxu0 0
  %151 = vmatpush1.bf16.msra.mxu0 %v135
  %152 = vmatprep.subr.bf16.mxu0 0
  %153 = vmatpush1.bf16.msra.mxu0 %v134
  %154 = vmatprep.subr.bf16.mxu0 0
  %155 = vmatpush1.bf16.msra.mxu0 %v133
  %156 = vmatprep.subr.bf16.mxu0 0
  %157 = vmatpush1.bf16.msra.mxu0 %v132
  %158 = vmatprep.subr.bf16.mxu0 0
  %159 = vmatpush1.bf16.msra.mxu0 %v131
  %160 = vmatprep.subr.bf16.mxu0 0
  %161 = vmatpush1.bf16.msra.mxu0 %v130
  %162 = vmatprep.subr.bf16.mxu0 0
  %163 = vmatpush2.bf16.msra.mxu0 0
  %164 = vmatprep.subr.bf16.mxu0 0
  %165 = vmatpush2.bf16.msra.mxu0 0
  %166 = vmatprep.subr.bf16.mxu0 0
  %167 = vmatpush2.bf16.msra.mxu0 0
  %168 = vmatprep.subr.bf16.mxu0 0
  %169 = vmatpush2.bf16.msra.mxu0 0
  %170 = vmatprep.subr.bf16.mxu0 0
  %171 = vmatpush2.bf16.msra.mxu0 0
  %172 = vmatprep.subr.bf16.mxu0 0
  %173 = vmatpush2.bf16.msra.mxu0 0
  %174 = vmatprep.subr.bf16.mxu0 0
  %175 = vmatpush2.bf16.msra.mxu0 0
  %176 = vmatprep.subr.bf16.mxu0 0
  %177 = vmatpush2.bf16.msra.mxu0 0
  %178 = vmatprep.mubr.bf16.mxu0 0
  %179 = vmatmul.mubr.bf16.gmra.mxu0 %v82
  %v180 = vpop.f32.mrf.mxu0
  %v181 = vadd.f32 0.0, %v180
  %v182 = vpop.f32.mrf.mxu0
  %v183 = vpop.f32.mrf.mxu0
  %v184 = vadd.f32 0.0, %v183
  %v185 = vpop.f32.mrf.mxu0
  %186 = vmatprep.mubr.bf16.mxu0 0
  %187 = vmatmul.mubr.bf16.gmra.mxu0 %v83
  %v188 = vpop.f32.mrf.mxu0
  %v189 = vadd.f32 0.0, %v188
  %v190 = vpop.f32.mrf.mxu0
  %v191 = vpop.f32.mrf.mxu0
  %v192 = vadd.f32 0.0, %v191
  %v193 = vpop.f32.mrf.mxu0
  %194 = vmatprep.mubr.bf16.mxu0 0
  %195 = vmatmul.mubr.bf16.gmra.mxu0 %v84
  %v196 = vpop.f32.mrf.mxu0
  %v197 = vadd.f32 0.0, %v196
  %v198 = vpop.f32.mrf.mxu0
  %v199 = vpop.f32.mrf.mxu0
  %v200 = vadd.f32 0.0, %v199
  %v201 = vpop.f32.mrf.mxu0
  %202 = vmatprep.mubr.bf16.mxu0 0
  %203 = vmatmul.mubr.bf16.gmra.mxu0 %v85
  %v204 = vpop.f32.mrf.mxu0
  %v205 = vadd.f32 0.0, %v204
  %v206 = vpop.f32.mrf.mxu0
  %v207 = vpop.f32.mrf.mxu0
  %v208 = vadd.f32 0.0, %v207
  %v209 = vpop.f32.mrf.mxu0
  %210 = vmatprep.mubr.bf16.mxu0 0
  %211 = vmatmul.mubr.bf16.gmra.mxu0 %v86
  %v212 = vpop.f32.mrf.mxu0
  %v213 = vadd.f32 0.0, %v212
  %v214 = vpop.f32.mrf.mxu0
  %v215 = vpop.f32.mrf.mxu0
  %v216 = vadd.f32 0.0, %v215
  %v217 = vpop.f32.mrf.mxu0
  %218 = vmatprep.mubr.bf16.mxu0 0
  %219 = vmatmul.mubr.bf16.gmra.mxu0 %v87
  %v220 = vpop.f32.mrf.mxu0
  %v221 = vadd.f32 0.0, %v220
  %v222 = vpop.f32.mrf.mxu0
  %v223 = vpop.f32.mrf.mxu0
  %v224 = vadd.f32 0.0, %v223
  %v225 = vpop.f32.mrf.mxu0
  %226 = vmatprep.mubr.bf16.mxu0 0
  %227 = vmatmul.mubr.bf16.gmra.mxu0 %v88
  %v228 = vpop.f32.mrf.mxu0
  %v229 = vadd.f32 0.0, %v228
  %v230 = vpop.f32.mrf.mxu0
  %v231 = vpop.f32.mrf.mxu0
  %v232 = vadd.f32 0.0, %v231
  %v233 = vpop.f32.mrf.mxu0
  %234 = vmatprep.mubr.bf16.mxu0 0
  %235 = vmatmul.mubr.bf16.gmra.mxu0 %v89
  %v236 = vpop.f32.mrf.mxu0
  %v237 = vadd.f32 0.0, %v236
  %v238 = vpop.f32.mrf.mxu0
  %v239 = vpop.f32.mrf.mxu0
  %v240 = vadd.f32 0.0, %v239
  %v241 = vpop.f32.mrf.mxu0
  %242 = vdwg.mxu0
  %v243 = vadd.f32 %v181, %v184
  %v244 = vadd.f32 %v243, %v189
  %v245 = vadd.f32 %v244, %v192
  %v246 = vadd.f32 %v245, %v197
  %v247 = vadd.f32 %v246, %v200
  %v248 = vadd.f32 %v247, %v205
  %v249 = vadd.f32 %v248, %v208
  %v250 = vadd.f32 %v249, %v213
  %v251 = vadd.f32 %v250, %v216
  %v252 = vadd.f32 %v251, %v221
  %v253 = vadd.f32 %v252, %v224
  %v254 = vadd.f32 %v253, %v229
  %v255 = vadd.f32 %v254, %v232
  %v256 = vadd.f32 %v255, %v237
  %v257 = vadd.f32 %v256, %v240
  %v258 = vrot.slane %v257, 4
  %v259 = vadd.f32 %v257, %v258
  %v260 = vrot.slane %v259, 2
  %v261 = vadd.f32 %v259, %v260
  %v262 = vrot.slane %v261, 1
  %v263 = vadd.f32 %v261, %v262
  %v264 = vrcp.pop 128.0
  %v265 = vmul.f32 %v263, %v264
  %v266 = vsub.f32 %v181, %v265
  %v267 = vsub.f32 %v184, %v265
  %v268 = vsub.f32 %v189, %v265
  %v269 = vsub.f32 %v192, %v265
  %v270 = vsub.f32 %v197, %v265
  %v271 = vsub.f32 %v200, %v265
  %v272 = vsub.f32 %v205, %v265
  %v273 = vsub.f32 %v208, %v265
  %v274 = vsub.f32 %v213, %v265
  %v275 = vsub.f32 %v216, %v265
  %v276 = vsub.f32 %v221, %v265
  %v277 = vsub.f32 %v224, %v265
  %v278 = vsub.f32 %v229, %v265
  %v279 = vsub.f32 %v232, %v265
  %v280 = vsub.f32 %v237, %v265
  %v281 = vsub.f32 %v240, %v265
  %v282 = vmul.f32 %v266, %v266
  %v283 = vmul.f32 %v267, %v267
  %v284 = vmul.f32 %v268, %v268
  %v285 = vmul.f32 %v269, %v269
  %v286 = vmul.f32 %v270, %v270
  %v287 = vmul.f32 %v271, %v271
  %v288 = vmul.f32 %v272, %v272
  %v289 = vmul.f32 %v273, %v273
  %v290 = vmul.f32 %v274, %v274
  %v291 = vmul.f32 %v275, %v275
  %v292 = vmul.f32 %v276, %v276
  %v293 = vmul.f32 %v277, %v277
  %v294 = vmul.f32 %v278, %v278
  %v295 = vmul.f32 %v279, %v279
  %v296 = vmul.f32 %v280, %v280
  %v297 = vmul.f32 %v281, %v281
  %v298 = vadd.f32 %v282, %v283
  %v299 = vadd.f32 %v298, %v284
  %v300 = vadd.f32 %v299, %v285
  %v301 = vadd.f32 %v300, %v286
  %v302 = vadd.f32 %v301, %v287
  %v303 = vadd.f32 %v302, %v288
  %v304 = vadd.f32 %v303, %v289
  %v305 = vadd.f32 %v304, %v290
  %v306 = vadd.f32 %v305, %v291
  %v307 = vadd.f32 %v306, %v292
  %v308 = vadd.f32 %v307, %v293
  %v309 = vadd.f32 %v308, %v294
  %v310 = vadd.f32 %v309, %v295
  %v311 = vadd.f32 %v310, %v296
  %v312 = vadd.f32 %v311, %v297
  %v313 = vrot.slane %v312, 4
  %v314 = vadd.f32 %v312, %v313
  %v315 = vrot.slane %v314, 2
  %v316 = vadd.f32 %v314, %v315
  %v317 = vrot.slane %v316, 1
  %v318 = vadd.f32 %v316, %v317
  %v319 = vmul.f32 %v318, %v264
  %v320 = vadd.f32 %v319, 1e-05
  %v321 = vrsqrt.pop %v320
  %v322 = vmul.f32 %v266, %v321
  %v323 = vmul.f32 %v267, %v321
  %v324 = vmul.f32 %v268, %v321
  %v325 = vmul.f32 %v269, %v321
  %v326 = vmul.f32 %v270, %v321
  %v327 = vmul.f32 %v271, %v321
  %v328 = vmul.f32 %v272, %v321
  %v329 = vmul.f32 %v273, %v321
  %v330 = vmul.f32 %v274, %v321
  %v331 = vmul.f32 %v275, %v321
  %v332 = vmul.f32 %v276, %v321
  %v333 = vmul.f32 %v277, %v321
  %v334 = vmul.f32 %v278, %v321
  %v335 = vmul.f32 %v279, %v321
  %v336 = vmul.f32 %v280, %v321
  %v337 = vmul.f32 %v281, %v321
  %v338 = vld [vmem:[%s2] sm:$0x1]
  %v340 = vlaneseq
  %v341 = vshrl.u32 %v340, 7
  %v342 = vsub.s32 0, %v341
  %v343 = vrot.slane %v338, %v342
  %v345 = vmul.f32 %v322, %v343
  %v346 = vmul.f32 %v323, %v343
  %v347 = vmul.f32 %v324, %v343
  %v348 = vmul.f32 %v325, %v343
  %v349 = vmul.f32 %v326, %v343
  %v350 = vmul.f32 %v327, %v343
  %v351 = vmul.f32 %v328, %v343
  %v352 = vmul.f32 %v329, %v343
  %v353 = vmul.f32 %v330, %v343
  %v354 = vmul.f32 %v331, %v343
  %v355 = vmul.f32 %v332, %v343
  %v356 = vmul.f32 %v333, %v343
  %v357 = vmul.f32 %v334, %v343
  %v358 = vmul.f32 %v335, %v343
  %v359 = vmul.f32 %v336, %v343
  %v360 = vmul.f32 %v337, %v343
  %v361 = vld [vmem:[%s3] sm:$0x1]
  %v363 = vlaneseq
  %v364 = vshrl.u32 %v363, 7
  %v365 = vsub.s32 0, %v364
  %v366 = vrot.slane %v361, %v365
  %v368 = vadd.f32 %v345, %v366
  %v369 = vadd.f32 %v346, %v366
  %v370 = vadd.f32 %v347, %v366
  %v371 = vadd.f32 %v348, %v366
  %v372 = vadd.f32 %v349, %v366
  %v373 = vadd.f32 %v350, %v366
  %v374 = vadd.f32 %v351, %v366
  %v375 = vadd.f32 %v352, %v366
  %v376 = vadd.f32 %v353, %v366
  %v377 = vadd.f32 %v354, %v366
  %v378 = vadd.f32 %v355, %v366
  %v379 = vadd.f32 %v356, %v366
  %v380 = vadd.f32 %v357, %v366
  %v381 = vadd.f32 %v358, %v366
  %v382 = vadd.f32 %v359, %v366
  %v383 = vadd.f32 %v360, %v366
  %v384 = vmax.f32 %v368, 0.0
  %v385 = vmax.f32 %v369, 0.0
  %v386 = vmax.f32 %v370, 0.0
  %v387 = vmax.f32 %v371, 0.0
  %v388 = vmax.f32 %v372, 0.0
  %v389 = vmax.f32 %v373, 0.0
  %v390 = vmax.f32 %v374, 0.0
  %v391 = vmax.f32 %v375, 0.0
  %v392 = vmax.f32 %v376, 0.0
  %v393 = vmax.f32 %v377, 0.0
  %v394 = vmax.f32 %v378, 0.0
  %v395 = vmax.f32 %v379, 0.0
  %v396 = vmax.f32 %v380, 0.0
  %v397 = vmax.f32 %v381, 0.0
  %v398 = vmax.f32 %v382, 0.0
  %v399 = vmax.f32 %v383, 0.0
  %400 = vst [vmem:[%s4] sm:$0xff] %v384
  %401 = vst [vmem:[%s4 + $0x8] sm:$0xff] %v385
  %402 = vst [vmem:[%s4 + $0x10] sm:$0xff] %v386
  %403 = vst [vmem:[%s4 + $0x18] sm:$0xff] %v387
  %404 = vst [vmem:[%s4 + $0x20] sm:$0xff] %v388
  %405 = vst [vmem:[%s4 + $0x28] sm:$0xff] %v389
  %406 = vst [vmem:[%s4 + $0x30] sm:$0xff] %v390
  %407 = vst [vmem:[%s4 + $0x38] sm:$0xff] %v391
  %408 = vst [vmem:[%s4 + $0x40] sm:$0xff] %v392
  %409 = vst [vmem:[%s4 + $0x48] sm:$0xff] %v393
  %410 = vst [vmem:[%s4 + $0x50] sm:$0xff] %v394
  %411 = vst [vmem:[%s4 + $0x58] sm:$0xff] %v395
  %412 = vst [vmem:[%s4 + $0x60] sm:$0xff] %v396
  %413 = vst [vmem:[%s4 + $0x68] sm:$0xff] %v397
  %414 = vst [vmem:[%s4 + $0x70] sm:$0xff] %v398
  %415 = vst [vmem:[%s4 + $0x78] sm:$0xff] %v399
  // Predicated region
  $region18: #{cycle_generator_forward.11} parent=0 // pred_check
    _
  $region19: #{cycle_generator_forward.11} parent=0 // pred_check_branch
    %417 = sbr.rel (0) target = $region21
  $region20: #{cycle_generator_forward.11} parent=0 // pred_region
    _
  $region21: #{cycle_generator_forward.11} parent=0 // pred_fallthru
    _
  // Predicated region
  $region22: #{cycle_generator_forward.11} parent=0 // pred_check
    _
  $region23: #{cycle_generator_forward.11} parent=0 // pred_check_branch
    %419 = sbr.rel (0) target = $region25
  $region24: #{cycle_generator_forward.11} parent=0 // pred_region
    _
  $region25: #{cycle_generator_forward.11} parent=0 // pred_fallthru
    _

// kernel: cycle_generator_forward.12
$region0: #{cycle_generator_forward.12}
  #allocation0 [shape = 'u32[]', space=smem, size = 0x4, offset = 0x4, fixed_abs, tag = 'smem constant byte address 0x4 - core index']
  #allocation1 [shape = 'u32[144,128]{1,0:T(1,128)}', space=vmem, size = 0x12000, scoped, tag = 'internal scratch']
  %s0 = inlined_call_operand.vmem [shape: bf16[128,256], index: 0, kind: input, shape index: {}]
  %s1 = inlined_call_operand.vmem [shape: bf16[256,128], index: 1, kind: input, shape index: {}]
  %s2 = inlined_call_operand.vmem [shape: f32[1,128], index: 2, kind: input, shape index: {}]
  %s3 = inlined_call_operand.vmem [shape: f32[1,128], index: 3, kind: input, shape index: {}]
  %s4 = inlined_call_operand.vmem [shape: f32[128,128], index: 4, kind: input, shape index: {}]
  %s5 = inlined_call_operand.vmem [shape: f32[128,128], index: 5, kind: output, shape index: {}]
  %s6 = sld [smem:[#allocation0]]
  $region30: #{cycle_generator_forward.12} parent=0
    _
  %s8 = ssub.s32 1, %s6
  %s9 = scalar_select 0, %s8, %s6
  // Predicated region
  $region2: #{cycle_generator_forward.12} parent=0 // pred_check
    _
  $region3: #{cycle_generator_forward.12} parent=0 // pred_check_branch
    %11 = sbr.rel (0) target = $region5
  $region4: #{cycle_generator_forward.12} parent=0 // pred_region
    _
  $region5: #{cycle_generator_forward.12} parent=0 // pred_fallthru
    _
  // Predicated region
  $region6: #{cycle_generator_forward.12} parent=0 // pred_check
    _
  $region7: #{cycle_generator_forward.12} parent=0 // pred_check_branch
    %13 = sbr.rel (0) target = $region9
  $region8: #{cycle_generator_forward.12} parent=0 // pred_region
    _
  $region9: #{cycle_generator_forward.12} parent=0 // pred_fallthru
    _
  // Predicated region
  $region10: #{cycle_generator_forward.12} parent=0 // pred_check
    _
  $region11: #{cycle_generator_forward.12} parent=0 // pred_check_branch
    %15 = sbr.rel (0) target = $region13
  $region12: #{cycle_generator_forward.12} parent=0 // pred_region
    _
  $region13: #{cycle_generator_forward.12} parent=0 // pred_fallthru
    _
  // Predicated region
  $region14: #{cycle_generator_forward.12} parent=0 // pred_check
    _
  $region15: #{cycle_generator_forward.12} parent=0 // pred_check_branch
    %17 = sbr.rel (0) target = $region17
  $region16: #{cycle_generator_forward.12} parent=0 // pred_region
    _
  $region17: #{cycle_generator_forward.12} parent=0 // pred_fallthru
    _
  // Predicated region
  $region18: #{cycle_generator_forward.12} parent=0 // pred_check
    _
  $region19: #{cycle_generator_forward.12} parent=0 // pred_check_branch
    %19 = sbr.rel (0) target = $region21
  $region20: #{cycle_generator_forward.12} parent=0 // pred_region
    _
  $region21: #{cycle_generator_forward.12} parent=0 // pred_fallthru
    _
  %v21 = vld [vmem:[%s0] sm:$0xff]
  %v22 = vld [vmem:[%s0 + $0x8] sm:$0xff]
  %v23 = vld [vmem:[%s0 + $0x10] sm:$0xff]
  %v24 = vld [vmem:[%s0 + $0x18] sm:$0xff]
  %v25 = vld [vmem:[%s0 + $0x20] sm:$0xff]
  %v26 = vld [vmem:[%s0 + $0x28] sm:$0xff]
  %v27 = vld [vmem:[%s0 + $0x30] sm:$0xff]
  %v28 = vld [vmem:[%s0 + $0x38] sm:$0xff]
  %v29 = vld [vmem:[%s0 + $0x40] sm:$0xff]
  %v30 = vld [vmem:[%s0 + $0x48] sm:$0xff]
  %v31 = vld [vmem:[%s0 + $0x50] sm:$0xff]
  %v32 = vld [vmem:[%s0 + $0x58] sm:$0xff]
  %v33 = vld [vmem:[%s0 + $0x60] sm:$0xff]
  %v34 = vld [vmem:[%s0 + $0x68] sm:$0xff]
  %v35 = vld [vmem:[%s0 + $0x70] sm:$0xff]
  %v36 = vld [vmem:[%s0 + $0x78] sm:$0xff]
  %v37 = vld [vmem:[%s1] sm:$0xf]
  %v38 = vld [vmem:[%s1 + $0x4] sm:$0xf]
  %v39 = vld [vmem:[%s1 + $0x8] sm:$0xf]
  %v40 = vld [vmem:[%s1 + $0xc] sm:$0xf]
  %v41 = vld [vmem:[%s1 + $0x10] sm:$0xf]
  %v42 = vld [vmem:[%s1 + $0x14] sm:$0xf]
  %v43 = vld [vmem:[%s1 + $0x18] sm:$0xf]
  %v44 = vld [vmem:[%s1 + $0x1c] sm:$0xf]
  %v45 = vld [vmem:[%s1 + $0x20] sm:$0xf]
  %v46 = vld [vmem:[%s1 + $0x24] sm:$0xf]
  %v47 = vld [vmem:[%s1 + $0x28] sm:$0xf]
  %v48 = vld [vmem:[%s1 + $0x2c] sm:$0xf]
  %v49 = vld [vmem:[%s1 + $0x30] sm:$0xf]
  %v50 = vld [vmem:[%s1 + $0x34] sm:$0xf]
  %v51 = vld [vmem:[%s1 + $0x38] sm:$0xf]
  %v52 = vld [vmem:[%s1 + $0x3c] sm:$0xf]
  %v53 = vld [vmem:[%s1 + $0x40] sm:$0xf]
  %v54 = vld [vmem:[%s1 + $0x44] sm:$0xf]
  %v55 = vld [vmem:[%s1 + $0x48] sm:$0xf]
  %v56 = vld [vmem:[%s1 + $0x4c] sm:$0xf]
  %v57 = vld [vmem:[%s1 + $0x50] sm:$0xf]
  %v58 = vld [vmem:[%s1 + $0x54] sm:$0xf]
  %v59 = vld [vmem:[%s1 + $0x58] sm:$0xf]
  %v60 = vld [vmem:[%s1 + $0x5c] sm:$0xf]
  %v61 = vld [vmem:[%s1 + $0x60] sm:$0xf]
  %v62 = vld [vmem:[%s1 + $0x64] sm:$0xf]
  %v63 = vld [vmem:[%s1 + $0x68] sm:$0xf]
  %v64 = vld [vmem:[%s1 + $0x6c] sm:$0xf]
  %v65 = vld [vmem:[%s1 + $0x70] sm:$0xf]
  %v66 = vld [vmem:[%s1 + $0x74] sm:$0xf]
  %v67 = vld [vmem:[%s1 + $0x78] sm:$0xf]
  %v68 = vld [vmem:[%s1 + $0x7c] sm:$0xf]
  %v85 = vunpack.c.l.b16 %v21
  %v86 = vunpack.c.h.b16 %v21
  %v87 = vunpack.c.l.b16 %v22
  %v88 = vunpack.c.h.b16 %v22
  %v89 = vunpack.c.l.b16 %v23
  %v90 = vunpack.c.h.b16 %v23
  %v91 = vunpack.c.l.b16 %v24
  %v92 = vunpack.c.h.b16 %v24
  %v93 = vunpack.c.l.b16 %v25
  %v94 = vunpack.c.h.b16 %v25
  %v95 = vunpack.c.l.b16 %v26
  %v96 = vunpack.c.h.b16 %v26
  %v97 = vunpack.c.l.b16 %v27
  %v98 = vunpack.c.h.b16 %v27
  %v99 = vunpack.c.l.b16 %v28
  %v100 = vunpack.c.h.b16 %v28
  %v101 = vunpack.c.l.b16 %v29
  %v102 = vunpack.c.h.b16 %v29
  %v103 = vunpack.c.l.b16 %v30
  %v104 = vunpack.c.h.b16 %v30
  %v105 = vunpack.c.l.b16 %v31
  %v106 = vunpack.c.h.b16 %v31
  %v107 = vunpack.c.l.b16 %v32
  %v108 = vunpack.c.h.b16 %v32
  %v109 = vunpack.c.l.b16 %v33
  %v110 = vunpack.c.h.b16 %v33
  %v111 = vunpack.c.l.b16 %v34
  %v112 = vunpack.c.h.b16 %v34
  %v113 = vunpack.c.l.b16 %v35
  %v114 = vunpack.c.h.b16 %v35
  %v115 = vunpack.c.l.b16 %v36
  %v116 = vunpack.c.h.b16 %v36
  %v117 = vpack.c.b16 %v87, %v85
  %v118 = vpack.c.b16 %v88, %v86
  %v119 = vpack.c.b16 %v91, %v89
  %v120 = vpack.c.b16 %v92, %v90
  %v121 = vpack.c.b16 %v95, %v93
  %v122 = vpack.c.b16 %v96, %v94
  %v123 = vpack.c.b16 %v99, %v97
  %v124 = vpack.c.b16 %v100, %v98
  %v125 = vpack.c.b16 %v103, %v101
  %v126 = vpack.c.b16 %v104, %v102
  %v127 = vpack.c.b16 %v107, %v105
  %v128 = vpack.c.b16 %v108, %v106
  %v129 = vpack.c.b16 %v111, %v109
  %v130 = vpack.c.b16 %v112, %v110
  %v131 = vpack.c.b16 %v115, %v113
  %v132 = vpack.c.b16 %v116, %v114
  %v181 = vunpack.c.l.b16 %v37
  %v182 = vunpack.c.l.b16 %v38
  %v183 = vunpack.c.l.b16 %v39
  %v184 = vunpack.c.l.b16 %v40
  %v185 = vunpack.c.l.b16 %v41
  %v186 = vunpack.c.l.b16 %v42
  %v187 = vunpack.c.l.b16 %v43
  %v188 = vunpack.c.l.b16 %v44
  %v189 = vunpack.c.l.b16 %v45
  %v190 = vunpack.c.l.b16 %v46
  %v191 = vunpack.c.l.b16 %v47
  %v192 = vunpack.c.l.b16 %v48
  %v193 = vunpack.c.l.b16 %v49
  %v194 = vunpack.c.l.b16 %v50
  %v195 = vunpack.c.l.b16 %v51
  %v196 = vunpack.c.l.b16 %v52
  %v197 = vunpack.c.l.b16 %v53
  %v198 = vunpack.c.l.b16 %v54
  %v199 = vunpack.c.l.b16 %v55
  %v200 = vunpack.c.l.b16 %v56
  %v201 = vunpack.c.l.b16 %v57
  %v202 = vunpack.c.l.b16 %v58
  %v203 = vunpack.c.l.b16 %v59
  %v204 = vunpack.c.l.b16 %v60
  %v205 = vunpack.c.l.b16 %v61
  %v206 = vunpack.c.l.b16 %v62
  %v207 = vunpack.c.l.b16 %v63
  %v208 = vunpack.c.l.b16 %v64
  %v209 = vunpack.c.l.b16 %v65
  %v210 = vunpack.c.l.b16 %v66
  %v211 = vunpack.c.l.b16 %v67
  %v212 = vunpack.c.l.b16 %v68
  %v213 = vpack.c.b16 %v182, %v181
  %v214 = vpack.c.b16 %v184, %v183
  %v215 = vpack.c.b16 %v186, %v185
  %v216 = vpack.c.b16 %v188, %v187
  %v217 = vpack.c.b16 %v190, %v189
  %v218 = vpack.c.b16 %v192, %v191
  %v219 = vpack.c.b16 %v194, %v193
  %v220 = vpack.c.b16 %v196, %v195
  %v221 = vpack.c.b16 %v198, %v197
  %v222 = vpack.c.b16 %v200, %v199
  %v223 = vpack.c.b16 %v202, %v201
  %v224 = vpack.c.b16 %v204, %v203
  %v225 = vpack.c.b16 %v206, %v205
  %v226 = vpack.c.b16 %v208, %v207
  %v227 = vpack.c.b16 %v210, %v209
  %v228 = vpack.c.b16 %v212, %v211
  %245 = vmatprep.subr.bf16.mxu0 0
  %246 = vmatpush1.bf16.msra.mxu0 %v220
  %247 = vmatprep.subr.bf16.mxu0 0
  %248 = vmatpush1.bf16.msra.mxu0 %v219
  %249 = vmatprep.subr.bf16.mxu0 0
  %250 = vmatpush1.bf16.msra.mxu0 %v218
  %251 = vmatprep.subr.bf16.mxu0 0
  %252 = vmatpush1.bf16.msra.mxu0 %v217
  %253 = vmatprep.subr.bf16.mxu0 0
  %254 = vmatpush1.bf16.msra.mxu0 %v216
  %255 = vmatprep.subr.bf16.mxu0 0
  %256 = vmatpush1.bf16.msra.mxu0 %v215
  %257 = vmatprep.subr.bf16.mxu0 0
  %258 = vmatpush1.bf16.msra.mxu0 %v214
  %259 = vmatprep.subr.bf16.mxu0 0
  %260 = vmatpush1.bf16.msra.mxu0 %v213
  %261 = vmatprep.subr.bf16.mxu0 0
  %262 = vmatpush2.bf16.msra.mxu0 %v228
  %263 = vmatprep.subr.bf16.mxu0 0
  %264 = vmatpush2.bf16.msra.mxu0 %v227
  %265 = vmatprep.subr.bf16.mxu0 0
  %266 = vmatpush2.bf16.msra.mxu0 %v226
  %267 = vmatprep.subr.bf16.mxu0 0
  %268 = vmatpush2.bf16.msra.mxu0 %v225
  %269 = vmatprep.subr.bf16.mxu0 0
  %270 = vmatpush2.bf16.msra.mxu0 %v224
  %271 = vmatprep.subr.bf16.mxu0 0
  %272 = vmatpush2.bf16.msra.mxu0 %v223
  %273 = vmatprep.subr.bf16.mxu0 0
  %274 = vmatpush2.bf16.msra.mxu0 %v222
  %275 = vmatprep.subr.bf16.mxu0 0
  %276 = vmatpush2.bf16.msra.mxu0 %v221
  %277 = vmatprep.mubr.bf16.mxu0 %v118
  %278 = vmatmul.mubr.bf16.gmra.mxu0 %v117
  %v279 = vpop.f32.mrf.mxu0
  %v280 = vadd.f32 0.0, %v279
  %v281 = vpop.f32.mrf.mxu0
  %v282 = vpop.f32.mrf.mxu0
  %v283 = vadd.f32 0.0, %v282
  %v284 = vpop.f32.mrf.mxu0
  %285 = vmatprep.mubr.bf16.mxu0 %v120
  %286 = vmatmul.mubr.bf16.gmra.mxu0 %v119
  %v287 = vpop.f32.mrf.mxu0
  %v288 = vadd.f32 0.0, %v287
  %v289 = vpop.f32.mrf.mxu0
  %v290 = vpop.f32.mrf.mxu0
  %v291 = vadd.f32 0.0, %v290
  %v292 = vpop.f32.mrf.mxu0
  %293 = vmatprep.mubr.bf16.mxu0 %v122
  %294 = vmatmul.mubr.bf16.gmra.mxu0 %v121
  %v295 = vpop.f32.mrf.mxu0
  %v296 = vadd.f32 0.0, %v295
  %v297 = vpop.f32.mrf.mxu0
  %v298 = vpop.f32.mrf.mxu0
  %v299 = vadd.f32 0.0, %v298
  %v300 = vpop.f32.mrf.mxu0
  %301 = vmatprep.mubr.bf16.mxu0 %v124
  %302 = vmatmul.mubr.bf16.gmra.mxu0 %v123
  %v303 = vpop.f32.mrf.mxu0
  %v304 = vadd.f32 0.0, %v303
  %v305 = vpop.f32.mrf.mxu0
  %v306 = vpop.f32.mrf.mxu0
  %v307 = vadd.f32 0.0, %v306
  %v308 = vpop.f32.mrf.mxu0
  %309 = vmatprep.mubr.bf16.mxu0 %v126
  %310 = vmatmul.mubr.bf16.gmra.mxu0 %v125
  %v311 = vpop.f32.mrf.mxu0
  %v312 = vadd.f32 0.0, %v311
  %v313 = vpop.f32.mrf.mxu0
  %v314 = vpop.f32.mrf.mxu0
  %v315 = vadd.f32 0.0, %v314
  %v316 = vpop.f32.mrf.mxu0
  %317 = vmatprep.mubr.bf16.mxu0 %v128
  %318 = vmatmul.mubr.bf16.gmra.mxu0 %v127
  %v319 = vpop.f32.mrf.mxu0
  %v320 = vadd.f32 0.0, %v319
  %v321 = vpop.f32.mrf.mxu0
  %v322 = vpop.f32.mrf.mxu0
  %v323 = vadd.f32 0.0, %v322
  %v324 = vpop.f32.mrf.mxu0
  %325 = vmatprep.mubr.bf16.mxu0 %v130
  %326 = vmatmul.mubr.bf16.gmra.mxu0 %v129
  %v327 = vpop.f32.mrf.mxu0
  %v328 = vadd.f32 0.0, %v327
  %v329 = vpop.f32.mrf.mxu0
  %v330 = vpop.f32.mrf.mxu0
  %v331 = vadd.f32 0.0, %v330
  %v332 = vpop.f32.mrf.mxu0
  %333 = vmatprep.mubr.bf16.mxu0 %v132
  %334 = vmatmul.mubr.bf16.gmra.mxu0 %v131
  %v335 = vpop.f32.mrf.mxu0
  %v336 = vadd.f32 0.0, %v335
  %v337 = vpop.f32.mrf.mxu0
  %v338 = vpop.f32.mrf.mxu0
  %v339 = vadd.f32 0.0, %v338
  %v340 = vpop.f32.mrf.mxu0
  %341 = vdwg.mxu0
  %v342 = vadd.f32 %v280, %v283
  %v343 = vadd.f32 %v342, %v288
  %v344 = vadd.f32 %v343, %v291
  %v345 = vadd.f32 %v344, %v296
  %v346 = vadd.f32 %v345, %v299
  %v347 = vadd.f32 %v346, %v304
  %v348 = vadd.f32 %v347, %v307
  %v349 = vadd.f32 %v348, %v312
  %v350 = vadd.f32 %v349, %v315
  %v351 = vadd.f32 %v350, %v320
  %v352 = vadd.f32 %v351, %v323
  %v353 = vadd.f32 %v352, %v328
  %v354 = vadd.f32 %v353, %v331
  %v355 = vadd.f32 %v354, %v336
  %v356 = vadd.f32 %v355, %v339
  %v357 = vrot.slane %v356, 4
  %v358 = vadd.f32 %v356, %v357
  %v359 = vrot.slane %v358, 2
  %v360 = vadd.f32 %v358, %v359
  %v361 = vrot.slane %v360, 1
  %v362 = vadd.f32 %v360, %v361
  %v363 = vrcp.pop 128.0
  %v364 = vmul.f32 %v362, %v363
  %v365 = vsub.f32 %v280, %v364
  %v366 = vsub.f32 %v283, %v364
  %v367 = vsub.f32 %v288, %v364
  %v368 = vsub.f32 %v291, %v364
  %v369 = vsub.f32 %v296, %v364
  %v370 = vsub.f32 %v299, %v364
  %v371 = vsub.f32 %v304, %v364
  %v372 = vsub.f32 %v307, %v364
  %v373 = vsub.f32 %v312, %v364
  %v374 = vsub.f32 %v315, %v364
  %v375 = vsub.f32 %v320, %v364
  %v376 = vsub.f32 %v323, %v364
  %v377 = vsub.f32 %v328, %v364
  %v378 = vsub.f32 %v331, %v364
  %v379 = vsub.f32 %v336, %v364
  %v380 = vsub.f32 %v339, %v364
  %v381 = vmul.f32 %v365, %v365
  %v382 = vmul.f32 %v366, %v366
  %v383 = vmul.f32 %v367, %v367
  %v384 = vmul.f32 %v368, %v368
  %v385 = vmul.f32 %v369, %v369
  %v386 = vmul.f32 %v370, %v370
  %v387 = vmul.f32 %v371, %v371
  %v388 = vmul.f32 %v372, %v372
  %v389 = vmul.f32 %v373, %v373
  %v390 = vmul.f32 %v374, %v374
  %v391 = vmul.f32 %v375, %v375
  %v392 = vmul.f32 %v376, %v376
  %v393 = vmul.f32 %v377, %v377
  %v394 = vmul.f32 %v378, %v378
  %v395 = vmul.f32 %v379, %v379
  %v396 = vmul.f32 %v380, %v380
  %v397 = vadd.f32 %v381, %v382
  %v398 = vadd.f32 %v397, %v383
  %v399 = vadd.f32 %v398, %v384
  %v400 = vadd.f32 %v399, %v385
  %v401 = vadd.f32 %v400, %v386
  %v402 = vadd.f32 %v401, %v387
  %v403 = vadd.f32 %v402, %v388
  %v404 = vadd.f32 %v403, %v389
  %v405 = vadd.f32 %v404, %v390
  %v406 = vadd.f32 %v405, %v391
  %v407 = vadd.f32 %v406, %v392
  %v408 = vadd.f32 %v407, %v393
  %v409 = vadd.f32 %v408, %v394
  %v410 = vadd.f32 %v409, %v395
  %v411 = vadd.f32 %v410, %v396
  %v412 = vrot.slane %v411, 4
  %v413 = vadd.f32 %v411, %v412
  %v414 = vrot.slane %v413, 2
  %v415 = vadd.f32 %v413, %v414
  %v416 = vrot.slane %v415, 1
  %v417 = vadd.f32 %v415, %v416
  %v418 = vmul.f32 %v417, %v363
  %v419 = vadd.f32 %v418, 1e-05
  %v420 = vrsqrt.pop %v419
  %v421 = vmul.f32 %v365, %v420
  %v422 = vmul.f32 %v366, %v420
  %v423 = vmul.f32 %v367, %v420
  %v424 = vmul.f32 %v368, %v420
  %v425 = vmul.f32 %v369, %v420
  %v426 = vmul.f32 %v370, %v420
  %v427 = vmul.f32 %v371, %v420
  %v428 = vmul.f32 %v372, %v420
  %v429 = vmul.f32 %v373, %v420
  %v430 = vmul.f32 %v374, %v420
  %v431 = vmul.f32 %v375, %v420
  %v432 = vmul.f32 %v376, %v420
  %v433 = vmul.f32 %v377, %v420
  %v434 = vmul.f32 %v378, %v420
  %v435 = vmul.f32 %v379, %v420
  %v436 = vmul.f32 %v380, %v420
  %v437 = vld [vmem:[%s2] sm:$0x1]
  %v439 = vlaneseq
  %v440 = vshrl.u32 %v439, 7
  %v441 = vsub.s32 0, %v440
  %v442 = vrot.slane %v437, %v441
  %v444 = vmul.f32 %v421, %v442
  %v445 = vmul.f32 %v422, %v442
  %v446 = vmul.f32 %v423, %v442
  %v447 = vmul.f32 %v424, %v442
  %v448 = vmul.f32 %v425, %v442
  %v449 = vmul.f32 %v426, %v442
  %v450 = vmul.f32 %v427, %v442
  %v451 = vmul.f32 %v428, %v442
  %v452 = vmul.f32 %v429, %v442
  %v453 = vmul.f32 %v430, %v442
  %v454 = vmul.f32 %v431, %v442
  %v455 = vmul.f32 %v432, %v442
  %v456 = vmul.f32 %v433, %v442
  %v457 = vmul.f32 %v434, %v442
  %v458 = vmul.f32 %v435, %v442
  %v459 = vmul.f32 %v436, %v442
  %v460 = vld [vmem:[%s3] sm:$0x1]
  %v462 = vlaneseq
  %v463 = vshrl.u32 %v462, 7
  %v464 = vsub.s32 0, %v463
  %v465 = vrot.slane %v460, %v464
  %v467 = vadd.f32 %v444, %v465
  %v468 = vadd.f32 %v445, %v465
  %v469 = vadd.f32 %v446, %v465
  %v470 = vadd.f32 %v447, %v465
  %v471 = vadd.f32 %v448, %v465
  %v472 = vadd.f32 %v449, %v465
  %v473 = vadd.f32 %v450, %v465
  %v474 = vadd.f32 %v451, %v465
  %v475 = vadd.f32 %v452, %v465
  %v476 = vadd.f32 %v453, %v465
  %v477 = vadd.f32 %v454, %v465
  %v478 = vadd.f32 %v455, %v465
  %v479 = vadd.f32 %v456, %v465
  %v480 = vadd.f32 %v457, %v465
  %v481 = vadd.f32 %v458, %v465
  %v482 = vadd.f32 %v459, %v465
  %v483 = vld [vmem:[%s4] sm:$0xff]
  %v484 = vld [vmem:[%s4 + $0x8] sm:$0xff]
  %v485 = vld [vmem:[%s4 + $0x10] sm:$0xff]
  %v486 = vld [vmem:[%s4 + $0x18] sm:$0xff]
  %v487 = vld [vmem:[%s4 + $0x20] sm:$0xff]
  %v488 = vld [vmem:[%s4 + $0x28] sm:$0xff]
  %v489 = vld [vmem:[%s4 + $0x30] sm:$0xff]
  %v490 = vld [vmem:[%s4 + $0x38] sm:$0xff]
  %v491 = vld [vmem:[%s4 + $0x40] sm:$0xff]
  %v492 = vld [vmem:[%s4 + $0x48] sm:$0xff]
  %v493 = vld [vmem:[%s4 + $0x50] sm:$0xff]
  %v494 = vld [vmem:[%s4 + $0x58] sm:$0xff]
  %v495 = vld [vmem:[%s4 + $0x60] sm:$0xff]
  %v496 = vld [vmem:[%s4 + $0x68] sm:$0xff]
  %v497 = vld [vmem:[%s4 + $0x70] sm:$0xff]
  %v498 = vld [vmem:[%s4 + $0x78] sm:$0xff]
  %v499 = vadd.f32 %v467, %v483
  %v500 = vadd.f32 %v468, %v484
  %v501 = vadd.f32 %v469, %v485
  %v502 = vadd.f32 %v470, %v486
  %v503 = vadd.f32 %v471, %v487
  %v504 = vadd.f32 %v472, %v488
  %v505 = vadd.f32 %v473, %v489
  %v506 = vadd.f32 %v474, %v490
  %v507 = vadd.f32 %v475, %v491
  %v508 = vadd.f32 %v476, %v492
  %v509 = vadd.f32 %v477, %v493
  %v510 = vadd.f32 %v478, %v494
  %v511 = vadd.f32 %v479, %v495
  %v512 = vadd.f32 %v480, %v496
  %v513 = vadd.f32 %v481, %v497
  %v514 = vadd.f32 %v482, %v498
  %515 = vst [vmem:[%s5] sm:$0xff] %v499
  %516 = vst [vmem:[%s5 + $0x8] sm:$0xff] %v500
  %517 = vst [vmem:[%s5 + $0x10] sm:$0xff] %v501
  %518 = vst [vmem:[%s5 + $0x18] sm:$0xff] %v502
  %519 = vst [vmem:[%s5 + $0x20] sm:$0xff] %v503
  %520 = vst [vmem:[%s5 + $0x28] sm:$0xff] %v504
  %521 = vst [vmem:[%s5 + $0x30] sm:$0xff] %v505
  %522 = vst [vmem:[%s5 + $0x38] sm:$0xff] %v506
  %523 = vst [vmem:[%s5 + $0x40] sm:$0xff] %v507
  %524 = vst [vmem:[%s5 + $0x48] sm:$0xff] %v508
  %525 = vst [vmem:[%s5 + $0x50] sm:$0xff] %v509
  %526 = vst [vmem:[%s5 + $0x58] sm:$0xff] %v510
  %527 = vst [vmem:[%s5 + $0x60] sm:$0xff] %v511
  %528 = vst [vmem:[%s5 + $0x68] sm:$0xff] %v512
  %529 = vst [vmem:[%s5 + $0x70] sm:$0xff] %v513
  %530 = vst [vmem:[%s5 + $0x78] sm:$0xff] %v514
  // Predicated region
  $region22: #{cycle_generator_forward.12} parent=0 // pred_check
    _
  $region23: #{cycle_generator_forward.12} parent=0 // pred_check_branch
    %532 = sbr.rel (0) target = $region25
  $region24: #{cycle_generator_forward.12} parent=0 // pred_region
    _
  $region25: #{cycle_generator_forward.12} parent=0 // pred_fallthru
    _
  // Predicated region
  $region26: #{cycle_generator_forward.12} parent=0 // pred_check
    _
  $region27: #{cycle_generator_forward.12} parent=0 // pred_check_branch
    %534 = sbr.rel (0) target = $region29
  $region28: #{cycle_generator_forward.12} parent=0 // pred_region
    _
  $region29: #{cycle_generator_forward.12} parent=0 // pred_fallthru
    _

// kernel: cycle_generator_forward.17
$region0: #{cycle_generator_forward.17}
  #allocation0 [shape = 'u32[]', space=smem, size = 0x4, offset = 0x4, fixed_abs, tag = 'smem constant byte address 0x4 - core index']
  #allocation1 [shape = 'u32[144,128]{1,0:T(1,128)}', space=vmem, size = 0x12000, scoped, tag = 'internal scratch']
  %s0 = inlined_call_operand.vmem [shape: bf16[128,256], index: 0, kind: input, shape index: {}]
  %s1 = inlined_call_operand.vmem [shape: bf16[256,128], index: 1, kind: input, shape index: {}]
  %s2 = inlined_call_operand.vmem [shape: f32[1,128], index: 2, kind: input, shape index: {}]
  %s3 = inlined_call_operand.vmem [shape: f32[1,128], index: 3, kind: input, shape index: {}]
  %s4 = inlined_call_operand.vmem [shape: f32[128,128], index: 4, kind: input, shape index: {}]
  %s5 = inlined_call_operand.vmem [shape: f32[128,128], index: 5, kind: output, shape index: {}]
  %s6 = sld [smem:[#allocation0]]
  $region30: #{cycle_generator_forward.17} parent=0
    _
  %s8 = ssub.s32 1, %s6
  %s9 = scalar_select 0, %s8, %s6
  // Predicated region
  $region2: #{cycle_generator_forward.17} parent=0 // pred_check
    _
  $region3: #{cycle_generator_forward.17} parent=0 // pred_check_branch
    %11 = sbr.rel (0) target = $region5
  $region4: #{cycle_generator_forward.17} parent=0 // pred_region
    _
  $region5: #{cycle_generator_forward.17} parent=0 // pred_fallthru
    _
  // Predicated region
  $region6: #{cycle_generator_forward.17} parent=0 // pred_check
    _
  $region7: #{cycle_generator_forward.17} parent=0 // pred_check_branch
    %13 = sbr.rel (0) target = $region9
  $region8: #{cycle_generator_forward.17} parent=0 // pred_region
    _
  $region9: #{cycle_generator_forward.17} parent=0 // pred_fallthru
    _
  // Predicated region
  $region10: #{cycle_generator_forward.17} parent=0 // pred_check
    _
  $region11: #{cycle_generator_forward.17} parent=0 // pred_check_branch
    %15 = sbr.rel (0) target = $region13
  $region12: #{cycle_generator_forward.17} parent=0 // pred_region
    _
  $region13: #{cycle_generator_forward.17} parent=0 // pred_fallthru
    _
  // Predicated region
  $region14: #{cycle_generator_forward.17} parent=0 // pred_check
    _
  $region15: #{cycle_generator_forward.17} parent=0 // pred_check_branch
    %17 = sbr.rel (0) target = $region17
  $region16: #{cycle_generator_forward.17} parent=0 // pred_region
    _
  $region17: #{cycle_generator_forward.17} parent=0 // pred_fallthru
    _
  // Predicated region
  $region18: #{cycle_generator_forward.17} parent=0 // pred_check
    _
  $region19: #{cycle_generator_forward.17} parent=0 // pred_check_branch
    %19 = sbr.rel (0) target = $region21
  $region20: #{cycle_generator_forward.17} parent=0 // pred_region
    _
  $region21: #{cycle_generator_forward.17} parent=0 // pred_fallthru
    _
  %v21 = vld [vmem:[%s0] sm:$0xff]
  %v22 = vld [vmem:[%s0 + $0x8] sm:$0xff]
  %v23 = vld [vmem:[%s0 + $0x10] sm:$0xff]
  %v24 = vld [vmem:[%s0 + $0x18] sm:$0xff]
  %v25 = vld [vmem:[%s0 + $0x20] sm:$0xff]
  %v26 = vld [vmem:[%s0 + $0x28] sm:$0xff]
  %v27 = vld [vmem:[%s0 + $0x30] sm:$0xff]
  %v28 = vld [vmem:[%s0 + $0x38] sm:$0xff]
  %v29 = vld [vmem:[%s0 + $0x40] sm:$0xff]
  %v30 = vld [vmem:[%s0 + $0x48] sm:$0xff]
  %v31 = vld [vmem:[%s0 + $0x50] sm:$0xff]
  %v32 = vld [vmem:[%s0 + $0x58] sm:$0xff]
  %v33 = vld [vmem:[%s0 + $0x60] sm:$0xff]
  %v34 = vld [vmem:[%s0 + $0x68] sm:$0xff]
  %v35 = vld [vmem:[%s0 + $0x70] sm:$0xff]
  %v36 = vld [vmem:[%s0 + $0x78] sm:$0xff]
  %v37 = vld [vmem:[%s1] sm:$0xf]
  %v38 = vld [vmem:[%s1 + $0x4] sm:$0xf]
  %v39 = vld [vmem:[%s1 + $0x8] sm:$0xf]
  %v40 = vld [vmem:[%s1 + $0xc] sm:$0xf]
  %v41 = vld [vmem:[%s1 + $0x10] sm:$0xf]
  %v42 = vld [vmem:[%s1 + $0x14] sm:$0xf]
  %v43 = vld [vmem:[%s1 + $0x18] sm:$0xf]
  %v44 = vld [vmem:[%s1 + $0x1c] sm:$0xf]
  %v45 = vld [vmem:[%s1 + $0x20] sm:$0xf]
  %v46 = vld [vmem:[%s1 + $0x24] sm:$0xf]
  %v47 = vld [vmem:[%s1 + $0x28] sm:$0xf]
  %v48 = vld [vmem:[%s1 + $0x2c] sm:$0xf]
  %v49 = vld [vmem:[%s1 + $0x30] sm:$0xf]
  %v50 = vld [vmem:[%s1 + $0x34] sm:$0xf]
  %v51 = vld [vmem:[%s1 + $0x38] sm:$0xf]
  %v52 = vld [vmem:[%s1 + $0x3c] sm:$0xf]
  %v53 = vld [vmem:[%s1 + $0x40] sm:$0xf]
  %v54 = vld [vmem:[%s1 + $0x44] sm:$0xf]
  %v55 = vld [vmem:[%s1 + $0x48] sm:$0xf]
  %v56 = vld [vmem:[%s1 + $0x4c] sm:$0xf]
  %v57 = vld [vmem:[%s1 + $0x50] sm:$0xf]
  %v58 = vld [vmem:[%s1 + $0x54] sm:$0xf]
  %v59 = vld [vmem:[%s1 + $0x58] sm:$0xf]
  %v60 = vld [vmem:[%s1 + $0x5c] sm:$0xf]
  %v61 = vld [vmem:[%s1 + $0x60] sm:$0xf]
  %v62 = vld [vmem:[%s1 + $0x64] sm:$0xf]
  %v63 = vld [vmem:[%s1 + $0x68] sm:$0xf]
  %v64 = vld [vmem:[%s1 + $0x6c] sm:$0xf]
  %v65 = vld [vmem:[%s1 + $0x70] sm:$0xf]
  %v66 = vld [vmem:[%s1 + $0x74] sm:$0xf]
  %v67 = vld [vmem:[%s1 + $0x78] sm:$0xf]
  %v68 = vld [vmem:[%s1 + $0x7c] sm:$0xf]
  %v85 = vunpack.c.l.b16 %v21
  %v86 = vunpack.c.h.b16 %v21
  %v87 = vunpack.c.l.b16 %v22
  %v88 = vunpack.c.h.b16 %v22
  %v89 = vunpack.c.l.b16 %v23
  %v90 = vunpack.c.h.b16 %v23
  %v91 = vunpack.c.l.b16 %v24
  %v92 = vunpack.c.h.b16 %v24
  %v93 = vunpack.c.l.b16 %v25
  %v94 = vunpack.c.h.b16 %v25
  %v95 = vunpack.c.l.b16 %v26
  %v96 = vunpack.c.h.b16 %v26
  %v97 = vunpack.c.l.b16 %v27
  %v98 = vunpack.c.h.b16 %v27
  %v99 = vunpack.c.l.b16 %v28
  %v100 = vunpack.c.h.b16 %v28
  %v101 = vunpack.c.l.b16 %v29
  %v102 = vunpack.c.h.b16 %v29
  %v103 = vunpack.c.l.b16 %v30
  %v104 = vunpack.c.h.b16 %v30
  %v105 = vunpack.c.l.b16 %v31
  %v106 = vunpack.c.h.b16 %v31
  %v107 = vunpack.c.l.b16 %v32
  %v108 = vunpack.c.h.b16 %v32
  %v109 = vunpack.c.l.b16 %v33
  %v110 = vunpack.c.h.b16 %v33
  %v111 = vunpack.c.l.b16 %v34
  %v112 = vunpack.c.h.b16 %v34
  %v113 = vunpack.c.l.b16 %v35
  %v114 = vunpack.c.h.b16 %v35
  %v115 = vunpack.c.l.b16 %v36
  %v116 = vunpack.c.h.b16 %v36
  %v117 = vpack.c.b16 %v87, %v85
  %v118 = vpack.c.b16 %v88, %v86
  %v119 = vpack.c.b16 %v91, %v89
  %v120 = vpack.c.b16 %v92, %v90
  %v121 = vpack.c.b16 %v95, %v93
  %v122 = vpack.c.b16 %v96, %v94
  %v123 = vpack.c.b16 %v99, %v97
  %v124 = vpack.c.b16 %v100, %v98
  %v125 = vpack.c.b16 %v103, %v101
  %v126 = vpack.c.b16 %v104, %v102
  %v127 = vpack.c.b16 %v107, %v105
  %v128 = vpack.c.b16 %v108, %v106
  %v129 = vpack.c.b16 %v111, %v109
  %v130 = vpack.c.b16 %v112, %v110
  %v131 = vpack.c.b16 %v115, %v113
  %v132 = vpack.c.b16 %v116, %v114
  %v181 = vunpack.c.l.b16 %v37
  %v182 = vunpack.c.l.b16 %v38
  %v183 = vunpack.c.l.b16 %v39
  %v184 = vunpack.c.l.b16 %v40
  %v185 = vunpack.c.l.b16 %v41
  %v186 = vunpack.c.l.b16 %v42
  %v187 = vunpack.c.l.b16 %v43
  %v188 = vunpack.c.l.b16 %v44
  %v189 = vunpack.c.l.b16 %v45
  %v190 = vunpack.c.l.b16 %v46
  %v191 = vunpack.c.l.b16 %v47
  %v192 = vunpack.c.l.b16 %v48
  %v193 = vunpack.c.l.b16 %v49
  %v194 = vunpack.c.l.b16 %v50
  %v195 = vunpack.c.l.b16 %v51
  %v196 = vunpack.c.l.b16 %v52
  %v197 = vunpack.c.l.b16 %v53
  %v198 = vunpack.c.l.b16 %v54
  %v199 = vunpack.c.l.b16 %v55
  %v200 = vunpack.c.l.b16 %v56
  %v201 = vunpack.c.l.b16 %v57
  %v202 = vunpack.c.l.b16 %v58
  %v203 = vunpack.c.l.b16 %v59
  %v204 = vunpack.c.l.b16 %v60
  %v205 = vunpack.c.l.b16 %v61
  %v206 = vunpack.c.l.b16 %v62
  %v207 = vunpack.c.l.b16 %v63
  %v208 = vunpack.c.l.b16 %v64
  %v209 = vunpack.c.l.b16 %v65
  %v210 = vunpack.c.l.b16 %v66
  %v211 = vunpack.c.l.b16 %v67
  %v212 = vunpack.c.l.b16 %v68
  %v213 = vpack.c.b16 %v182, %v181
  %v214 = vpack.c.b16 %v184, %v183
  %v215 = vpack.c.b16 %v186, %v185
  %v216 = vpack.c.b16 %v188, %v187
  %v217 = vpack.c.b16 %v190, %v189
  %v218 = vpack.c.b16 %v192, %v191
  %v219 = vpack.c.b16 %v194, %v193
  %v220 = vpack.c.b16 %v196, %v195
  %v221 = vpack.c.b16 %v198, %v197
  %v222 = vpack.c.b16 %v200, %v199
  %v223 = vpack.c.b16 %v202, %v201
  %v224 = vpack.c.b16 %v204, %v203
  %v225 = vpack.c.b16 %v206, %v205
  %v226 = vpack.c.b16 %v208, %v207
  %v227 = vpack.c.b16 %v210, %v209
  %v228 = vpack.c.b16 %v212, %v211
  %245 = vmatprep.subr.bf16.mxu0 0
  %246 = vmatpush1.bf16.msra.mxu0 %v220
  %247 = vmatprep.subr.bf16.mxu0 0
  %248 = vmatpush1.bf16.msra.mxu0 %v219
  %249 = vmatprep.subr.bf16.mxu0 0
  %250 = vmatpush1.bf16.msra.mxu0 %v218
  %251 = vmatprep.subr.bf16.mxu0 0
  %252 = vmatpush1.bf16.msra.mxu0 %v217
  %253 = vmatprep.subr.bf16.mxu0 0
  %254 = vmatpush1.bf16.msra.mxu0 %v216
  %255 = vmatprep.subr.bf16.mxu0 0
  %256 = vmatpush1.bf16.msra.mxu0 %v215
  %257 = vmatprep.subr.bf16.mxu0 0
  %258 = vmatpush1.bf16.msra.mxu0 %v214
  %259 = vmatprep.subr.bf16.mxu0 0
  %260 = vmatpush1.bf16.msra.mxu0 %v213
  %261 = vmatprep.subr.bf16.mxu0 0
  %262 = vmatpush2.bf16.msra.mxu0 %v228
  %263 = vmatprep.subr.bf16.mxu0 0
  %264 = vmatpush2.bf16.msra.mxu0 %v227
  %265 = vmatprep.subr.bf16.mxu0 0
  %266 = vmatpush2.bf16.msra.mxu0 %v226
  %267 = vmatprep.subr.bf16.mxu0 0
  %268 = vmatpush2.bf16.msra.mxu0 %v225
  %269 = vmatprep.subr.bf16.mxu0 0
  %270 = vmatpush2.bf16.msra.mxu0 %v224
  %271 = vmatprep.subr.bf16.mxu0 0
  %272 = vmatpush2.bf16.msra.mxu0 %v223
  %273 = vmatprep.subr.bf16.mxu0 0
  %274 = vmatpush2.bf16.msra.mxu0 %v222
  %275 = vmatprep.subr.bf16.mxu0 0
  %276 = vmatpush2.bf16.msra.mxu0 %v221
  %277 = vmatprep.mubr.bf16.mxu0 %v118
  %278 = vmatmul.mubr.bf16.gmra.mxu0 %v117
  %v279 = vpop.f32.mrf.mxu0
  %v280 = vadd.f32 0.0, %v279
  %v281 = vpop.f32.mrf.mxu0
  %v282 = vpop.f32.mrf.mxu0
  %v283 = vadd.f32 0.0, %v282
  %v284 = vpop.f32.mrf.mxu0
  %285 = vmatprep.mubr.bf16.mxu0 %v120
  %286 = vmatmul.mubr.bf16.gmra.mxu0 %v119
  %v287 = vpop.f32.mrf.mxu0
  %v288 = vadd.f32 0.0, %v287
  %v289 = vpop.f32.mrf.mxu0
  %v290 = vpop.f32.mrf.mxu0
  %v291 = vadd.f32 0.0, %v290
  %v292 = vpop.f32.mrf.mxu0
  %293 = vmatprep.mubr.bf16.mxu0 %v122
  %294 = vmatmul.mubr.bf16.gmra.mxu0 %v121
  %v295 = vpop.f32.mrf.mxu0
  %v296 = vadd.f32 0.0, %v295
  %v297 = vpop.f32.mrf.mxu0
  %v298 = vpop.f32.mrf.mxu0
  %v299 = vadd.f32 0.0, %v298
  %v300 = vpop.f32.mrf.mxu0
  %301 = vmatprep.mubr.bf16.mxu0 %v124
  %302 = vmatmul.mubr.bf16.gmra.mxu0 %v123
  %v303 = vpop.f32.mrf.mxu0
  %v304 = vadd.f32 0.0, %v303
  %v305 = vpop.f32.mrf.mxu0
  %v306 = vpop.f32.mrf.mxu0
  %v307 = vadd.f32 0.0, %v306
  %v308 = vpop.f32.mrf.mxu0
  %309 = vmatprep.mubr.bf16.mxu0 %v126
  %310 = vmatmul.mubr.bf16.gmra.mxu0 %v125
  %v311 = vpop.f32.mrf.mxu0
  %v312 = vadd.f32 0.0, %v311
  %v313 = vpop.f32.mrf.mxu0
  %v314 = vpop.f32.mrf.mxu0
  %v315 = vadd.f32 0.0, %v314
  %v316 = vpop.f32.mrf.mxu0
  %317 = vmatprep.mubr.bf16.mxu0 %v128
  %318 = vmatmul.mubr.bf16.gmra.mxu0 %v127
  %v319 = vpop.f32.mrf.mxu0
  %v320 = vadd.f32 0.0, %v319
  %v321 = vpop.f32.mrf.mxu0
  %v322 = vpop.f32.mrf.mxu0
  %v323 = vadd.f32 0.0, %v322
  %v324 = vpop.f32.mrf.mxu0
  %325 = vmatprep.mubr.bf16.mxu0 %v130
  %326 = vmatmul.mubr.bf16.gmra.mxu0 %v129
  %v327 = vpop.f32.mrf.mxu0
  %v328 = vadd.f32 0.0, %v327
  %v329 = vpop.f32.mrf.mxu0
  %v330 = vpop.f32.mrf.mxu0
  %v331 = vadd.f32 0.0, %v330
  %v332 = vpop.f32.mrf.mxu0
  %333 = vmatprep.mubr.bf16.mxu0 %v132
  %334 = vmatmul.mubr.bf16.gmra.mxu0 %v131
  %v335 = vpop.f32.mrf.mxu0
  %v336 = vadd.f32 0.0, %v335
  %v337 = vpop.f32.mrf.mxu0
  %v338 = vpop.f32.mrf.mxu0
  %v339 = vadd.f32 0.0, %v338
  %v340 = vpop.f32.mrf.mxu0
  %341 = vdwg.mxu0
  %v342 = vadd.f32 %v280, %v283
  %v343 = vadd.f32 %v342, %v288
  %v344 = vadd.f32 %v343, %v291
  %v345 = vadd.f32 %v344, %v296
  %v346 = vadd.f32 %v345, %v299
  %v347 = vadd.f32 %v346, %v304
  %v348 = vadd.f32 %v347, %v307
  %v349 = vadd.f32 %v348, %v312
  %v350 = vadd.f32 %v349, %v315
  %v351 = vadd.f32 %v350, %v320
  %v352 = vadd.f32 %v351, %v323
  %v353 = vadd.f32 %v352, %v328
  %v354 = vadd.f32 %v353, %v331
  %v355 = vadd.f32 %v354, %v336
  %v356 = vadd.f32 %v355, %v339
  %v357 = vrot.slane %v356, 4
  %v358 = vadd.f32 %v356, %v357
  %v359 = vrot.slane %v358, 2
  %v360 = vadd.f32 %v358, %v359
  %v361 = vrot.slane %v360, 1
  %v362 = vadd.f32 %v360, %v361
  %v363 = vrcp.pop 128.0
  %v364 = vmul.f32 %v362, %v363
  %v365 = vsub.f32 %v280, %v364
  %v366 = vsub.f32 %v283, %v364
  %v367 = vsub.f32 %v288, %v364
  %v368 = vsub.f32 %v291, %v364
  %v369 = vsub.f32 %v296, %v364
  %v370 = vsub.f32 %v299, %v364
  %v371 = vsub.f32 %v304, %v364
  %v372 = vsub.f32 %v307, %v364
  %v373 = vsub.f32 %v312, %v364
  %v374 = vsub.f32 %v315, %v364
  %v375 = vsub.f32 %v320, %v364
  %v376 = vsub.f32 %v323, %v364
  %v377 = vsub.f32 %v328, %v364
  %v378 = vsub.f32 %v331, %v364
  %v379 = vsub.f32 %v336, %v364
  %v380 = vsub.f32 %v339, %v364
  %v381 = vmul.f32 %v365, %v365
  %v382 = vmul.f32 %v366, %v366
  %v383 = vmul.f32 %v367, %v367
  %v384 = vmul.f32 %v368, %v368
  %v385 = vmul.f32 %v369, %v369
  %v386 = vmul.f32 %v370, %v370
  %v387 = vmul.f32 %v371, %v371
  %v388 = vmul.f32 %v372, %v372
  %v389 = vmul.f32 %v373, %v373
  %v390 = vmul.f32 %v374, %v374
  %v391 = vmul.f32 %v375, %v375
  %v392 = vmul.f32 %v376, %v376
  %v393 = vmul.f32 %v377, %v377
  %v394 = vmul.f32 %v378, %v378
  %v395 = vmul.f32 %v379, %v379
  %v396 = vmul.f32 %v380, %v380
  %v397 = vadd.f32 %v381, %v382
  %v398 = vadd.f32 %v397, %v383
  %v399 = vadd.f32 %v398, %v384
  %v400 = vadd.f32 %v399, %v385
  %v401 = vadd.f32 %v400, %v386
  %v402 = vadd.f32 %v401, %v387
  %v403 = vadd.f32 %v402, %v388
  %v404 = vadd.f32 %v403, %v389
  %v405 = vadd.f32 %v404, %v390
  %v406 = vadd.f32 %v405, %v391
  %v407 = vadd.f32 %v406, %v392
  %v408 = vadd.f32 %v407, %v393
  %v409 = vadd.f32 %v408, %v394
  %v410 = vadd.f32 %v409, %v395
  %v411 = vadd.f32 %v410, %v396
  %v412 = vrot.slane %v411, 4
  %v413 = vadd.f32 %v411, %v412
  %v414 = vrot.slane %v413, 2
  %v415 = vadd.f32 %v413, %v414
  %v416 = vrot.slane %v415, 1
  %v417 = vadd.f32 %v415, %v416
  %v418 = vmul.f32 %v417, %v363
  %v419 = vadd.f32 %v418, 1e-05
  %v420 = vrsqrt.pop %v419
  %v421 = vmul.f32 %v365, %v420
  %v422 = vmul.f32 %v366, %v420
  %v423 = vmul.f32 %v367, %v420
  %v424 = vmul.f32 %v368, %v420
  %v425 = vmul.f32 %v369, %v420
  %v426 = vmul.f32 %v370, %v420
  %v427 = vmul.f32 %v371, %v420
  %v428 = vmul.f32 %v372, %v420
  %v429 = vmul.f32 %v373, %v420
  %v430 = vmul.f32 %v374, %v420
  %v431 = vmul.f32 %v375, %v420
  %v432 = vmul.f32 %v376, %v420
  %v433 = vmul.f32 %v377, %v420
  %v434 = vmul.f32 %v378, %v420
  %v435 = vmul.f32 %v379, %v420
  %v436 = vmul.f32 %v380, %v420
  %v437 = vld [vmem:[%s2] sm:$0x1]
  %v439 = vlaneseq
  %v440 = vshrl.u32 %v439, 7
  %v441 = vsub.s32 0, %v440
  %v442 = vrot.slane %v437, %v441
  %v444 = vmul.f32 %v421, %v442
  %v445 = vmul.f32 %v422, %v442
  %v446 = vmul.f32 %v423, %v442
  %v447 = vmul.f32 %v424, %v442
  %v448 = vmul.f32 %v425, %v442
  %v449 = vmul.f32 %v426, %v442
  %v450 = vmul.f32 %v427, %v442
  %v451 = vmul.f32 %v428, %v442
  %v452 = vmul.f32 %v429, %v442
  %v453 = vmul.f32 %v430, %v442
  %v454 = vmul.f32 %v431, %v442
  %v455 = vmul.f32 %v432, %v442
  %v456 = vmul.f32 %v433, %v442
  %v457 = vmul.f32 %v434, %v442
  %v458 = vmul.f32 %v435, %v442
  %v459 = vmul.f32 %v436, %v442
  %v460 = vld [vmem:[%s3] sm:$0x1]
  %v462 = vlaneseq
  %v463 = vshrl.u32 %v462, 7
  %v464 = vsub.s32 0, %v463
  %v465 = vrot.slane %v460, %v464
  %v467 = vadd.f32 %v444, %v465
  %v468 = vadd.f32 %v445, %v465
  %v469 = vadd.f32 %v446, %v465
  %v470 = vadd.f32 %v447, %v465
  %v471 = vadd.f32 %v448, %v465
  %v472 = vadd.f32 %v449, %v465
  %v473 = vadd.f32 %v450, %v465
  %v474 = vadd.f32 %v451, %v465
  %v475 = vadd.f32 %v452, %v465
  %v476 = vadd.f32 %v453, %v465
  %v477 = vadd.f32 %v454, %v465
  %v478 = vadd.f32 %v455, %v465
  %v479 = vadd.f32 %v456, %v465
  %v480 = vadd.f32 %v457, %v465
  %v481 = vadd.f32 %v458, %v465
  %v482 = vadd.f32 %v459, %v465
  %v483 = vld [vmem:[%s4] sm:$0xff]
  %v484 = vld [vmem:[%s4 + $0x8] sm:$0xff]
  %v485 = vld [vmem:[%s4 + $0x10] sm:$0xff]
  %v486 = vld [vmem:[%s4 + $0x18] sm:$0xff]
  %v487 = vld [vmem:[%s4 + $0x20] sm:$0xff]
  %v488 = vld [vmem:[%s4 + $0x28] sm:$0xff]
  %v489 = vld [vmem:[%s4 + $0x30] sm:$0xff]
  %v490 = vld [vmem:[%s4 + $0x38] sm:$0xff]
  %v491 = vld [vmem:[%s4 + $0x40] sm:$0xff]
  %v492 = vld [vmem:[%s4 + $0x48] sm:$0xff]
  %v493 = vld [vmem:[%s4 + $0x50] sm:$0xff]
  %v494 = vld [vmem:[%s4 + $0x58] sm:$0xff]
  %v495 = vld [vmem:[%s4 + $0x60] sm:$0xff]
  %v496 = vld [vmem:[%s4 + $0x68] sm:$0xff]
  %v497 = vld [vmem:[%s4 + $0x70] sm:$0xff]
  %v498 = vld [vmem:[%s4 + $0x78] sm:$0xff]
  %v499 = vadd.f32 %v467, %v483
  %v500 = vadd.f32 %v468, %v484
  %v501 = vadd.f32 %v469, %v485
  %v502 = vadd.f32 %v470, %v486
  %v503 = vadd.f32 %v471, %v487
  %v504 = vadd.f32 %v472, %v488
  %v505 = vadd.f32 %v473, %v489
  %v506 = vadd.f32 %v474, %v490
  %v507 = vadd.f32 %v475, %v491
  %v508 = vadd.f32 %v476, %v492
  %v509 = vadd.f32 %v477, %v493
  %v510 = vadd.f32 %v478, %v494
  %v511 = vadd.f32 %v479, %v495
  %v512 = vadd.f32 %v480, %v496
  %v513 = vadd.f32 %v481, %v497
  %v514 = vadd.f32 %v482, %v498
  %v515 = vmax.f32 %v499, 0.0
  %v516 = vmax.f32 %v500, 0.0
  %v517 = vmax.f32 %v501, 0.0
  %v518 = vmax.f32 %v502, 0.0
  %v519 = vmax.f32 %v503, 0.0
  %v520 = vmax.f32 %v504, 0.0
  %v521 = vmax.f32 %v505, 0.0
  %v522 = vmax.f32 %v506, 0.0
  %v523 = vmax.f32 %v507, 0.0
  %v524 = vmax.f32 %v508, 0.0
  %v525 = vmax.f32 %v509, 0.0
  %v526 = vmax.f32 %v510, 0.0
  %v527 = vmax.f32 %v511, 0.0
  %v528 = vmax.f32 %v512, 0.0
  %v529 = vmax.f32 %v513, 0.0
  %v530 = vmax.f32 %v514, 0.0
  %531 = vst [vmem:[%s5] sm:$0xff] %v515
  %532 = vst [vmem:[%s5 + $0x8] sm:$0xff] %v516
  %533 = vst [vmem:[%s5 + $0x10] sm:$0xff] %v517
  %534 = vst [vmem:[%s5 + $0x18] sm:$0xff] %v518
  %535 = vst [vmem:[%s5 + $0x20] sm:$0xff] %v519
  %536 = vst [vmem:[%s5 + $0x28] sm:$0xff] %v520
  %537 = vst [vmem:[%s5 + $0x30] sm:$0xff] %v521
  %538 = vst [vmem:[%s5 + $0x38] sm:$0xff] %v522
  %539 = vst [vmem:[%s5 + $0x40] sm:$0xff] %v523
  %540 = vst [vmem:[%s5 + $0x48] sm:$0xff] %v524
  %541 = vst [vmem:[%s5 + $0x50] sm:$0xff] %v525
  %542 = vst [vmem:[%s5 + $0x58] sm:$0xff] %v526
  %543 = vst [vmem:[%s5 + $0x60] sm:$0xff] %v527
  %544 = vst [vmem:[%s5 + $0x68] sm:$0xff] %v528
  %545 = vst [vmem:[%s5 + $0x70] sm:$0xff] %v529
  %546 = vst [vmem:[%s5 + $0x78] sm:$0xff] %v530
  // Predicated region
  $region22: #{cycle_generator_forward.17} parent=0 // pred_check
    _
  $region23: #{cycle_generator_forward.17} parent=0 // pred_check_branch
    %548 = sbr.rel (0) target = $region25
  $region24: #{cycle_generator_forward.17} parent=0 // pred_region
    _
  $region25: #{cycle_generator_forward.17} parent=0 // pred_fallthru
    _
  // Predicated region
  $region26: #{cycle_generator_forward.17} parent=0 // pred_check
    _
  $region27: #{cycle_generator_forward.17} parent=0 // pred_check_branch
    %550 = sbr.rel (0) target = $region29
  $region28: #{cycle_generator_forward.17} parent=0 // pred_region
    _
  $region29: #{cycle_generator_forward.17} parent=0 // pred_fallthru
    _

// kernel: tile.13
$region0: #{tile.13}
  #allocation0 [shape = 's32[1]{0}', space=sflag, size = 0x4, scoped, tag = 'scoped memory for tile.13']
  %s0 = inlined_call_operand.vmem [shape: f32[8], index: 0, kind: input, shape index: {}]
  %s1 = inlined_call_operand.vmem [shape: f32[4,8], index: 1, kind: output, shape index: {}]
  // Predicated region
  $region2: #{tile.13} parent=0 // pred_check
    _
  $region3: #{tile.13} parent=0 // pred_check_branch
    %3 = sbr.rel (0) target = $region5
  $region4: #{tile.13} parent=0 // pred_region
    _
  $region5: #{tile.13} parent=0 // pred_fallthru
    _
  %v4 = vld [vmem:[%s0] ss:$0 sm:$0xff]
  %5 = vst [vmem:[%s1] sm:$0xf] %v4

// kernel: tile.14
$region0: #{tile.14}
  %s0 = inlined_call_operand.vmem [shape: f32[4,8], index: 0, kind: input, shape index: {}]
  %s1 = inlined_call_operand.vmem [shape: f32[32], index: 1, kind: output, shape index: {}]
  $region1: #{tile.14} parent=0
    #allocation0 [shape = 'u8[4096]{0}', space=vmem, size = 0x1000, scoped, tag = 'scoped mem for output reshape']
    #allocation1 [shape = 'u8[4096]{0}', space=vmem, size = 0x1000, scoped, tag = 'scoped mem for input reshape']
    %s3 = sshll.u32 1, 4
    %s4 = ssub.s32 %s3, 1
    %v5 = vld [vmem:[%s0] sm:%s4]
    %6 = vst [vmem:[#allocation1] sm:%s4] %v5
    %v7 = vld [vmem:[#allocation1] sm:$0x1]
    %vm8 = vcmask 64512
    %9 = vst.msk [vmem:[#allocation0] sm:$0x1] %vm8, %v7
    %s10 = scalar_lea.vmem [#allocation1], 3
    %v11 = vld [vmem:[%s10] sm:$0x1]
    %12 = vrot.lane.b32.xlu0 %v11, 24
    %v13 = vpop.permute.xlu0 %12
    %vm14 = vcmask 261312
    %15 = vst.msk [vmem:[#allocation0] sm:$0x1] %vm14, %v13
    %s16 = scalar_lea.vmem [#allocation1], 2
    %v17 = vld [vmem:[%s16] sm:$0x1]
    %18 = vrot.lane.b32.xlu0 %v17, 16
    %v19 = vpop.permute.xlu0 %18
    %vm20 = vcmask 195712
    %21 = vst.msk [vmem:[#allocation0] sm:$0x1] %vm20, %v19
    %s22 = scalar_lea.vmem [#allocation1], 1
    %v23 = vld [vmem:[%s22] sm:$0x1]
    %24 = vrot.lane.b32.xlu0 %v23, 8
    %v25 = vpop.permute.xlu0 %24
    %vm26 = vcmask 130112
    %27 = vst.msk [vmem:[#allocation0] sm:$0x1] %vm26, %v25
    %s29 = sshll.u32 1, 1
    %s30 = ssub.s32 %s29, 1
    %v32 = vld [vmem:[#allocation0] sm:%s30]
    %s33 = sshll.u32 1, 1
    %s34 = ssub.s32 %s33, 1
    %35 = vst [vmem:[%s1] sm:%s34] %v32

// kernel: cycle_generator_forward.18
$region0: #{cycle_generator_forward.18}
  #allocation0 [shape = 'u32[]', space=smem, size = 0x4, offset = 0x4, fixed_abs, tag = 'smem constant byte address 0x4 - core index']
  #allocation1 [shape = 'u32[144,128]{1,0:T(1,128)}', space=vmem, size = 0x12000, scoped, tag = 'internal scratch']
  %s0 = inlined_call_operand.vmem [shape: bf16[128,256], index: 0, kind: input, shape index: {}]
  %s1 = inlined_call_operand.vmem [shape: bf16[256,128], index: 1, kind: input, shape index: {}]
  %s2 = inlined_call_operand.vmem [shape: f32[1,128], index: 2, kind: input, shape index: {}]
  %s3 = inlined_call_operand.vmem [shape: f32[1,128], index: 3, kind: input, shape index: {}]
  %s4 = inlined_call_operand.vmem [shape: f32[128,128], index: 4, kind: input, shape index: {}]
  %s5 = inlined_call_operand.vmem [shape: f32[128,128], index: 5, kind: output, shape index: {}]
  %s6 = sld [smem:[#allocation0]]
  $region30: #{cycle_generator_forward.18} parent=0
    _
  %s8 = ssub.s32 1, %s6
  %s9 = scalar_select 0, %s8, %s6
  // Predicated region
  $region2: #{cycle_generator_forward.18} parent=0 // pred_check
    _
  $region3: #{cycle_generator_forward.18} parent=0 // pred_check_branch
    %11 = sbr.rel (0) target = $region5
  $region4: #{cycle_generator_forward.18} parent=0 // pred_region
    _
  $region5: #{cycle_generator_forward.18} parent=0 // pred_fallthru
    _
  // Predicated region
  $region6: #{cycle_generator_forward.18} parent=0 // pred_check
    _
  $region7: #{cycle_generator_forward.18} parent=0 // pred_check_branch
    %13 = sbr.rel (0) target = $region9
  $region8: #{cycle_generator_forward.18} parent=0 // pred_region
    _
  $region9: #{cycle_generator_forward.18} parent=0 // pred_fallthru
    _
  // Predicated region
  $region10: #{cycle_generator_forward.18} parent=0 // pred_check
    _
  $region11: #{cycle_generator_forward.18} parent=0 // pred_check_branch
    %15 = sbr.rel (0) target = $region13
  $region12: #{cycle_generator_forward.18} parent=0 // pred_region
    _
  $region13: #{cycle_generator_forward.18} parent=0 // pred_fallthru
    _
  // Predicated region
  $region14: #{cycle_generator_forward.18} parent=0 // pred_check
    _
  $region15: #{cycle_generator_forward.18} parent=0 // pred_check_branch
    %17 = sbr.rel (0) target = $region17
  $region16: #{cycle_generator_forward.18} parent=0 // pred_region
    _
  $region17: #{cycle_generator_forward.18} parent=0 // pred_fallthru
    _
  // Predicated region
  $region18: #{cycle_generator_forward.18} parent=0 // pred_check
    _
  $region19: #{cycle_generator_forward.18} parent=0 // pred_check_branch
    %19 = sbr.rel (0) target = $region21
  $region20: #{cycle_generator_forward.18} parent=0 // pred_region
    _
  $region21: #{cycle_generator_forward.18} parent=0 // pred_fallthru
    _
  %v21 = vld [vmem:[%s0] sm:$0xff]
  %v22 = vld [vmem:[%s0 + $0x8] sm:$0xff]
  %v23 = vld [vmem:[%s0 + $0x10] sm:$0xff]
  %v24 = vld [vmem:[%s0 + $0x18] sm:$0xff]
  %v25 = vld [vmem:[%s0 + $0x20] sm:$0xff]
  %v26 = vld [vmem:[%s0 + $0x28] sm:$0xff]
  %v27 = vld [vmem:[%s0 + $0x30] sm:$0xff]
  %v28 = vld [vmem:[%s0 + $0x38] sm:$0xff]
  %v29 = vld [vmem:[%s0 + $0x40] sm:$0xff]
  %v30 = vld [vmem:[%s0 + $0x48] sm:$0xff]
  %v31 = vld [vmem:[%s0 + $0x50] sm:$0xff]
  %v32 = vld [vmem:[%s0 + $0x58] sm:$0xff]
  %v33 = vld [vmem:[%s0 + $0x60] sm:$0xff]
  %v34 = vld [vmem:[%s0 + $0x68] sm:$0xff]
  %v35 = vld [vmem:[%s0 + $0x70] sm:$0xff]
  %v36 = vld [vmem:[%s0 + $0x78] sm:$0xff]
  %v37 = vld [vmem:[%s1] sm:$0xf]
  %v38 = vld [vmem:[%s1 + $0x4] sm:$0xf]
  %v39 = vld [vmem:[%s1 + $0x8] sm:$0xf]
  %v40 = vld [vmem:[%s1 + $0xc] sm:$0xf]
  %v41 = vld [vmem:[%s1 + $0x10] sm:$0xf]
  %v42 = vld [vmem:[%s1 + $0x14] sm:$0xf]
  %v43 = vld [vmem:[%s1 + $0x18] sm:$0xf]
  %v44 = vld [vmem:[%s1 + $0x1c] sm:$0xf]
  %v45 = vld [vmem:[%s1 + $0x20] sm:$0xf]
  %v46 = vld [vmem:[%s1 + $0x24] sm:$0xf]
  %v47 = vld [vmem:[%s1 + $0x28] sm:$0xf]
  %v48 = vld [vmem:[%s1 + $0x2c] sm:$0xf]
  %v49 = vld [vmem:[%s1 + $0x30] sm:$0xf]
  %v50 = vld [vmem:[%s1 + $0x34] sm:$0xf]
  %v51 = vld [vmem:[%s1 + $0x38] sm:$0xf]
  %v52 = vld [vmem:[%s1 + $0x3c] sm:$0xf]
  %v53 = vld [vmem:[%s1 + $0x40] sm:$0xf]
  %v54 = vld [vmem:[%s1 + $0x44] sm:$0xf]
  %v55 = vld [vmem:[%s1 + $0x48] sm:$0xf]
  %v56 = vld [vmem:[%s1 + $0x4c] sm:$0xf]
  %v57 = vld [vmem:[%s1 + $0x50] sm:$0xf]
  %v58 = vld [vmem:[%s1 + $0x54] sm:$0xf]
  %v59 = vld [vmem:[%s1 + $0x58] sm:$0xf]
  %v60 = vld [vmem:[%s1 + $0x5c] sm:$0xf]
  %v61 = vld [vmem:[%s1 + $0x60] sm:$0xf]
  %v62 = vld [vmem:[%s1 + $0x64] sm:$0xf]
  %v63 = vld [vmem:[%s1 + $0x68] sm:$0xf]
  %v64 = vld [vmem:[%s1 + $0x6c] sm:$0xf]
  %v65 = vld [vmem:[%s1 + $0x70] sm:$0xf]
  %v66 = vld [vmem:[%s1 + $0x74] sm:$0xf]
  %v67 = vld [vmem:[%s1 + $0x78] sm:$0xf]
  %v68 = vld [vmem:[%s1 + $0x7c] sm:$0xf]
  %v85 = vunpack.c.l.b16 %v21
  %v86 = vunpack.c.h.b16 %v21
  %v87 = vunpack.c.l.b16 %v22
  %v88 = vunpack.c.h.b16 %v22
  %v89 = vunpack.c.l.b16 %v23
  %v90 = vunpack.c.h.b16 %v23
  %v91 = vunpack.c.l.b16 %v24
  %v92 = vunpack.c.h.b16 %v24
  %v93 = vunpack.c.l.b16 %v25
  %v94 = vunpack.c.h.b16 %v25
  %v95 = vunpack.c.l.b16 %v26
  %v96 = vunpack.c.h.b16 %v26
  %v97 = vunpack.c.l.b16 %v27
  %v98 = vunpack.c.h.b16 %v27
  %v99 = vunpack.c.l.b16 %v28
  %v100 = vunpack.c.h.b16 %v28
  %v101 = vunpack.c.l.b16 %v29
  %v102 = vunpack.c.h.b16 %v29
  %v103 = vunpack.c.l.b16 %v30
  %v104 = vunpack.c.h.b16 %v30
  %v105 = vunpack.c.l.b16 %v31
  %v106 = vunpack.c.h.b16 %v31
  %v107 = vunpack.c.l.b16 %v32
  %v108 = vunpack.c.h.b16 %v32
  %v109 = vunpack.c.l.b16 %v33
  %v110 = vunpack.c.h.b16 %v33
  %v111 = vunpack.c.l.b16 %v34
  %v112 = vunpack.c.h.b16 %v34
  %v113 = vunpack.c.l.b16 %v35
  %v114 = vunpack.c.h.b16 %v35
  %v115 = vunpack.c.l.b16 %v36
  %v116 = vunpack.c.h.b16 %v36
  %v117 = vpack.c.b16 %v87, %v85
  %v118 = vpack.c.b16 %v88, %v86
  %v119 = vpack.c.b16 %v91, %v89
  %v120 = vpack.c.b16 %v92, %v90
  %v121 = vpack.c.b16 %v95, %v93
  %v122 = vpack.c.b16 %v96, %v94
  %v123 = vpack.c.b16 %v99, %v97
  %v124 = vpack.c.b16 %v100, %v98
  %v125 = vpack.c.b16 %v103, %v101
  %v126 = vpack.c.b16 %v104, %v102
  %v127 = vpack.c.b16 %v107, %v105
  %v128 = vpack.c.b16 %v108, %v106
  %v129 = vpack.c.b16 %v111, %v109
  %v130 = vpack.c.b16 %v112, %v110
  %v131 = vpack.c.b16 %v115, %v113
  %v132 = vpack.c.b16 %v116, %v114
  %v181 = vunpack.c.l.b16 %v37
  %v182 = vunpack.c.l.b16 %v38
  %v183 = vunpack.c.l.b16 %v39
  %v184 = vunpack.c.l.b16 %v40
  %v185 = vunpack.c.l.b16 %v41
  %v186 = vunpack.c.l.b16 %v42
  %v187 = vunpack.c.l.b16 %v43
  %v188 = vunpack.c.l.b16 %v44
  %v189 = vunpack.c.l.b16 %v45
  %v190 = vunpack.c.l.b16 %v46
  %v191 = vunpack.c.l.b16 %v47
  %v192 = vunpack.c.l.b16 %v48
  %v193 = vunpack.c.l.b16 %v49
  %v194 = vunpack.c.l.b16 %v50
  %v195 = vunpack.c.l.b16 %v51
  %v196 = vunpack.c.l.b16 %v52
  %v197 = vunpack.c.l.b16 %v53
  %v198 = vunpack.c.l.b16 %v54
  %v199 = vunpack.c.l.b16 %v55
  %v200 = vunpack.c.l.b16 %v56
  %v201 = vunpack.c.l.b16 %v57
  %v202 = vunpack.c.l.b16 %v58
  %v203 = vunpack.c.l.b16 %v59
  %v204 = vunpack.c.l.b16 %v60
  %v205 = vunpack.c.l.b16 %v61
  %v206 = vunpack.c.l.b16 %v62
  %v207 = vunpack.c.l.b16 %v63
  %v208 = vunpack.c.l.b16 %v64
  %v209 = vunpack.c.l.b16 %v65
  %v210 = vunpack.c.l.b16 %v66
  %v211 = vunpack.c.l.b16 %v67
  %v212 = vunpack.c.l.b16 %v68
  %v213 = vpack.c.b16 %v182, %v181
  %v214 = vpack.c.b16 %v184, %v183
  %v215 = vpack.c.b16 %v186, %v185
  %v216 = vpack.c.b16 %v188, %v187
  %v217 = vpack.c.b16 %v190, %v189
  %v218 = vpack.c.b16 %v192, %v191
  %v219 = vpack.c.b16 %v194, %v193
  %v220 = vpack.c.b16 %v196, %v195
  %v221 = vpack.c.b16 %v198, %v197
  %v222 = vpack.c.b16 %v200, %v199
  %v223 = vpack.c.b16 %v202, %v201
  %v224 = vpack.c.b16 %v204, %v203
  %v225 = vpack.c.b16 %v206, %v205
  %v226 = vpack.c.b16 %v208, %v207
  %v227 = vpack.c.b16 %v210, %v209
  %v228 = vpack.c.b16 %v212, %v211
  %245 = vmatprep.subr.bf16.mxu0 0
  %246 = vmatpush1.bf16.msra.mxu0 %v220
  %247 = vmatprep.subr.bf16.mxu0 0
  %248 = vmatpush1.bf16.msra.mxu0 %v219
  %249 = vmatprep.subr.bf16.mxu0 0
  %250 = vmatpush1.bf16.msra.mxu0 %v218
  %251 = vmatprep.subr.bf16.mxu0 0
  %252 = vmatpush1.bf16.msra.mxu0 %v217
  %253 = vmatprep.subr.bf16.mxu0 0
  %254 = vmatpush1.bf16.msra.mxu0 %v216
  %255 = vmatprep.subr.bf16.mxu0 0
  %256 = vmatpush1.bf16.msra.mxu0 %v215
  %257 = vmatprep.subr.bf16.mxu0 0
  %258 = vmatpush1.bf16.msra.mxu0 %v214
  %259 = vmatprep.subr.bf16.mxu0 0
  %260 = vmatpush1.bf16.msra.mxu0 %v213
  %261 = vmatprep.subr.bf16.mxu0 0
  %262 = vmatpush2.bf16.msra.mxu0 %v228
  %263 = vmatprep.subr.bf16.mxu0 0
  %264 = vmatpush2.bf16.msra.mxu0 %v227
  %265 = vmatprep.subr.bf16.mxu0 0
  %266 = vmatpush2.bf16.msra.mxu0 %v226
  %267 = vmatprep.subr.bf16.mxu0 0
  %268 = vmatpush2.bf16.msra.mxu0 %v225
  %269 = vmatprep.subr.bf16.mxu0 0
  %270 = vmatpush2.bf16.msra.mxu0 %v224
  %271 = vmatprep.subr.bf16.mxu0 0
  %272 = vmatpush2.bf16.msra.mxu0 %v223
  %273 = vmatprep.subr.bf16.mxu0 0
  %274 = vmatpush2.bf16.msra.mxu0 %v222
  %275 = vmatprep.subr.bf16.mxu0 0
  %276 = vmatpush2.bf16.msra.mxu0 %v221
  %277 = vmatprep.mubr.bf16.mxu0 %v118
  %278 = vmatmul.mubr.bf16.gmra.mxu0 %v117
  %v279 = vpop.f32.mrf.mxu0
  %v280 = vadd.f32 0.0, %v279
  %v281 = vpop.f32.mrf.mxu0
  %v282 = vpop.f32.mrf.mxu0
  %v283 = vadd.f32 0.0, %v282
  %v284 = vpop.f32.mrf.mxu0
  %285 = vmatprep.mubr.bf16.mxu0 %v120
  %286 = vmatmul.mubr.bf16.gmra.mxu0 %v119
  %v287 = vpop.f32.mrf.mxu0
  %v288 = vadd.f32 0.0, %v287
  %v289 = vpop.f32.mrf.mxu0
  %v290 = vpop.f32.mrf.mxu0
  %v291 = vadd.f32 0.0, %v290
  %v292 = vpop.f32.mrf.mxu0
  %293 = vmatprep.mubr.bf16.mxu0 %v122
  %294 = vmatmul.mubr.bf16.gmra.mxu0 %v121
  %v295 = vpop.f32.mrf.mxu0
  %v296 = vadd.f32 0.0, %v295
  %v297 = vpop.f32.mrf.mxu0
  %v298 = vpop.f32.mrf.mxu0
  %v299 = vadd.f32 0.0, %v298
  %v300 = vpop.f32.mrf.mxu0
  %301 = vmatprep.mubr.bf16.mxu0 %v124
  %302 = vmatmul.mubr.bf16.gmra.mxu0 %v123
  %v303 = vpop.f32.mrf.mxu0
  %v304 = vadd.f32 0.0, %v303
  %v305 = vpop.f32.mrf.mxu0
  %v306 = vpop.f32.mrf.mxu0
  %v307 = vadd.f32 0.0, %v306
  %v308 = vpop.f32.mrf.mxu0
  %309 = vmatprep.mubr.bf16.mxu0 %v126
  %310 = vmatmul.mubr.bf16.gmra.mxu0 %v125
  %v311 = vpop.f32.mrf.mxu0
  %v312 = vadd.f32 0.0, %v311
  %v313 = vpop.f32.mrf.mxu0
  %v314 = vpop.f32.mrf.mxu0
  %v315 = vadd.f32 0.0, %v314
  %v316 = vpop.f32.mrf.mxu0
  %317 = vmatprep.mubr.bf16.mxu0 %v128
  %318 = vmatmul.mubr.bf16.gmra.mxu0 %v127
  %v319 = vpop.f32.mrf.mxu0
  %v320 = vadd.f32 0.0, %v319
  %v321 = vpop.f32.mrf.mxu0
  %v322 = vpop.f32.mrf.mxu0
  %v323 = vadd.f32 0.0, %v322
  %v324 = vpop.f32.mrf.mxu0
  %325 = vmatprep.mubr.bf16.mxu0 %v130
  %326 = vmatmul.mubr.bf16.gmra.mxu0 %v129
  %v327 = vpop.f32.mrf.mxu0
  %v328 = vadd.f32 0.0, %v327
  %v329 = vpop.f32.mrf.mxu0
  %v330 = vpop.f32.mrf.mxu0
  %v331 = vadd.f32 0.0, %v330
  %v332 = vpop.f32.mrf.mxu0
  %333 = vmatprep.mubr.bf16.mxu0 %v132
  %334 = vmatmul.mubr.bf16.gmra.mxu0 %v131
  %v335 = vpop.f32.mrf.mxu0
  %v336 = vadd.f32 0.0, %v335
  %v337 = vpop.f32.mrf.mxu0
  %v338 = vpop.f32.mrf.mxu0
  %v339 = vadd.f32 0.0, %v338
  %v340 = vpop.f32.mrf.mxu0
  %341 = vdwg.mxu0
  %v342 = vld [vmem:[%s4] sm:$0xff]
  %v343 = vld [vmem:[%s4 + $0x8] sm:$0xff]
  %v344 = vld [vmem:[%s4 + $0x10] sm:$0xff]
  %v345 = vld [vmem:[%s4 + $0x18] sm:$0xff]
  %v346 = vld [vmem:[%s4 + $0x20] sm:$0xff]
  %v347 = vld [vmem:[%s4 + $0x28] sm:$0xff]
  %v348 = vld [vmem:[%s4 + $0x30] sm:$0xff]
  %v349 = vld [vmem:[%s4 + $0x38] sm:$0xff]
  %v350 = vld [vmem:[%s4 + $0x40] sm:$0xff]
  %v351 = vld [vmem:[%s4 + $0x48] sm:$0xff]
  %v352 = vld [vmem:[%s4 + $0x50] sm:$0xff]
  %v353 = vld [vmem:[%s4 + $0x58] sm:$0xff]
  %v354 = vld [vmem:[%s4 + $0x60] sm:$0xff]
  %v355 = vld [vmem:[%s4 + $0x68] sm:$0xff]
  %v356 = vld [vmem:[%s4 + $0x70] sm:$0xff]
  %v357 = vld [vmem:[%s4 + $0x78] sm:$0xff]
  %358 = vmatprep.subr.mxu0 0.0
  %359 = vmatpush1.msra.mxu0 %v357
  %360 = vmatprep.subr.mxu0 0.0
  %361 = vmatpush1.msra.mxu0 %v356
  %362 = vmatprep.subr.mxu0 0.0
  %363 = vmatpush1.msra.mxu0 %v355
  %364 = vmatprep.subr.mxu0 0.0
  %365 = vmatpush1.msra.mxu0 %v354
  %366 = vmatprep.subr.mxu0 0.0
  %367 = vmatpush1.msra.mxu0 %v353
  %368 = vmatprep.subr.mxu0 0.0
  %369 = vmatpush1.msra.mxu0 %v352
  %370 = vmatprep.subr.mxu0 0.0
  %371 = vmatpush1.msra.mxu0 %v351
  %372 = vmatprep.subr.mxu0 0.0
  %373 = vmatpush1.msra.mxu0 %v350
  %374 = vmatprep.subr.mxu0 0.0
  %375 = vmatpush1.msra.mxu0 %v349
  %376 = vmatprep.subr.mxu0 0.0
  %377 = vmatpush1.msra.mxu0 %v348
  %378 = vmatprep.subr.mxu0 0.0
  %379 = vmatpush1.msra.mxu0 %v347
  %380 = vmatprep.subr.mxu0 0.0
  %381 = vmatpush1.msra.mxu0 %v346
  %382 = vmatprep.subr.mxu0 0.0
  %383 = vmatpush1.msra.mxu0 %v345
  %384 = vmatprep.subr.mxu0 0.0
  %385 = vmatpush1.msra.mxu0 %v344
  %386 = vmatprep.subr.mxu0 0.0
  %387 = vmatpush1.msra.mxu0 %v343
  %388 = vmatprep.subr.mxu0 0.0
  %389 = vmatpush1.msra.mxu0 %v342
  %390 = vmatprep.subr.mxu0 0.0
  %391 = vmatpush2.msra.mxu0 0.0
  %392 = vmatprep.subr.mxu0 0.0
  %393 = vmatpush2.msra.mxu0 0.0
  %394 = vmatprep.subr.mxu0 0.0
  %395 = vmatpush2.msra.mxu0 0.0
  %396 = vmatprep.subr.mxu0 0.0
  %397 = vmatpush2.msra.mxu0 0.0
  %398 = vmatprep.subr.mxu0 0.0
  %399 = vmatpush2.msra.mxu0 0.0
  %400 = vmatprep.subr.mxu0 0.0
  %401 = vmatpush2.msra.mxu0 0.0
  %402 = vmatprep.subr.mxu0 0.0
  %403 = vmatpush2.msra.mxu0 0.0
  %404 = vmatprep.subr.mxu0 0.0
  %405 = vmatpush2.msra.mxu0 0.0
  %406 = vmatprep.subr.mxu0 0.0
  %407 = vmatpush2.msra.mxu0 0.0
  %408 = vmatprep.subr.mxu0 0.0
  %409 = vmatpush2.msra.mxu0 0.0
  %410 = vmatprep.subr.mxu0 0.0
  %411 = vmatpush2.msra.mxu0 0.0
  %412 = vmatprep.subr.mxu0 0.0
  %413 = vmatpush2.msra.mxu0 0.0
  %414 = vmatprep.subr.mxu0 0.0
  %415 = vmatpush2.msra.mxu0 0.0
  %416 = vmatprep.subr.mxu0 0.0
  %417 = vmatpush2.msra.mxu0 0.0
  %418 = vmatprep.subr.mxu0 0.0
  %419 = vmatpush2.msra.mxu0 0.0
  %420 = vmatprep.subr.mxu0 0.0
  %421 = vmatpush2.msra.mxu0 0.0
  %422 = vmatprep.mubr.f32.mxu0 0.0
  %423 = vmatmul.mubr.f32.gmra.mxu0 %v280
  %v424 = vpop.f32.mrf.mxu0
  %v425 = vadd.f32 0.0, %v424
  %v426 = vpop.f32.mrf.mxu0
  %427 = vmatprep.mubr.f32.mxu0 0.0
  %428 = vmatmul.mubr.f32.gmra.mxu0 %v283
  %v429 = vpop.f32.mrf.mxu0
  %v430 = vadd.f32 0.0, %v429
  %v431 = vpop.f32.mrf.mxu0
  %432 = vmatprep.mubr.f32.mxu0 0.0
  %433 = vmatmul.mubr.f32.gmra.mxu0 %v288
  %v434 = vpop.f32.mrf.mxu0
  %v435 = vadd.f32 0.0, %v434
  %v436 = vpop.f32.mrf.mxu0
  %437 = vmatprep.mubr.f32.mxu0 0.0
  %438 = vmatmul.mubr.f32.gmra.mxu0 %v291
  %v439 = vpop.f32.mrf.mxu0
  %v440 = vadd.f32 0.0, %v439
  %v441 = vpop.f32.mrf.mxu0
  %442 = vmatprep.mubr.f32.mxu0 0.0
  %443 = vmatmul.mubr.f32.gmra.mxu0 %v296
  %v444 = vpop.f32.mrf.mxu0
  %v445 = vadd.f32 0.0, %v444
  %v446 = vpop.f32.mrf.mxu0
  %447 = vmatprep.mubr.f32.mxu0 0.0
  %448 = vmatmul.mubr.f32.gmra.mxu0 %v299
  %v449 = vpop.f32.mrf.mxu0
  %v450 = vadd.f32 0.0, %v449
  %v451 = vpop.f32.mrf.mxu0
  %452 = vmatprep.mubr.f32.mxu0 0.0
  %453 = vmatmul.mubr.f32.gmra.mxu0 %v304
  %v454 = vpop.f32.mrf.mxu0
  %v455 = vadd.f32 0.0, %v454
  %v456 = vpop.f32.mrf.mxu0
  %457 = vmatprep.mubr.f32.mxu0 0.0
  %458 = vmatmul.mubr.f32.gmra.mxu0 %v307
  %v459 = vpop.f32.mrf.mxu0
  %v460 = vadd.f32 0.0, %v459
  %v461 = vpop.f32.mrf.mxu0
  %462 = vmatprep.mubr.f32.mxu0 0.0
  %463 = vmatmul.mubr.f32.gmra.mxu0 %v312
  %v464 = vpop.f32.mrf.mxu0
  %v465 = vadd.f32 0.0, %v464
  %v466 = vpop.f32.mrf.mxu0
  %467 = vmatprep.mubr.f32.mxu0 0.0
  %468 = vmatmul.mubr.f32.gmra.mxu0 %v315
  %v469 = vpop.f32.mrf.mxu0
  %v470 = vadd.f32 0.0, %v469
  %v471 = vpop.f32.mrf.mxu0
  %472 = vmatprep.mubr.f32.mxu0 0.0
  %473 = vmatmul.mubr.f32.gmra.mxu0 %v320
  %v474 = vpop.f32.mrf.mxu0
  %v475 = vadd.f32 0.0, %v474
  %v476 = vpop.f32.mrf.mxu0
  %477 = vmatprep.mubr.f32.mxu0 0.0
  %478 = vmatmul.mubr.f32.gmra.mxu0 %v323
  %v479 = vpop.f32.mrf.mxu0
  %v480 = vadd.f32 0.0, %v479
  %v481 = vpop.f32.mrf.mxu0
  %482 = vmatprep.mubr.f32.mxu0 0.0
  %483 = vmatmul.mubr.f32.gmra.mxu0 %v328
  %v484 = vpop.f32.mrf.mxu0
  %v485 = vadd.f32 0.0, %v484
  %v486 = vpop.f32.mrf.mxu0
  %487 = vmatprep.mubr.f32.mxu0 0.0
  %488 = vmatmul.mubr.f32.gmra.mxu0 %v331
  %v489 = vpop.f32.mrf.mxu0
  %v490 = vadd.f32 0.0, %v489
  %v491 = vpop.f32.mrf.mxu0
  %492 = vmatprep.mubr.f32.mxu0 0.0
  %493 = vmatmul.mubr.f32.gmra.mxu0 %v336
  %v494 = vpop.f32.mrf.mxu0
  %v495 = vadd.f32 0.0, %v494
  %v496 = vpop.f32.mrf.mxu0
  %497 = vmatprep.mubr.f32.mxu0 0.0
  %498 = vmatmul.mubr.f32.gmra.mxu0 %v339
  %v499 = vpop.f32.mrf.mxu0
  %v500 = vadd.f32 0.0, %v499
  %v501 = vpop.f32.mrf.mxu0
  %502 = vdwg.mxu0
  %v503 = vadd.f32 %v425, %v430
  %v504 = vadd.f32 %v503, %v435
  %v505 = vadd.f32 %v504, %v440
  %v506 = vadd.f32 %v505, %v445
  %v507 = vadd.f32 %v506, %v450
  %v508 = vadd.f32 %v507, %v455
  %v509 = vadd.f32 %v508, %v460
  %v510 = vadd.f32 %v509, %v465
  %v511 = vadd.f32 %v510, %v470
  %v512 = vadd.f32 %v511, %v475
  %v513 = vadd.f32 %v512, %v480
  %v514 = vadd.f32 %v513, %v485
  %v515 = vadd.f32 %v514, %v490
  %v516 = vadd.f32 %v515, %v495
  %v517 = vadd.f32 %v516, %v500
  %v518 = vrot.slane %v517, 4
  %v519 = vadd.f32 %v517, %v518
  %v520 = vrot.slane %v519, 2
  %v521 = vadd.f32 %v519, %v520
  %v522 = vrot.slane %v521, 1
  %v523 = vadd.f32 %v521, %v522
  %v524 = vrcp.pop 512.0
  %v525 = vmul.f32 %v523, %v524
  %v526 = vsub.f32 %v280, %v525
  %v527 = vsub.f32 %v283, %v525
  %v528 = vsub.f32 %v288, %v525
  %v529 = vsub.f32 %v291, %v525
  %v530 = vsub.f32 %v296, %v525
  %v531 = vsub.f32 %v299, %v525
  %v532 = vsub.f32 %v304, %v525
  %v533 = vsub.f32 %v307, %v525
  %v534 = vsub.f32 %v312, %v525
  %v535 = vsub.f32 %v315, %v525
  %v536 = vsub.f32 %v320, %v525
  %v537 = vsub.f32 %v323, %v525
  %v538 = vsub.f32 %v328, %v525
  %v539 = vsub.f32 %v331, %v525
  %v540 = vsub.f32 %v336, %v525
  %v541 = vsub.f32 %v339, %v525
  %v542 = vmul.f32 %v526, %v526
  %v543 = vmul.f32 %v527, %v527
  %v544 = vmul.f32 %v528, %v528
  %v545 = vmul.f32 %v529, %v529
  %v546 = vmul.f32 %v530, %v530
  %v547 = vmul.f32 %v531, %v531
  %v548 = vmul.f32 %v532, %v532
  %v549 = vmul.f32 %v533, %v533
  %v550 = vmul.f32 %v534, %v534
  %v551 = vmul.f32 %v535, %v535
  %v552 = vmul.f32 %v536, %v536
  %v553 = vmul.f32 %v537, %v537
  %v554 = vmul.f32 %v538, %v538
  %v555 = vmul.f32 %v539, %v539
  %v556 = vmul.f32 %v540, %v540
  %v557 = vmul.f32 %v541, %v541
  %558 = vmatprep.subr.mxu0 0.0
  %559 = vmatpush1.msra.mxu0 %v357
  %560 = vmatprep.subr.mxu0 0.0
  %561 = vmatpush1.msra.mxu0 %v356
  %562 = vmatprep.subr.mxu0 0.0
  %563 = vmatpush1.msra.mxu0 %v355
  %564 = vmatprep.subr.mxu0 0.0
  %565 = vmatpush1.msra.mxu0 %v354
  %566 = vmatprep.subr.mxu0 0.0
  %567 = vmatpush1.msra.mxu0 %v353
  %568 = vmatprep.subr.mxu0 0.0
  %569 = vmatpush1.msra.mxu0 %v352
  %570 = vmatprep.subr.mxu0 0.0
  %571 = vmatpush1.msra.mxu0 %v351
  %572 = vmatprep.subr.mxu0 0.0
  %573 = vmatpush1.msra.mxu0 %v350
  %574 = vmatprep.subr.mxu0 0.0
  %575 = vmatpush1.msra.mxu0 %v349
  %576 = vmatprep.subr.mxu0 0.0
  %577 = vmatpush1.msra.mxu0 %v348
  %578 = vmatprep.subr.mxu0 0.0
  %579 = vmatpush1.msra.mxu0 %v347
  %580 = vmatprep.subr.mxu0 0.0
  %581 = vmatpush1.msra.mxu0 %v346
  %582 = vmatprep.subr.mxu0 0.0
  %583 = vmatpush1.msra.mxu0 %v345
  %584 = vmatprep.subr.mxu0 0.0
  %585 = vmatpush1.msra.mxu0 %v344
  %586 = vmatprep.subr.mxu0 0.0
  %587 = vmatpush1.msra.mxu0 %v343
  %588 = vmatprep.subr.mxu0 0.0
  %589 = vmatpush1.msra.mxu0 %v342
  %590 = vmatprep.subr.mxu0 0.0
  %591 = vmatpush2.msra.mxu0 0.0
  %592 = vmatprep.subr.mxu0 0.0
  %593 = vmatpush2.msra.mxu0 0.0
  %594 = vmatprep.subr.mxu0 0.0
  %595 = vmatpush2.msra.mxu0 0.0
  %596 = vmatprep.subr.mxu0 0.0
  %597 = vmatpush2.msra.mxu0 0.0
  %598 = vmatprep.subr.mxu0 0.0
  %599 = vmatpush2.msra.mxu0 0.0
  %600 = vmatprep.subr.mxu0 0.0
  %601 = vmatpush2.msra.mxu0 0.0
  %602 = vmatprep.subr.mxu0 0.0
  %603 = vmatpush2.msra.mxu0 0.0
  %604 = vmatprep.subr.mxu0 0.0
  %605 = vmatpush2.msra.mxu0 0.0
  %606 = vmatprep.subr.mxu0 0.0
  %607 = vmatpush2.msra.mxu0 0.0
  %608 = vmatprep.subr.mxu0 0.0
  %609 = vmatpush2.msra.mxu0 0.0
  %610 = vmatprep.subr.mxu0 0.0
  %611 = vmatpush2.msra.mxu0 0.0
  %612 = vmatprep.subr.mxu0 0.0
  %613 = vmatpush2.msra.mxu0 0.0
  %614 = vmatprep.subr.mxu0 0.0
  %615 = vmatpush2.msra.mxu0 0.0
  %616 = vmatprep.subr.mxu0 0.0
  %617 = vmatpush2.msra.mxu0 0.0
  %618 = vmatprep.subr.mxu0 0.0
  %619 = vmatpush2.msra.mxu0 0.0
  %620 = vmatprep.subr.mxu0 0.0
  %621 = vmatpush2.msra.mxu0 0.0
  %622 = vmatprep.mubr.f32.mxu0 0.0
  %623 = vmatmul.mubr.f32.gmra.mxu0 %v542
  %v624 = vpop.f32.mrf.mxu0
  %v625 = vadd.f32 0.0, %v624
  %v626 = vpop.f32.mrf.mxu0
  %627 = vmatprep.mubr.f32.mxu0 0.0
  %628 = vmatmul.mubr.f32.gmra.mxu0 %v543
  %v629 = vpop.f32.mrf.mxu0
  %v630 = vadd.f32 0.0, %v629
  %v631 = vpop.f32.mrf.mxu0
  %632 = vmatprep.mubr.f32.mxu0 0.0
  %633 = vmatmul.mubr.f32.gmra.mxu0 %v544
  %v634 = vpop.f32.mrf.mxu0
  %v635 = vadd.f32 0.0, %v634
  %v636 = vpop.f32.mrf.mxu0
  %637 = vmatprep.mubr.f32.mxu0 0.0
  %638 = vmatmul.mubr.f32.gmra.mxu0 %v545
  %v639 = vpop.f32.mrf.mxu0
  %v640 = vadd.f32 0.0, %v639
  %v641 = vpop.f32.mrf.mxu0
  %642 = vmatprep.mubr.f32.mxu0 0.0
  %643 = vmatmul.mubr.f32.gmra.mxu0 %v546
  %v644 = vpop.f32.mrf.mxu0
  %v645 = vadd.f32 0.0, %v644
  %v646 = vpop.f32.mrf.mxu0
  %647 = vmatprep.mubr.f32.mxu0 0.0
  %648 = vmatmul.mubr.f32.gmra.mxu0 %v547
  %v649 = vpop.f32.mrf.mxu0
  %v650 = vadd.f32 0.0, %v649
  %v651 = vpop.f32.mrf.mxu0
  %652 = vmatprep.mubr.f32.mxu0 0.0
  %653 = vmatmul.mubr.f32.gmra.mxu0 %v548
  %v654 = vpop.f32.mrf.mxu0
  %v655 = vadd.f32 0.0, %v654
  %v656 = vpop.f32.mrf.mxu0
  %657 = vmatprep.mubr.f32.mxu0 0.0
  %658 = vmatmul.mubr.f32.gmra.mxu0 %v549
  %v659 = vpop.f32.mrf.mxu0
  %v660 = vadd.f32 0.0, %v659
  %v661 = vpop.f32.mrf.mxu0
  %662 = vmatprep.mubr.f32.mxu0 0.0
  %663 = vmatmul.mubr.f32.gmra.mxu0 %v550
  %v664 = vpop.f32.mrf.mxu0
  %v665 = vadd.f32 0.0, %v664
  %v666 = vpop.f32.mrf.mxu0
  %667 = vmatprep.mubr.f32.mxu0 0.0
  %668 = vmatmul.mubr.f32.gmra.mxu0 %v551
  %v669 = vpop.f32.mrf.mxu0
  %v670 = vadd.f32 0.0, %v669
  %v671 = vpop.f32.mrf.mxu0
  %672 = vmatprep.mubr.f32.mxu0 0.0
  %673 = vmatmul.mubr.f32.gmra.mxu0 %v552
  %v674 = vpop.f32.mrf.mxu0
  %v675 = vadd.f32 0.0, %v674
  %v676 = vpop.f32.mrf.mxu0
  %677 = vmatprep.mubr.f32.mxu0 0.0
  %678 = vmatmul.mubr.f32.gmra.mxu0 %v553
  %v679 = vpop.f32.mrf.mxu0
  %v680 = vadd.f32 0.0, %v679
  %v681 = vpop.f32.mrf.mxu0
  %682 = vmatprep.mubr.f32.mxu0 0.0
  %683 = vmatmul.mubr.f32.gmra.mxu0 %v554
  %v684 = vpop.f32.mrf.mxu0
  %v685 = vadd.f32 0.0, %v684
  %v686 = vpop.f32.mrf.mxu0
  %687 = vmatprep.mubr.f32.mxu0 0.0
  %688 = vmatmul.mubr.f32.gmra.mxu0 %v555
  %v689 = vpop.f32.mrf.mxu0
  %v690 = vadd.f32 0.0, %v689
  %v691 = vpop.f32.mrf.mxu0
  %692 = vmatprep.mubr.f32.mxu0 0.0
  %693 = vmatmul.mubr.f32.gmra.mxu0 %v556
  %v694 = vpop.f32.mrf.mxu0
  %v695 = vadd.f32 0.0, %v694
  %v696 = vpop.f32.mrf.mxu0
  %697 = vmatprep.mubr.f32.mxu0 0.0
  %698 = vmatmul.mubr.f32.gmra.mxu0 %v557
  %v699 = vpop.f32.mrf.mxu0
  %v700 = vadd.f32 0.0, %v699
  %v701 = vpop.f32.mrf.mxu0
  %702 = vdwg.mxu0
  %v703 = vadd.f32 %v625, %v630
  %v704 = vadd.f32 %v703, %v635
  %v705 = vadd.f32 %v704, %v640
  %v706 = vadd.f32 %v705, %v645
  %v707 = vadd.f32 %v706, %v650
  %v708 = vadd.f32 %v707, %v655
  %v709 = vadd.f32 %v708, %v660
  %v710 = vadd.f32 %v709, %v665
  %v711 = vadd.f32 %v710, %v670
  %v712 = vadd.f32 %v711, %v675
  %v713 = vadd.f32 %v712, %v680
  %v714 = vadd.f32 %v713, %v685
  %v715 = vadd.f32 %v714, %v690
  %v716 = vadd.f32 %v715, %v695
  %v717 = vadd.f32 %v716, %v700
  %v718 = vrot.slane %v717, 4
  %v719 = vadd.f32 %v717, %v718
  %v720 = vrot.slane %v719, 2
  %v721 = vadd.f32 %v719, %v720
  %v722 = vrot.slane %v721, 1
  %v723 = vadd.f32 %v721, %v722
  %v724 = vmul.f32 %v723, %v524
  %v725 = vadd.f32 %v724, 1e-05
  %v726 = vrsqrt.pop %v725
  %v727 = vmul.f32 %v526, %v726
  %v728 = vmul.f32 %v527, %v726
  %v729 = vmul.f32 %v528, %v726
  %v730 = vmul.f32 %v529, %v726
  %v731 = vmul.f32 %v530, %v726
  %v732 = vmul.f32 %v531, %v726
  %v733 = vmul.f32 %v532, %v726
  %v734 = vmul.f32 %v533, %v726
  %v735 = vmul.f32 %v534, %v726
  %v736 = vmul.f32 %v535, %v726
  %v737 = vmul.f32 %v536, %v726
  %v738 = vmul.f32 %v537, %v726
  %v739 = vmul.f32 %v538, %v726
  %v740 = vmul.f32 %v539, %v726
  %v741 = vmul.f32 %v540, %v726
  %v742 = vmul.f32 %v541, %v726
  %v743 = vld [vmem:[%s2] sm:$0x1]
  %v745 = vlaneseq
  %v746 = vshrl.u32 %v745, 7
  %v747 = vsub.s32 0, %v746
  %v748 = vrot.slane %v743, %v747
  %v750 = vmul.f32 %v727, %v748
  %v751 = vmul.f32 %v728, %v748
  %v752 = vmul.f32 %v729, %v748
  %v753 = vmul.f32 %v730, %v748
  %v754 = vmul.f32 %v731, %v748
  %v755 = vmul.f32 %v732, %v748
  %v756 = vmul.f32 %v733, %v748
  %v757 = vmul.f32 %v734, %v748
  %v758 = vmul.f32 %v735, %v748
  %v759 = vmul.f32 %v736, %v748
  %v760 = vmul.f32 %v737, %v748
  %v761 = vmul.f32 %v738, %v748
  %v762 = vmul.f32 %v739, %v748
  %v763 = vmul.f32 %v740, %v748
  %v764 = vmul.f32 %v741, %v748
  %v765 = vmul.f32 %v742, %v748
  %v766 = vld [vmem:[%s3] sm:$0x1]
  %v768 = vlaneseq
  %v769 = vshrl.u32 %v768, 7
  %v770 = vsub.s32 0, %v769
  %v771 = vrot.slane %v766, %v770
  %v773 = vadd.f32 %v750, %v771
  %v774 = vadd.f32 %v751, %v771
  %v775 = vadd.f32 %v752, %v771
  %v776 = vadd.f32 %v753, %v771
  %v777 = vadd.f32 %v754, %v771
  %v778 = vadd.f32 %v755, %v771
  %v779 = vadd.f32 %v756, %v771
  %v780 = vadd.f32 %v757, %v771
  %v781 = vadd.f32 %v758, %v771
  %v782 = vadd.f32 %v759, %v771
  %v783 = vadd.f32 %v760, %v771
  %v784 = vadd.f32 %v761, %v771
  %v785 = vadd.f32 %v762, %v771
  %v786 = vadd.f32 %v763, %v771
  %v787 = vadd.f32 %v764, %v771
  %v788 = vadd.f32 %v765, %v771
  %v789 = vmax.f32 %v773, 0.0
  %v790 = vmax.f32 %v774, 0.0
  %v791 = vmax.f32 %v775, 0.0
  %v792 = vmax.f32 %v776, 0.0
  %v793 = vmax.f32 %v777, 0.0
  %v794 = vmax.f32 %v778, 0.0
  %v795 = vmax.f32 %v779, 0.0
  %v796 = vmax.f32 %v780, 0.0
  %v797 = vmax.f32 %v781, 0.0
  %v798 = vmax.f32 %v782, 0.0
  %v799 = vmax.f32 %v783, 0.0
  %v800 = vmax.f32 %v784, 0.0
  %v801 = vmax.f32 %v785, 0.0
  %v802 = vmax.f32 %v786, 0.0
  %v803 = vmax.f32 %v787, 0.0
  %v804 = vmax.f32 %v788, 0.0
  %805 = vst [vmem:[%s5] sm:$0xff] %v789
  %806 = vst [vmem:[%s5 + $0x8] sm:$0xff] %v790
  %807 = vst [vmem:[%s5 + $0x10] sm:$0xff] %v791
  %808 = vst [vmem:[%s5 + $0x18] sm:$0xff] %v792
  %809 = vst [vmem:[%s5 + $0x20] sm:$0xff] %v793
  %810 = vst [vmem:[%s5 + $0x28] sm:$0xff] %v794
  %811 = vst [vmem:[%s5 + $0x30] sm:$0xff] %v795
  %812 = vst [vmem:[%s5 + $0x38] sm:$0xff] %v796
  %813 = vst [vmem:[%s5 + $0x40] sm:$0xff] %v797
  %814 = vst [vmem:[%s5 + $0x48] sm:$0xff] %v798
  %815 = vst [vmem:[%s5 + $0x50] sm:$0xff] %v799
  %816 = vst [vmem:[%s5 + $0x58] sm:$0xff] %v800
  %817 = vst [vmem:[%s5 + $0x60] sm:$0xff] %v801
  %818 = vst [vmem:[%s5 + $0x68] sm:$0xff] %v802
  %819 = vst [vmem:[%s5 + $0x70] sm:$0xff] %v803
  %820 = vst [vmem:[%s5 + $0x78] sm:$0xff] %v804
  // Predicated region
  $region22: #{cycle_generator_forward.18} parent=0 // pred_check
    _
  $region23: #{cycle_generator_forward.18} parent=0 // pred_check_branch
    %822 = sbr.rel (0) target = $region25
  $region24: #{cycle_generator_forward.18} parent=0 // pred_region
    _
  $region25: #{cycle_generator_forward.18} parent=0 // pred_fallthru
    _
  // Predicated region
  $region26: #{cycle_generator_forward.18} parent=0 // pred_check
    _
  $region27: #{cycle_generator_forward.18} parent=0 // pred_check_branch
    %824 = sbr.rel (0) target = $region29
  $region28: #{cycle_generator_forward.18} parent=0 // pred_region
    _
  $region29: #{cycle_generator_forward.18} parent=0 // pred_fallthru
    _

// kernel: cycle_generator_forward.19
$region0: #{cycle_generator_forward.19}
  #allocation0 [shape = 'u32[]', space=smem, size = 0x4, offset = 0x4, fixed_abs, tag = 'smem constant byte address 0x4 - core index']
  #allocation1 [shape = 'u32[144,128]{1,0:T(1,128)}', space=vmem, size = 0x12000, scoped, tag = 'internal scratch']
  %s0 = inlined_call_operand.vmem [shape: bf16[512,512], index: 0, kind: input, shape index: {}]
  %s1 = inlined_call_operand.vmem [shape: bf16[512,128], index: 1, kind: input, shape index: {}]
  %s2 = inlined_call_operand.vmem [shape: f32[512,128], index: 2, kind: output, shape index: {}]
  %s3 = sld [smem:[#allocation0]]
  $region18: #{cycle_generator_forward.19} parent=0
    _
  %s5 = ssub.s32 1, %s3
  %s6 = scalar_select 0, %s5, %s3
  // Predicated region
  $region2: #{cycle_generator_forward.19} parent=0 // pred_check
    _
  $region3: #{cycle_generator_forward.19} parent=0 // pred_check_branch
    %8 = sbr.rel (0) target = $region5
  $region4: #{cycle_generator_forward.19} parent=0 // pred_region
    _
  $region5: #{cycle_generator_forward.19} parent=0 // pred_fallthru
    _
  // Predicated region
  $region6: #{cycle_generator_forward.19} parent=0 // pred_check
    _
  $region7: #{cycle_generator_forward.19} parent=0 // pred_check_branch
    %10 = sbr.rel (0) target = $region9
  $region8: #{cycle_generator_forward.19} parent=0 // pred_region
    _
  $region9: #{cycle_generator_forward.19} parent=0 // pred_fallthru
    _
  %v12 = vld [vmem:[%s0] sm:$0xff]
  %v13 = vld [vmem:[%s0 + $0x8] sm:$0xff]
  %v14 = vld [vmem:[%s0 + $0x10] sm:$0xff]
  %v15 = vld [vmem:[%s0 + $0x18] sm:$0xff]
  %v16 = vld [vmem:[%s0 + $0x20] sm:$0xff]
  %v17 = vld [vmem:[%s0 + $0x28] sm:$0xff]
  %v18 = vld [vmem:[%s0 + $0x30] sm:$0xff]
  %v19 = vld [vmem:[%s0 + $0x38] sm:$0xff]
  %v20 = vld [vmem:[%s0 + $0x40] sm:$0xff]
  %v21 = vld [vmem:[%s0 + $0x48] sm:$0xff]
  %v22 = vld [vmem:[%s0 + $0x50] sm:$0xff]
  %v23 = vld [vmem:[%s0 + $0x58] sm:$0xff]
  %v24 = vld [vmem:[%s0 + $0x60] sm:$0xff]
  %v25 = vld [vmem:[%s0 + $0x68] sm:$0xff]
  %v26 = vld [vmem:[%s0 + $0x70] sm:$0xff]
  %v27 = vld [vmem:[%s0 + $0x78] sm:$0xff]
  %v28 = vld [vmem:[%s0 + $0x80] sm:$0xff]
  %v29 = vld [vmem:[%s0 + $0x88] sm:$0xff]
  %v30 = vld [vmem:[%s0 + $0x90] sm:$0xff]
  %v31 = vld [vmem:[%s0 + $0x98] sm:$0xff]
  %v32 = vld [vmem:[%s0 + $0xa0] sm:$0xff]
  %v33 = vld [vmem:[%s0 + $0xa8] sm:$0xff]
  %v34 = vld [vmem:[%s0 + $0xb0] sm:$0xff]
  %v35 = vld [vmem:[%s0 + $0xb8] sm:$0xff]
  %v36 = vld [vmem:[%s0 + $0xc0] sm:$0xff]
  %v37 = vld [vmem:[%s0 + $0xc8] sm:$0xff]
  %v38 = vld [vmem:[%s0 + $0xd0] sm:$0xff]
  %v39 = vld [vmem:[%s0 + $0xd8] sm:$0xff]
  %v40 = vld [vmem:[%s0 + $0xe0] sm:$0xff]
  %v41 = vld [vmem:[%s0 + $0xe8] sm:$0xff]
  %v42 = vld [vmem:[%s0 + $0xf0] sm:$0xff]
  %v43 = vld [vmem:[%s0 + $0xf8] sm:$0xff]
  %v44 = vld [vmem:[%s0 + $0x100] sm:$0xff]
  %v45 = vld [vmem:[%s0 + $0x108] sm:$0xff]
  %v46 = vld [vmem:[%s0 + $0x110] sm:$0xff]
  %v47 = vld [vmem:[%s0 + $0x118] sm:$0xff]
  %v48 = vld [vmem:[%s0 + $0x120] sm:$0xff]
  %v49 = vld [vmem:[%s0 + $0x128] sm:$0xff]
  %v50 = vld [vmem:[%s0 + $0x130] sm:$0xff]
  %v51 = vld [vmem:[%s0 + $0x138] sm:$0xff]
  %v52 = vld [vmem:[%s0 + $0x140] sm:$0xff]
  %v53 = vld [vmem:[%s0 + $0x148] sm:$0xff]
  %v54 = vld [vmem:[%s0 + $0x150] sm:$0xff]
  %v55 = vld [vmem:[%s0 + $0x158] sm:$0xff]
  %v56 = vld [vmem:[%s0 + $0x160] sm:$0xff]
  %v57 = vld [vmem:[%s0 + $0x168] sm:$0xff]
  %v58 = vld [vmem:[%s0 + $0x170] sm:$0xff]
  %v59 = vld [vmem:[%s0 + $0x178] sm:$0xff]
  %v60 = vld [vmem:[%s0 + $0x180] sm:$0xff]
  %v61 = vld [vmem:[%s0 + $0x188] sm:$0xff]
  %v62 = vld [vmem:[%s0 + $0x190] sm:$0xff]
  %v63 = vld [vmem:[%s0 + $0x198] sm:$0xff]
  %v64 = vld [vmem:[%s0 + $0x1a0] sm:$0xff]
  %v65 = vld [vmem:[%s0 + $0x1a8] sm:$0xff]
  %v66 = vld [vmem:[%s0 + $0x1b0] sm:$0xff]
  %v67 = vld [vmem:[%s0 + $0x1b8] sm:$0xff]
  %v68 = vld [vmem:[%s0 + $0x1c0] sm:$0xff]
  %v69 = vld [vmem:[%s0 + $0x1c8] sm:$0xff]
  %v70 = vld [vmem:[%s0 + $0x1d0] sm:$0xff]
  %v71 = vld [vmem:[%s0 + $0x1d8] sm:$0xff]
  %v72 = vld [vmem:[%s0 + $0x1e0] sm:$0xff]
  %v73 = vld [vmem:[%s0 + $0x1e8] sm:$0xff]
  %v74 = vld [vmem:[%s0 + $0x1f0] sm:$0xff]
  %v75 = vld [vmem:[%s0 + $0x1f8] sm:$0xff]
  %v76 = vld [vmem:[%s0 + $0x200] sm:$0xff]
  %v77 = vld [vmem:[%s0 + $0x208] sm:$0xff]
  %v78 = vld [vmem:[%s0 + $0x210] sm:$0xff]
  %v79 = vld [vmem:[%s0 + $0x218] sm:$0xff]
  %v80 = vld [vmem:[%s0 + $0x220] sm:$0xff]
  %v81 = vld [vmem:[%s0 + $0x228] sm:$0xff]
  %v82 = vld [vmem:[%s0 + $0x230] sm:$0xff]
  %v83 = vld [vmem:[%s0 + $0x238] sm:$0xff]
  %v84 = vld [vmem:[%s0 + $0x240] sm:$0xff]
  %v85 = vld [vmem:[%s0 + $0x248] sm:$0xff]
  %v86 = vld [vmem:[%s0 + $0x250] sm:$0xff]
  %v87 = vld [vmem:[%s0 + $0x258] sm:$0xff]
  %v88 = vld [vmem:[%s0 + $0x260] sm:$0xff]
  %v89 = vld [vmem:[%s0 + $0x268] sm:$0xff]
  %v90 = vld [vmem:[%s0 + $0x270] sm:$0xff]
  %v91 = vld [vmem:[%s0 + $0x278] sm:$0xff]
  %v92 = vld [vmem:[%s0 + $0x280] sm:$0xff]
  %v93 = vld [vmem:[%s0 + $0x288] sm:$0xff]
  %v94 = vld [vmem:[%s0 + $0x290] sm:$0xff]
  %v95 = vld [vmem:[%s0 + $0x298] sm:$0xff]
  %v96 = vld [vmem:[%s0 + $0x2a0] sm:$0xff]
  %v97 = vld [vmem:[%s0 + $0x2a8] sm:$0xff]
  %v98 = vld [vmem:[%s0 + $0x2b0] sm:$0xff]
  %v99 = vld [vmem:[%s0 + $0x2b8] sm:$0xff]
  %v100 = vld [vmem:[%s0 + $0x2c0] sm:$0xff]
  %v101 = vld [vmem:[%s0 + $0x2c8] sm:$0xff]
  %v102 = vld [vmem:[%s0 + $0x2d0] sm:$0xff]
  %v103 = vld [vmem:[%s0 + $0x2d8] sm:$0xff]
  %v104 = vld [vmem:[%s0 + $0x2e0] sm:$0xff]
  %v105 = vld [vmem:[%s0 + $0x2e8] sm:$0xff]
  %v106 = vld [vmem:[%s0 + $0x2f0] sm:$0xff]
  %v107 = vld [vmem:[%s0 + $0x2f8] sm:$0xff]
  %v108 = vld [vmem:[%s0 + $0x300] sm:$0xff]
  %v109 = vld [vmem:[%s0 + $0x308] sm:$0xff]
  %v110 = vld [vmem:[%s0 + $0x310] sm:$0xff]
  %v111 = vld [vmem:[%s0 + $0x318] sm:$0xff]
  %v112 = vld [vmem:[%s0 + $0x320] sm:$0xff]
  %v113 = vld [vmem:[%s0 + $0x328] sm:$0xff]
  %v114 = vld [vmem:[%s0 + $0x330] sm:$0xff]
  %v115 = vld [vmem:[%s0 + $0x338] sm:$0xff]
  %v116 = vld [vmem:[%s0 + $0x340] sm:$0xff]
  %v117 = vld [vmem:[%s0 + $0x348] sm:$0xff]
  %v118 = vld [vmem:[%s0 + $0x350] sm:$0xff]
  %v119 = vld [vmem:[%s0 + $0x358] sm:$0xff]
  %v120 = vld [vmem:[%s0 + $0x360] sm:$0xff]
  %v121 = vld [vmem:[%s0 + $0x368] sm:$0xff]
  %v122 = vld [vmem:[%s0 + $0x370] sm:$0xff]
  %v123 = vld [vmem:[%s0 + $0x378] sm:$0xff]
  %v124 = vld [vmem:[%s0 + $0x380] sm:$0xff]
  %v125 = vld [vmem:[%s0 + $0x388] sm:$0xff]
  %v126 = vld [vmem:[%s0 + $0x390] sm:$0xff]
  %v127 = vld [vmem:[%s0 + $0x398] sm:$0xff]
  %v128 = vld [vmem:[%s0 + $0x3a0] sm:$0xff]
  %v129 = vld [vmem:[%s0 + $0x3a8] sm:$0xff]
  %v130 = vld [vmem:[%s0 + $0x3b0] sm:$0xff]
  %v131 = vld [vmem:[%s0 + $0x3b8] sm:$0xff]
  %v132 = vld [vmem:[%s0 + $0x3c0] sm:$0xff]
  %v133 = vld [vmem:[%s0 + $0x3c8] sm:$0xff]
  %v134 = vld [vmem:[%s0 + $0x3d0] sm:$0xff]
  %v135 = vld [vmem:[%s0 + $0x3d8] sm:$0xff]
  %v136 = vld [vmem:[%s0 + $0x3e0] sm:$0xff]
  %v137 = vld [vmem:[%s0 + $0x3e8] sm:$0xff]
  %v138 = vld [vmem:[%s0 + $0x3f0] sm:$0xff]
  %v139 = vld [vmem:[%s0 + $0x3f8] sm:$0xff]
  %v140 = vld [vmem:[%s1] sm:$0xf]
  %v141 = vld [vmem:[%s1 + $0x4] sm:$0xf]
  %v142 = vld [vmem:[%s1 + $0x8] sm:$0xf]
  %v143 = vld [vmem:[%s1 + $0xc] sm:$0xf]
  %v144 = vld [vmem:[%s1 + $0x10] sm:$0xf]
  %v145 = vld [vmem:[%s1 + $0x14] sm:$0xf]
  %v146 = vld [vmem:[%s1 + $0x18] sm:$0xf]
  %v147 = vld [vmem:[%s1 + $0x1c] sm:$0xf]
  %v148 = vld [vmem:[%s1 + $0x20] sm:$0xf]
  %v149 = vld [vmem:[%s1 + $0x24] sm:$0xf]
  %v150 = vld [vmem:[%s1 + $0x28] sm:$0xf]
  %v151 = vld [vmem:[%s1 + $0x2c] sm:$0xf]
  %v152 = vld [vmem:[%s1 + $0x30] sm:$0xf]
  %v153 = vld [vmem:[%s1 + $0x34] sm:$0xf]
  %v154 = vld [vmem:[%s1 + $0x38] sm:$0xf]
  %v155 = vld [vmem:[%s1 + $0x3c] sm:$0xf]
  %v156 = vld [vmem:[%s1 + $0x40] sm:$0xf]
  %v157 = vld [vmem:[%s1 + $0x44] sm:$0xf]
  %v158 = vld [vmem:[%s1 + $0x48] sm:$0xf]
  %v159 = vld [vmem:[%s1 + $0x4c] sm:$0xf]
  %v160 = vld [vmem:[%s1 + $0x50] sm:$0xf]
  %v161 = vld [vmem:[%s1 + $0x54] sm:$0xf]
  %v162 = vld [vmem:[%s1 + $0x58] sm:$0xf]
  %v163 = vld [vmem:[%s1 + $0x5c] sm:$0xf]
  %v164 = vld [vmem:[%s1 + $0x60] sm:$0xf]
  %v165 = vld [vmem:[%s1 + $0x64] sm:$0xf]
  %v166 = vld [vmem:[%s1 + $0x68] sm:$0xf]
  %v167 = vld [vmem:[%s1 + $0x6c] sm:$0xf]
  %v168 = vld [vmem:[%s1 + $0x70] sm:$0xf]
  %v169 = vld [vmem:[%s1 + $0x74] sm:$0xf]
  %v170 = vld [vmem:[%s1 + $0x78] sm:$0xf]
  %v171 = vld [vmem:[%s1 + $0x7c] sm:$0xf]
  %v172 = vld [vmem:[%s1 + $0x80] sm:$0xf]
  %v173 = vld [vmem:[%s1 + $0x84] sm:$0xf]
  %v174 = vld [vmem:[%s1 + $0x88] sm:$0xf]
  %v175 = vld [vmem:[%s1 + $0x8c] sm:$0xf]
  %v176 = vld [vmem:[%s1 + $0x90] sm:$0xf]
  %v177 = vld [vmem:[%s1 + $0x94] sm:$0xf]
  %v178 = vld [vmem:[%s1 + $0x98] sm:$0xf]
  %v179 = vld [vmem:[%s1 + $0x9c] sm:$0xf]
  %v180 = vld [vmem:[%s1 + $0xa0] sm:$0xf]
  %v181 = vld [vmem:[%s1 + $0xa4] sm:$0xf]
  %v182 = vld [vmem:[%s1 + $0xa8] sm:$0xf]
  %v183 = vld [vmem:[%s1 + $0xac] sm:$0xf]
  %v184 = vld [vmem:[%s1 + $0xb0] sm:$0xf]
  %v185 = vld [vmem:[%s1 + $0xb4] sm:$0xf]
  %v186 = vld [vmem:[%s1 + $0xb8] sm:$0xf]
  %v187 = vld [vmem:[%s1 + $0xbc] sm:$0xf]
  %v188 = vld [vmem:[%s1 + $0xc0] sm:$0xf]
  %v189 = vld [vmem:[%s1 + $0xc4] sm:$0xf]
  %v190 = vld [vmem:[%s1 + $0xc8] sm:$0xf]
  %v191 = vld [vmem:[%s1 + $0xcc] sm:$0xf]
  %v192 = vld [vmem:[%s1 + $0xd0] sm:$0xf]
  %v193 = vld [vmem:[%s1 + $0xd4] sm:$0xf]
  %v194 = vld [vmem:[%s1 + $0xd8] sm:$0xf]
  %v195 = vld [vmem:[%s1 + $0xdc] sm:$0xf]
  %v196 = vld [vmem:[%s1 + $0xe0] sm:$0xf]
  %v197 = vld [vmem:[%s1 + $0xe4] sm:$0xf]
  %v198 = vld [vmem:[%s1 + $0xe8] sm:$0xf]
  %v199 = vld [vmem:[%s1 + $0xec] sm:$0xf]
  %v200 = vld [vmem:[%s1 + $0xf0] sm:$0xf]
  %v201 = vld [vmem:[%s1 + $0xf4] sm:$0xf]
  %v202 = vld [vmem:[%s1 + $0xf8] sm:$0xf]
  %v203 = vld [vmem:[%s1 + $0xfc] sm:$0xf]
  %v332 = vunpack.c.l.b16 %v12
  %v333 = vunpack.c.h.b16 %v12
  %v334 = vunpack.c.l.b16 %v13
  %v335 = vunpack.c.h.b16 %v13
  %v336 = vunpack.c.l.b16 %v14
  %v337 = vunpack.c.h.b16 %v14
  %v338 = vunpack.c.l.b16 %v15
  %v339 = vunpack.c.h.b16 %v15
  %v340 = vunpack.c.l.b16 %v16
  %v341 = vunpack.c.h.b16 %v16
  %v342 = vunpack.c.l.b16 %v17
  %v343 = vunpack.c.h.b16 %v17
  %v344 = vunpack.c.l.b16 %v18
  %v345 = vunpack.c.h.b16 %v18
  %v346 = vunpack.c.l.b16 %v19
  %v347 = vunpack.c.h.b16 %v19
  %v348 = vunpack.c.l.b16 %v20
  %v349 = vunpack.c.h.b16 %v20
  %v350 = vunpack.c.l.b16 %v21
  %v351 = vunpack.c.h.b16 %v21
  %v352 = vunpack.c.l.b16 %v22
  %v353 = vunpack.c.h.b16 %v22
  %v354 = vunpack.c.l.b16 %v23
  %v355 = vunpack.c.h.b16 %v23
  %v356 = vunpack.c.l.b16 %v24
  %v357 = vunpack.c.h.b16 %v24
  %v358 = vunpack.c.l.b16 %v25
  %v359 = vunpack.c.h.b16 %v25
  %v360 = vunpack.c.l.b16 %v26
  %v361 = vunpack.c.h.b16 %v26
  %v362 = vunpack.c.l.b16 %v27
  %v363 = vunpack.c.h.b16 %v27
  %v364 = vunpack.c.l.b16 %v28
  %v365 = vunpack.c.h.b16 %v28
  %v366 = vunpack.c.l.b16 %v29
  %v367 = vunpack.c.h.b16 %v29
  %v368 = vunpack.c.l.b16 %v30
  %v369 = vunpack.c.h.b16 %v30
  %v370 = vunpack.c.l.b16 %v31
  %v371 = vunpack.c.h.b16 %v31
  %v372 = vunpack.c.l.b16 %v32
  %v373 = vunpack.c.h.b16 %v32
  %v374 = vunpack.c.l.b16 %v33
  %v375 = vunpack.c.h.b16 %v33
  %v376 = vunpack.c.l.b16 %v34
  %v377 = vunpack.c.h.b16 %v34
  %v378 = vunpack.c.l.b16 %v35
  %v379 = vunpack.c.h.b16 %v35
  %v380 = vunpack.c.l.b16 %v36
  %v381 = vunpack.c.h.b16 %v36
  %v382 = vunpack.c.l.b16 %v37
  %v383 = vunpack.c.h.b16 %v37
  %v384 = vunpack.c.l.b16 %v38
  %v385 = vunpack.c.h.b16 %v38
  %v386 = vunpack.c.l.b16 %v39
  %v387 = vunpack.c.h.b16 %v39
  %v388 = vunpack.c.l.b16 %v40
  %v389 = vunpack.c.h.b16 %v40
  %v390 = vunpack.c.l.b16 %v41
  %v391 = vunpack.c.h.b16 %v41
  %v392 = vunpack.c.l.b16 %v42
  %v393 = vunpack.c.h.b16 %v42
  %v394 = vunpack.c.l.b16 %v43
  %v395 = vunpack.c.h.b16 %v43
  %v396 = vunpack.c.l.b16 %v44
  %v397 = vunpack.c.h.b16 %v44
  %v398 = vunpack.c.l.b16 %v45
  %v399 = vunpack.c.h.b16 %v45
  %v400 = vunpack.c.l.b16 %v46
  %v401 = vunpack.c.h.b16 %v46
  %v402 = vunpack.c.l.b16 %v47
  %v403 = vunpack.c.h.b16 %v47
  %v404 = vunpack.c.l.b16 %v48
  %v405 = vunpack.c.h.b16 %v48
  %v406 = vunpack.c.l.b16 %v49
  %v407 = vunpack.c.h.b16 %v49
  %v408 = vunpack.c.l.b16 %v50
  %v409 = vunpack.c.h.b16 %v50
  %v410 = vunpack.c.l.b16 %v51
  %v411 = vunpack.c.h.b16 %v51
  %v412 = vunpack.c.l.b16 %v52
  %v413 = vunpack.c.h.b16 %v52
  %v414 = vunpack.c.l.b16 %v53
  %v415 = vunpack.c.h.b16 %v53
  %v416 = vunpack.c.l.b16 %v54
  %v417 = vunpack.c.h.b16 %v54
  %v418 = vunpack.c.l.b16 %v55
  %v419 = vunpack.c.h.b16 %v55
  %v420 = vunpack.c.l.b16 %v56
  %v421 = vunpack.c.h.b16 %v56
  %v422 = vunpack.c.l.b16 %v57
  %v423 = vunpack.c.h.b16 %v57
  %v424 = vunpack.c.l.b16 %v58
  %v425 = vunpack.c.h.b16 %v58
  %v426 = vunpack.c.l.b16 %v59
  %v427 = vunpack.c.h.b16 %v59
  %v428 = vunpack.c.l.b16 %v60
  %v429 = vunpack.c.h.b16 %v60
  %v430 = vunpack.c.l.b16 %v61
  %v431 = vunpack.c.h.b16 %v61
  %v432 = vunpack.c.l.b16 %v62
  %v433 = vunpack.c.h.b16 %v62
  %v434 = vunpack.c.l.b16 %v63
  %v435 = vunpack.c.h.b16 %v63
  %v436 = vunpack.c.l.b16 %v64
  %v437 = vunpack.c.h.b16 %v64
  %v438 = vunpack.c.l.b16 %v65
  %v439 = vunpack.c.h.b16 %v65
  %v440 = vunpack.c.l.b16 %v66
  %v441 = vunpack.c.h.b16 %v66
  %v442 = vunpack.c.l.b16 %v67
  %v443 = vunpack.c.h.b16 %v67
  %v444 = vunpack.c.l.b16 %v68
  %v445 = vunpack.c.h.b16 %v68
  %v446 = vunpack.c.l.b16 %v69
  %v447 = vunpack.c.h.b16 %v69
  %v448 = vunpack.c.l.b16 %v70
  %v449 = vunpack.c.h.b16 %v70
  %v450 = vunpack.c.l.b16 %v71
  %v451 = vunpack.c.h.b16 %v71
  %v452 = vunpack.c.l.b16 %v72
  %v453 = vunpack.c.h.b16 %v72
  %v454 = vunpack.c.l.b16 %v73
  %v455 = vunpack.c.h.b16 %v73
  %v456 = vunpack.c.l.b16 %v74
  %v457 = vunpack.c.h.b16 %v74
  %v458 = vunpack.c.l.b16 %v75
  %v459 = vunpack.c.h.b16 %v75
  %v460 = vunpack.c.l.b16 %v76
  %v461 = vunpack.c.h.b16 %v76
  %v462 = vunpack.c.l.b16 %v77
  %v463 = vunpack.c.h.b16 %v77
  %v464 = vunpack.c.l.b16 %v78
  %v465 = vunpack.c.h.b16 %v78
  %v466 = vunpack.c.l.b16 %v79
  %v467 = vunpack.c.h.b16 %v79
  %v468 = vunpack.c.l.b16 %v80
  %v469 = vunpack.c.h.b16 %v80
  %v470 = vunpack.c.l.b16 %v81
  %v471 = vunpack.c.h.b16 %v81
  %v472 = vunpack.c.l.b16 %v82
  %v473 = vunpack.c.h.b16 %v82
  %v474 = vunpack.c.l.b16 %v83
  %v475 = vunpack.c.h.b16 %v83
  %v476 = vunpack.c.l.b16 %v84
  %v477 = vunpack.c.h.b16 %v84
  %v478 = vunpack.c.l.b16 %v85
  %v479 = vunpack.c.h.b16 %v85
  %v480 = vunpack.c.l.b16 %v86
  %v481 = vunpack.c.h.b16 %v86
  %v482 = vunpack.c.l.b16 %v87
  %v483 = vunpack.c.h.b16 %v87
  %v484 = vunpack.c.l.b16 %v88
  %v485 = vunpack.c.h.b16 %v88
  %v486 = vunpack.c.l.b16 %v89
  %v487 = vunpack.c.h.b16 %v89
  %v488 = vunpack.c.l.b16 %v90
  %v489 = vunpack.c.h.b16 %v90
  %v490 = vunpack.c.l.b16 %v91
  %v491 = vunpack.c.h.b16 %v91
  %v492 = vunpack.c.l.b16 %v92
  %v493 = vunpack.c.h.b16 %v92
  %v494 = vunpack.c.l.b16 %v93
  %v495 = vunpack.c.h.b16 %v93
  %v496 = vunpack.c.l.b16 %v94
  %v497 = vunpack.c.h.b16 %v94
  %v498 = vunpack.c.l.b16 %v95
  %v499 = vunpack.c.h.b16 %v95
  %v500 = vunpack.c.l.b16 %v96
  %v501 = vunpack.c.h.b16 %v96
  %v502 = vunpack.c.l.b16 %v97
  %v503 = vunpack.c.h.b16 %v97
  %v504 = vunpack.c.l.b16 %v98
  %v505 = vunpack.c.h.b16 %v98
  %v506 = vunpack.c.l.b16 %v99
  %v507 = vunpack.c.h.b16 %v99
  %v508 = vunpack.c.l.b16 %v100
  %v509 = vunpack.c.h.b16 %v100
  %v510 = vunpack.c.l.b16 %v101
  %v511 = vunpack.c.h.b16 %v101
  %v512 = vunpack.c.l.b16 %v102
  %v513 = vunpack.c.h.b16 %v102
  %v514 = vunpack.c.l.b16 %v103
  %v515 = vunpack.c.h.b16 %v103
  %v516 = vunpack.c.l.b16 %v104
  %v517 = vunpack.c.h.b16 %v104
  %v518 = vunpack.c.l.b16 %v105
  %v519 = vunpack.c.h.b16 %v105
  %v520 = vunpack.c.l.b16 %v106
  %v521 = vunpack.c.h.b16 %v106
  %v522 = vunpack.c.l.b16 %v107
  %v523 = vunpack.c.h.b16 %v107
  %v524 = vunpack.c.l.b16 %v108
  %v525 = vunpack.c.h.b16 %v108
  %v526 = vunpack.c.l.b16 %v109
  %v527 = vunpack.c.h.b16 %v109
  %v528 = vunpack.c.l.b16 %v110
  %v529 = vunpack.c.h.b16 %v110
  %v530 = vunpack.c.l.b16 %v111
  %v531 = vunpack.c.h.b16 %v111
  %v532 = vunpack.c.l.b16 %v112
  %v533 = vunpack.c.h.b16 %v112
  %v534 = vunpack.c.l.b16 %v113
  %v535 = vunpack.c.h.b16 %v113
  %v536 = vunpack.c.l.b16 %v114
  %v537 = vunpack.c.h.b16 %v114
  %v538 = vunpack.c.l.b16 %v115
  %v539 = vunpack.c.h.b16 %v115
  %v540 = vunpack.c.l.b16 %v116
  %v541 = vunpack.c.h.b16 %v116
  %v542 = vunpack.c.l.b16 %v117
  %v543 = vunpack.c.h.b16 %v117
  %v544 = vunpack.c.l.b16 %v118
  %v545 = vunpack.c.h.b16 %v118
  %v546 = vunpack.c.l.b16 %v119
  %v547 = vunpack.c.h.b16 %v119
  %v548 = vunpack.c.l.b16 %v120
  %v549 = vunpack.c.h.b16 %v120
  %v550 = vunpack.c.l.b16 %v121
  %v551 = vunpack.c.h.b16 %v121
  %v552 = vunpack.c.l.b16 %v122
  %v553 = vunpack.c.h.b16 %v122
  %v554 = vunpack.c.l.b16 %v123
  %v555 = vunpack.c.h.b16 %v123
  %v556 = vunpack.c.l.b16 %v124
  %v557 = vunpack.c.h.b16 %v124
  %v558 = vunpack.c.l.b16 %v125
  %v559 = vunpack.c.h.b16 %v125
  %v560 = vunpack.c.l.b16 %v126
  %v561 = vunpack.c.h.b16 %v126
  %v562 = vunpack.c.l.b16 %v127
  %v563 = vunpack.c.h.b16 %v127
  %v564 = vunpack.c.l.b16 %v128
  %v565 = vunpack.c.h.b16 %v128
  %v566 = vunpack.c.l.b16 %v129
  %v567 = vunpack.c.h.b16 %v129
  %v568 = vunpack.c.l.b16 %v130
  %v569 = vunpack.c.h.b16 %v130
  %v570 = vunpack.c.l.b16 %v131
  %v571 = vunpack.c.h.b16 %v131
  %v572 = vunpack.c.l.b16 %v132
  %v573 = vunpack.c.h.b16 %v132
  %v574 = vunpack.c.l.b16 %v133
  %v575 = vunpack.c.h.b16 %v133
  %v576 = vunpack.c.l.b16 %v134
  %v577 = vunpack.c.h.b16 %v134
  %v578 = vunpack.c.l.b16 %v135
  %v579 = vunpack.c.h.b16 %v135
  %v580 = vunpack.c.l.b16 %v136
  %v581 = vunpack.c.h.b16 %v136
  %v582 = vunpack.c.l.b16 %v137
  %v583 = vunpack.c.h.b16 %v137
  %v584 = vunpack.c.l.b16 %v138
  %v585 = vunpack.c.h.b16 %v138
  %v586 = vunpack.c.l.b16 %v139
  %v587 = vunpack.c.h.b16 %v139
  %v588 = vpack.c.b16 %v336, %v332
  %v589 = vpack.c.b16 %v337, %v333
  %v590 = vpack.c.b16 %v338, %v334
  %v591 = vpack.c.b16 %v339, %v335
  %v592 = vpack.c.b16 %v344, %v340
  %v593 = vpack.c.b16 %v345, %v341
  %v594 = vpack.c.b16 %v346, %v342
  %v595 = vpack.c.b16 %v347, %v343
  %v596 = vpack.c.b16 %v352, %v348
  %v597 = vpack.c.b16 %v353, %v349
  %v598 = vpack.c.b16 %v354, %v350
  %v599 = vpack.c.b16 %v355, %v351
  %v600 = vpack.c.b16 %v360, %v356
  %v601 = vpack.c.b16 %v361, %v357
  %v602 = vpack.c.b16 %v362, %v358
  %v603 = vpack.c.b16 %v363, %v359
  %v604 = vpack.c.b16 %v368, %v364
  %v605 = vpack.c.b16 %v369, %v365
  %v606 = vpack.c.b16 %v370, %v366
  %v607 = vpack.c.b16 %v371, %v367
  %v608 = vpack.c.b16 %v376, %v372
  %v609 = vpack.c.b16 %v377, %v373
  %v610 = vpack.c.b16 %v378, %v374
  %v611 = vpack.c.b16 %v379, %v375
  %v612 = vpack.c.b16 %v384, %v380
  %v613 = vpack.c.b16 %v385, %v381
  %v614 = vpack.c.b16 %v386, %v382
  %v615 = vpack.c.b16 %v387, %v383
  %v616 = vpack.c.b16 %v392, %v388
  %v617 = vpack.c.b16 %v393, %v389
  %v618 = vpack.c.b16 %v394, %v390
  %v619 = vpack.c.b16 %v395, %v391
  %v620 = vpack.c.b16 %v400, %v396
  %v621 = vpack.c.b16 %v401, %v397
  %v622 = vpack.c.b16 %v402, %v398
  %v623 = vpack.c.b16 %v403, %v399
  %v624 = vpack.c.b16 %v408, %v404
  %v625 = vpack.c.b16 %v409, %v405
  %v626 = vpack.c.b16 %v410, %v406
  %v627 = vpack.c.b16 %v411, %v407
  %v628 = vpack.c.b16 %v416, %v412
  %v629 = vpack.c.b16 %v417, %v413
  %v630 = vpack.c.b16 %v418, %v414
  %v631 = vpack.c.b16 %v419, %v415
  %v632 = vpack.c.b16 %v424, %v420
  %v633 = vpack.c.b16 %v425, %v421
  %v634 = vpack.c.b16 %v426, %v422
  %v635 = vpack.c.b16 %v427, %v423
  %v636 = vpack.c.b16 %v432, %v428
  %v637 = vpack.c.b16 %v433, %v429
  %v638 = vpack.c.b16 %v434, %v430
  %v639 = vpack.c.b16 %v435, %v431
  %v640 = vpack.c.b16 %v440, %v436
  %v641 = vpack.c.b16 %v441, %v437
  %v642 = vpack.c.b16 %v442, %v438
  %v643 = vpack.c.b16 %v443, %v439
  %v644 = vpack.c.b16 %v448, %v444
  %v645 = vpack.c.b16 %v449, %v445
  %v646 = vpack.c.b16 %v450, %v446
  %v647 = vpack.c.b16 %v451, %v447
  %v648 = vpack.c.b16 %v456, %v452
  %v649 = vpack.c.b16 %v457, %v453
  %v650 = vpack.c.b16 %v458, %v454
  %v651 = vpack.c.b16 %v459, %v455
  %v652 = vpack.c.b16 %v464, %v460
  %v653 = vpack.c.b16 %v465, %v461
  %v654 = vpack.c.b16 %v466, %v462
  %v655 = vpack.c.b16 %v467, %v463
  %v656 = vpack.c.b16 %v472, %v468
  %v657 = vpack.c.b16 %v473, %v469
  %v658 = vpack.c.b16 %v474, %v470
  %v659 = vpack.c.b16 %v475, %v471
  %v660 = vpack.c.b16 %v480, %v476
  %v661 = vpack.c.b16 %v481, %v477
  %v662 = vpack.c.b16 %v482, %v478
  %v663 = vpack.c.b16 %v483, %v479
  %v664 = vpack.c.b16 %v488, %v484
  %v665 = vpack.c.b16 %v489, %v485
  %v666 = vpack.c.b16 %v490, %v486
  %v667 = vpack.c.b16 %v491, %v487
  %v668 = vpack.c.b16 %v496, %v492
  %v669 = vpack.c.b16 %v497, %v493
  %v670 = vpack.c.b16 %v498, %v494
  %v671 = vpack.c.b16 %v499, %v495
  %v672 = vpack.c.b16 %v504, %v500
  %v673 = vpack.c.b16 %v505, %v501
  %v674 = vpack.c.b16 %v506, %v502
  %v675 = vpack.c.b16 %v507, %v503
  %v676 = vpack.c.b16 %v512, %v508
  %v677 = vpack.c.b16 %v513, %v509
  %v678 = vpack.c.b16 %v514, %v510
  %v679 = vpack.c.b16 %v515, %v511
  %v680 = vpack.c.b16 %v520, %v516
  %v681 = vpack.c.b16 %v521, %v517
  %v682 = vpack.c.b16 %v522, %v518
  %v683 = vpack.c.b16 %v523, %v519
  %v684 = vpack.c.b16 %v528, %v524
  %v685 = vpack.c.b16 %v529, %v525
  %v686 = vpack.c.b16 %v530, %v526
  %v687 = vpack.c.b16 %v531, %v527
  %v688 = vpack.c.b16 %v536, %v532
  %v689 = vpack.c.b16 %v537, %v533
  %v690 = vpack.c.b16 %v538, %v534
  %v691 = vpack.c.b16 %v539, %v535
  %v692 = vpack.c.b16 %v544, %v540
  %v693 = vpack.c.b16 %v545, %v541
  %v694 = vpack.c.b16 %v546, %v542
  %v695 = vpack.c.b16 %v547, %v543
  %v696 = vpack.c.b16 %v552, %v548
  %v697 = vpack.c.b16 %v553, %v549
  %v698 = vpack.c.b16 %v554, %v550
  %v699 = vpack.c.b16 %v555, %v551
  %v700 = vpack.c.b16 %v560, %v556
  %v701 = vpack.c.b16 %v561, %v557
  %v702 = vpack.c.b16 %v562, %v558
  %v703 = vpack.c.b16 %v563, %v559
  %v704 = vpack.c.b16 %v568, %v564
  %v705 = vpack.c.b16 %v569, %v565
  %v706 = vpack.c.b16 %v570, %v566
  %v707 = vpack.c.b16 %v571, %v567
  %v708 = vpack.c.b16 %v576, %v572
  %v709 = vpack.c.b16 %v577, %v573
  %v710 = vpack.c.b16 %v578, %v574
  %v711 = vpack.c.b16 %v579, %v575
  %v712 = vpack.c.b16 %v584, %v580
  %v713 = vpack.c.b16 %v585, %v581
  %v714 = vpack.c.b16 %v586, %v582
  %v715 = vpack.c.b16 %v587, %v583
  %v908 = vunpack.c.l.b16 %v140
  %v909 = vunpack.c.l.b16 %v141
  %v910 = vunpack.c.l.b16 %v142
  %v911 = vunpack.c.l.b16 %v143
  %v912 = vunpack.c.l.b16 %v144
  %v913 = vunpack.c.l.b16 %v145
  %v914 = vunpack.c.l.b16 %v146
  %v915 = vunpack.c.l.b16 %v147
  %v916 = vunpack.c.l.b16 %v148
  %v917 = vunpack.c.l.b16 %v149
  %v918 = vunpack.c.l.b16 %v150
  %v919 = vunpack.c.l.b16 %v151
  %v920 = vunpack.c.l.b16 %v152
  %v921 = vunpack.c.l.b16 %v153
  %v922 = vunpack.c.l.b16 %v154
  %v923 = vunpack.c.l.b16 %v155
  %v924 = vunpack.c.l.b16 %v156
  %v925 = vunpack.c.l.b16 %v157
  %v926 = vunpack.c.l.b16 %v158
  %v927 = vunpack.c.l.b16 %v159
  %v928 = vunpack.c.l.b16 %v160
  %v929 = vunpack.c.l.b16 %v161
  %v930 = vunpack.c.l.b16 %v162
  %v931 = vunpack.c.l.b16 %v163
  %v932 = vunpack.c.l.b16 %v164
  %v933 = vunpack.c.l.b16 %v165
  %v934 = vunpack.c.l.b16 %v166
  %v935 = vunpack.c.l.b16 %v167
  %v936 = vunpack.c.l.b16 %v168
  %v937 = vunpack.c.l.b16 %v169
  %v938 = vunpack.c.l.b16 %v170
  %v939 = vunpack.c.l.b16 %v171
  %v940 = vunpack.c.l.b16 %v172
  %v941 = vunpack.c.l.b16 %v173
  %v942 = vunpack.c.l.b16 %v174
  %v943 = vunpack.c.l.b16 %v175
  %v944 = vunpack.c.l.b16 %v176
  %v945 = vunpack.c.l.b16 %v177
  %v946 = vunpack.c.l.b16 %v178
  %v947 = vunpack.c.l.b16 %v179
  %v948 = vunpack.c.l.b16 %v180
  %v949 = vunpack.c.l.b16 %v181
  %v950 = vunpack.c.l.b16 %v182
  %v951 = vunpack.c.l.b16 %v183
  %v952 = vunpack.c.l.b16 %v184
  %v953 = vunpack.c.l.b16 %v185
  %v954 = vunpack.c.l.b16 %v186
  %v955 = vunpack.c.l.b16 %v187
  %v956 = vunpack.c.l.b16 %v188
  %v957 = vunpack.c.l.b16 %v189
  %v958 = vunpack.c.l.b16 %v190
  %v959 = vunpack.c.l.b16 %v191
  %v960 = vunpack.c.l.b16 %v192
  %v961 = vunpack.c.l.b16 %v193
  %v962 = vunpack.c.l.b16 %v194
  %v963 = vunpack.c.l.b16 %v195
  %v964 = vunpack.c.l.b16 %v196
  %v965 = vunpack.c.l.b16 %v197
  %v966 = vunpack.c.l.b16 %v198
  %v967 = vunpack.c.l.b16 %v199
  %v968 = vunpack.c.l.b16 %v200
  %v969 = vunpack.c.l.b16 %v201
  %v970 = vunpack.c.l.b16 %v202
  %v971 = vunpack.c.l.b16 %v203
  %v972 = vpack.c.b16 %v909, %v908
  %v973 = vpack.c.b16 %v911, %v910
  %v974 = vpack.c.b16 %v913, %v912
  %v975 = vpack.c.b16 %v915, %v914
  %v976 = vpack.c.b16 %v917, %v916
  %v977 = vpack.c.b16 %v919, %v918
  %v978 = vpack.c.b16 %v921, %v920
  %v979 = vpack.c.b16 %v923, %v922
  %v980 = vpack.c.b16 %v925, %v924
  %v981 = vpack.c.b16 %v927, %v926
  %v982 = vpack.c.b16 %v929, %v928
  %v983 = vpack.c.b16 %v931, %v930
  %v984 = vpack.c.b16 %v933, %v932
  %v985 = vpack.c.b16 %v935, %v934
  %v986 = vpack.c.b16 %v937, %v936
  %v987 = vpack.c.b16 %v939, %v938
  %v988 = vpack.c.b16 %v941, %v940
  %v989 = vpack.c.b16 %v943, %v942
  %v990 = vpack.c.b16 %v945, %v944
  %v991 = vpack.c.b16 %v947, %v946
  %v992 = vpack.c.b16 %v949, %v948
  %v993 = vpack.c.b16 %v951, %v950
  %v994 = vpack.c.b16 %v953, %v952
  %v995 = vpack.c.b16 %v955, %v954
  %v996 = vpack.c.b16 %v957, %v956
  %v997 = vpack.c.b16 %v959, %v958
  %v998 = vpack.c.b16 %v961, %v960
  %v999 = vpack.c.b16 %v963, %v962
  %v1000 = vpack.c.b16 %v965, %v964
  %v1001 = vpack.c.b16 %v967, %v966
  %v1002 = vpack.c.b16 %v969, %v968
  %v1003 = vpack.c.b16 %v971, %v970
  %1036 = vmatprep.subr.bf16.mxu0 0
  %1037 = vmatpush1.bf16.msra.mxu0 %v979
  %1038 = vmatprep.subr.bf16.mxu0 0
  %1039 = vmatpush1.bf16.msra.mxu0 %v978
  %1040 = vmatprep.subr.bf16.mxu0 0
  %1041 = vmatpush1.bf16.msra.mxu0 %v977
  %1042 = vmatprep.subr.bf16.mxu0 0
  %1043 = vmatpush1.bf16.msra.mxu0 %v976
  %1044 = vmatprep.subr.bf16.mxu0 0
  %1045 = vmatpush1.bf16.msra.mxu0 %v975
  %1046 = vmatprep.subr.bf16.mxu0 0
  %1047 = vmatpush1.bf16.msra.mxu0 %v974
  %1048 = vmatprep.subr.bf16.mxu0 0
  %1049 = vmatpush1.bf16.msra.mxu0 %v973
  %1050 = vmatprep.subr.bf16.mxu0 0
  %1051 = vmatpush1.bf16.msra.mxu0 %v972
  %1052 = vmatprep.subr.bf16.mxu0 0
  %1053 = vmatpush2.bf16.msra.mxu0 %v987
  %1054 = vmatprep.subr.bf16.mxu0 0
  %1055 = vmatpush2.bf16.msra.mxu0 %v986
  %1056 = vmatprep.subr.bf16.mxu0 0
  %1057 = vmatpush2.bf16.msra.mxu0 %v985
  %1058 = vmatprep.subr.bf16.mxu0 0
  %1059 = vmatpush2.bf16.msra.mxu0 %v984
  %1060 = vmatprep.subr.bf16.mxu0 0
  %1061 = vmatpush2.bf16.msra.mxu0 %v983
  %1062 = vmatprep.subr.bf16.mxu0 0
  %1063 = vmatpush2.bf16.msra.mxu0 %v982
  %1064 = vmatprep.subr.bf16.mxu0 0
  %1065 = vmatpush2.bf16.msra.mxu0 %v981
  %1066 = vmatprep.subr.bf16.mxu0 0
  %1067 = vmatpush2.bf16.msra.mxu0 %v980
  %1068 = vmatprep.mubr.bf16.mxu0 %v589
  %1069 = vmatmul.mubr.bf16.gmra.mxu0 %v588
  %v1070 = vpop.f32.mrf.mxu0
  %v1071 = vadd.f32 0.0, %v1070
  %v1072 = vpop.f32.mrf.mxu0
  %v1073 = vpop.f32.mrf.mxu0
  %v1074 = vadd.f32 0.0, %v1073
  %v1075 = vpop.f32.mrf.mxu0
  %1076 = vmatprep.mubr.bf16.mxu0 %v593
  %1077 = vmatmul.mubr.bf16.gmra.mxu0 %v592
  %v1078 = vpop.f32.mrf.mxu0
  %v1079 = vadd.f32 0.0, %v1078
  %v1080 = vpop.f32.mrf.mxu0
  %v1081 = vpop.f32.mrf.mxu0
  %v1082 = vadd.f32 0.0, %v1081
  %v1083 = vpop.f32.mrf.mxu0
  %1084 = vmatprep.mubr.bf16.mxu0 %v597
  %1085 = vmatmul.mubr.bf16.gmra.mxu0 %v596
  %v1086 = vpop.f32.mrf.mxu0
  %v1087 = vadd.f32 0.0, %v1086
  %v1088 = vpop.f32.mrf.mxu0
  %v1089 = vpop.f32.mrf.mxu0
  %v1090 = vadd.f32 0.0, %v1089
  %v1091 = vpop.f32.mrf.mxu0
  %1092 = vmatprep.mubr.bf16.mxu0 %v601
  %1093 = vmatmul.mubr.bf16.gmra.mxu0 %v600
  %v1094 = vpop.f32.mrf.mxu0
  %v1095 = vadd.f32 0.0, %v1094
  %v1096 = vpop.f32.mrf.mxu0
  %v1097 = vpop.f32.mrf.mxu0
  %v1098 = vadd.f32 0.0, %v1097
  %v1099 = vpop.f32.mrf.mxu0
  %1100 = vmatprep.mubr.bf16.mxu0 %v605
  %1101 = vmatmul.mubr.bf16.gmra.mxu0 %v604
  %v1102 = vpop.f32.mrf.mxu0
  %v1103 = vadd.f32 0.0, %v1102
  %v1104 = vpop.f32.mrf.mxu0
  %v1105 = vpop.f32.mrf.mxu0
  %v1106 = vadd.f32 0.0, %v1105
  %v1107 = vpop.f32.mrf.mxu0
  %1108 = vmatprep.mubr.bf16.mxu0 %v609
  %1109 = vmatmul.mubr.bf16.gmra.mxu0 %v608
  %v1110 = vpop.f32.mrf.mxu0
  %v1111 = vadd.f32 0.0, %v1110
  %v1112 = vpop.f32.mrf.mxu0
  %v1113 = vpop.f32.mrf.mxu0
  %v1114 = vadd.f32 0.0, %v1113
  %v1115 = vpop.f32.mrf.mxu0
  %1116 = vmatprep.mubr.bf16.mxu0 %v613
  %1117 = vmatmul.mubr.bf16.gmra.mxu0 %v612
  %v1118 = vpop.f32.mrf.mxu0
  %v1119 = vadd.f32 0.0, %v1118
  %v1120 = vpop.f32.mrf.mxu0
  %v1121 = vpop.f32.mrf.mxu0
  %v1122 = vadd.f32 0.0, %v1121
  %v1123 = vpop.f32.mrf.mxu0
  %1124 = vmatprep.mubr.bf16.mxu0 %v617
  %1125 = vmatmul.mubr.bf16.gmra.mxu0 %v616
  %v1126 = vpop.f32.mrf.mxu0
  %v1127 = vadd.f32 0.0, %v1126
  %v1128 = vpop.f32.mrf.mxu0
  %v1129 = vpop.f32.mrf.mxu0
  %v1130 = vadd.f32 0.0, %v1129
  %v1131 = vpop.f32.mrf.mxu0
  %1132 = vmatprep.mubr.bf16.mxu0 %v621
  %1133 = vmatmul.mubr.bf16.gmra.mxu0 %v620
  %v1134 = vpop.f32.mrf.mxu0
  %v1135 = vadd.f32 0.0, %v1134
  %v1136 = vpop.f32.mrf.mxu0
  %v1137 = vpop.f32.mrf.mxu0
  %v1138 = vadd.f32 0.0, %v1137
  %v1139 = vpop.f32.mrf.mxu0
  %1140 = vmatprep.mubr.bf16.mxu0 %v625
  %1141 = vmatmul.mubr.bf16.gmra.mxu0 %v624
  %v1142 = vpop.f32.mrf.mxu0
  %v1143 = vadd.f32 0.0, %v1142
  %v1144 = vpop.f32.mrf.mxu0
  %v1145 = vpop.f32.mrf.mxu0
  %v1146 = vadd.f32 0.0, %v1145
  %v1147 = vpop.f32.mrf.mxu0
  %1148 = vmatprep.mubr.bf16.mxu0 %v629
  %1149 = vmatmul.mubr.bf16.gmra.mxu0 %v628
  %v1150 = vpop.f32.mrf.mxu0
  %v1151 = vadd.f32 0.0, %v1150
  %v1152 = vpop.f32.mrf.mxu0
  %v1153 = vpop.f32.mrf.mxu0
  %v1154 = vadd.f32 0.0, %v1153
  %v1155 = vpop.f32.mrf.mxu0
  %1156 = vmatprep.mubr.bf16.mxu0 %v633
  %1157 = vmatmul.mubr.bf16.gmra.mxu0 %v632
  %v1158 = vpop.f32.mrf.mxu0
  %v1159 = vadd.f32 0.0, %v1158
  %v1160 = vpop.f32.mrf.mxu0
  %v1161 = vpop.f32.mrf.mxu0
  %v1162 = vadd.f32 0.0, %v1161
  %v1163 = vpop.f32.mrf.mxu0
  %1164 = vmatprep.mubr.bf16.mxu0 %v637
  %1165 = vmatmul.mubr.bf16.gmra.mxu0 %v636
  %v1166 = vpop.f32.mrf.mxu0
  %v1167 = vadd.f32 0.0, %v1166
  %v1168 = vpop.f32.mrf.mxu0
  %v1169 = vpop.f32.mrf.mxu0
  %v1170 = vadd.f32 0.0, %v1169
  %v1171 = vpop.f32.mrf.mxu0
  %1172 = vmatprep.mubr.bf16.mxu0 %v641
  %1173 = vmatmul.mubr.bf16.gmra.mxu0 %v640
  %v1174 = vpop.f32.mrf.mxu0
  %v1175 = vadd.f32 0.0, %v1174
  %v1176 = vpop.f32.mrf.mxu0
  %v1177 = vpop.f32.mrf.mxu0
  %v1178 = vadd.f32 0.0, %v1177
  %v1179 = vpop.f32.mrf.mxu0
  %1180 = vmatprep.mubr.bf16.mxu0 %v645
  %1181 = vmatmul.mubr.bf16.gmra.mxu0 %v644
  %v1182 = vpop.f32.mrf.mxu0
  %v1183 = vadd.f32 0.0, %v1182
  %v1184 = vpop.f32.mrf.mxu0
  %v1185 = vpop.f32.mrf.mxu0
  %v1186 = vadd.f32 0.0, %v1185
  %v1187 = vpop.f32.mrf.mxu0
  %1188 = vmatprep.mubr.bf16.mxu0 %v649
  %1189 = vmatmul.mubr.bf16.gmra.mxu0 %v648
  %v1190 = vpop.f32.mrf.mxu0
  %v1191 = vadd.f32 0.0, %v1190
  %v1192 = vpop.f32.mrf.mxu0
  %v1193 = vpop.f32.mrf.mxu0
  %v1194 = vadd.f32 0.0, %v1193
  %v1195 = vpop.f32.mrf.mxu0
  %1196 = vmatprep.mubr.bf16.mxu0 %v653
  %1197 = vmatmul.mubr.bf16.gmra.mxu0 %v652
  %v1198 = vpop.f32.mrf.mxu0
  %v1199 = vadd.f32 0.0, %v1198
  %v1200 = vpop.f32.mrf.mxu0
  %v1201 = vpop.f32.mrf.mxu0
  %v1202 = vadd.f32 0.0, %v1201
  %v1203 = vpop.f32.mrf.mxu0
  %1204 = vmatprep.mubr.bf16.mxu0 %v657
  %1205 = vmatmul.mubr.bf16.gmra.mxu0 %v656
  %v1206 = vpop.f32.mrf.mxu0
  %v1207 = vadd.f32 0.0, %v1206
  %v1208 = vpop.f32.mrf.mxu0
  %v1209 = vpop.f32.mrf.mxu0
  %v1210 = vadd.f32 0.0, %v1209
  %v1211 = vpop.f32.mrf.mxu0
  %1212 = vmatprep.mubr.bf16.mxu0 %v661
  %1213 = vmatmul.mubr.bf16.gmra.mxu0 %v660
  %v1214 = vpop.f32.mrf.mxu0
  %v1215 = vadd.f32 0.0, %v1214
  %v1216 = vpop.f32.mrf.mxu0
  %v1217 = vpop.f32.mrf.mxu0
  %v1218 = vadd.f32 0.0, %v1217
  %v1219 = vpop.f32.mrf.mxu0
  %1220 = vmatprep.mubr.bf16.mxu0 %v665
  %1221 = vmatmul.mubr.bf16.gmra.mxu0 %v664
  %v1222 = vpop.f32.mrf.mxu0
  %v1223 = vadd.f32 0.0, %v1222
  %v1224 = vpop.f32.mrf.mxu0
  %v1225 = vpop.f32.mrf.mxu0
  %v1226 = vadd.f32 0.0, %v1225
  %v1227 = vpop.f32.mrf.mxu0
  %1228 = vmatprep.mubr.bf16.mxu0 %v669
  %1229 = vmatmul.mubr.bf16.gmra.mxu0 %v668
  %v1230 = vpop.f32.mrf.mxu0
  %v1231 = vadd.f32 0.0, %v1230
  %v1232 = vpop.f32.mrf.mxu0
  %v1233 = vpop.f32.mrf.mxu0
  %v1234 = vadd.f32 0.0, %v1233
  %v1235 = vpop.f32.mrf.mxu0
  %1236 = vmatprep.mubr.bf16.mxu0 %v673
  %1237 = vmatmul.mubr.bf16.gmra.mxu0 %v672
  %v1238 = vpop.f32.mrf.mxu0
  %v1239 = vadd.f32 0.0, %v1238
  %v1240 = vpop.f32.mrf.mxu0
  %v1241 = vpop.f32.mrf.mxu0
  %v1242 = vadd.f32 0.0, %v1241
  %v1243 = vpop.f32.mrf.mxu0
  %1244 = vmatprep.mubr.bf16.mxu0 %v677
  %1245 = vmatmul.mubr.bf16.gmra.mxu0 %v676
  %v1246 = vpop.f32.mrf.mxu0
  %v1247 = vadd.f32 0.0, %v1246
  %v1248 = vpop.f32.mrf.mxu0
  %v1249 = vpop.f32.mrf.mxu0
  %v1250 = vadd.f32 0.0, %v1249
  %v1251 = vpop.f32.mrf.mxu0
  %1252 = vmatprep.mubr.bf16.mxu0 %v681
  %1253 = vmatmul.mubr.bf16.gmra.mxu0 %v680
  %v1254 = vpop.f32.mrf.mxu0
  %v1255 = vadd.f32 0.0, %v1254
  %v1256 = vpop.f32.mrf.mxu0
  %v1257 = vpop.f32.mrf.mxu0
  %v1258 = vadd.f32 0.0, %v1257
  %v1259 = vpop.f32.mrf.mxu0
  %1260 = vmatprep.mubr.bf16.mxu0 %v685
  %1261 = vmatmul.mubr.bf16.gmra.mxu0 %v684
  %v1262 = vpop.f32.mrf.mxu0
  %v1263 = vadd.f32 0.0, %v1262
  %v1264 = vpop.f32.mrf.mxu0
  %v1265 = vpop.f32.mrf.mxu0
  %v1266 = vadd.f32 0.0, %v1265
  %v1267 = vpop.f32.mrf.mxu0
  %1268 = vmatprep.mubr.bf16.mxu0 %v689
  %1269 = vmatmul.mubr.bf16.gmra.mxu0 %v688
  %v1270 = vpop.f32.mrf.mxu0
  %v1271 = vadd.f32 0.0, %v1270
  %v1272 = vpop.f32.mrf.mxu0
  %v1273 = vpop.f32.mrf.mxu0
  %v1274 = vadd.f32 0.0, %v1273
  %v1275 = vpop.f32.mrf.mxu0
  %1276 = vmatprep.mubr.bf16.mxu0 %v693
  %1277 = vmatmul.mubr.bf16.gmra.mxu0 %v692
  %v1278 = vpop.f32.mrf.mxu0
  %v1279 = vadd.f32 0.0, %v1278
  %v1280 = vpop.f32.mrf.mxu0
  %v1281 = vpop.f32.mrf.mxu0
  %v1282 = vadd.f32 0.0, %v1281
  %v1283 = vpop.f32.mrf.mxu0
  %1284 = vmatprep.mubr.bf16.mxu0 %v697
  %1285 = vmatmul.mubr.bf16.gmra.mxu0 %v696
  %v1286 = vpop.f32.mrf.mxu0
  %v1287 = vadd.f32 0.0, %v1286
  %v1288 = vpop.f32.mrf.mxu0
  %v1289 = vpop.f32.mrf.mxu0
  %v1290 = vadd.f32 0.0, %v1289
  %v1291 = vpop.f32.mrf.mxu0
  %1292 = vmatprep.mubr.bf16.mxu0 %v701
  %1293 = vmatmul.mubr.bf16.gmra.mxu0 %v700
  %v1294 = vpop.f32.mrf.mxu0
  %v1295 = vadd.f32 0.0, %v1294
  %v1296 = vpop.f32.mrf.mxu0
  %v1297 = vpop.f32.mrf.mxu0
  %v1298 = vadd.f32 0.0, %v1297
  %v1299 = vpop.f32.mrf.mxu0
  %1300 = vmatprep.mubr.bf16.mxu0 %v705
  %1301 = vmatmul.mubr.bf16.gmra.mxu0 %v704
  %v1302 = vpop.f32.mrf.mxu0
  %v1303 = vadd.f32 0.0, %v1302
  %v1304 = vpop.f32.mrf.mxu0
  %v1305 = vpop.f32.mrf.mxu0
  %v1306 = vadd.f32 0.0, %v1305
  %v1307 = vpop.f32.mrf.mxu0
  %1308 = vmatprep.mubr.bf16.mxu0 %v709
  %1309 = vmatmul.mubr.bf16.gmra.mxu0 %v708
  %v1310 = vpop.f32.mrf.mxu0
  %v1311 = vadd.f32 0.0, %v1310
  %v1312 = vpop.f32.mrf.mxu0
  %v1313 = vpop.f32.mrf.mxu0
  %v1314 = vadd.f32 0.0, %v1313
  %v1315 = vpop.f32.mrf.mxu0
  %1316 = vmatprep.mubr.bf16.mxu0 %v713
  %1317 = vmatmul.mubr.bf16.gmra.mxu0 %v712
  %v1318 = vpop.f32.mrf.mxu0
  %v1319 = vadd.f32 0.0, %v1318
  %v1320 = vpop.f32.mrf.mxu0
  %v1321 = vpop.f32.mrf.mxu0
  %v1322 = vadd.f32 0.0, %v1321
  %v1323 = vpop.f32.mrf.mxu0
  %1324 = vdwg.mxu0
  %1325 = vmatprep.subr.bf16.mxu0 0
  %1326 = vmatpush1.bf16.msra.mxu0 %v995
  %1327 = vmatprep.subr.bf16.mxu0 0
  %1328 = vmatpush1.bf16.msra.mxu0 %v994
  %1329 = vmatprep.subr.bf16.mxu0 0
  %1330 = vmatpush1.bf16.msra.mxu0 %v993
  %1331 = vmatprep.subr.bf16.mxu0 0
  %1332 = vmatpush1.bf16.msra.mxu0 %v992
  %1333 = vmatprep.subr.bf16.mxu0 0
  %1334 = vmatpush1.bf16.msra.mxu0 %v991
  %1335 = vmatprep.subr.bf16.mxu0 0
  %1336 = vmatpush1.bf16.msra.mxu0 %v990
  %1337 = vmatprep.subr.bf16.mxu0 0
  %1338 = vmatpush1.bf16.msra.mxu0 %v989
  %1339 = vmatprep.subr.bf16.mxu0 0
  %1340 = vmatpush1.bf16.msra.mxu0 %v988
  %1341 = vmatprep.subr.bf16.mxu0 0
  %1342 = vmatpush2.bf16.msra.mxu0 %v1003
  %1343 = vmatprep.subr.bf16.mxu0 0
  %1344 = vmatpush2.bf16.msra.mxu0 %v1002
  %1345 = vmatprep.subr.bf16.mxu0 0
  %1346 = vmatpush2.bf16.msra.mxu0 %v1001
  %1347 = vmatprep.subr.bf16.mxu0 0
  %1348 = vmatpush2.bf16.msra.mxu0 %v1000
  %1349 = vmatprep.subr.bf16.mxu0 0
  %1350 = vmatpush2.bf16.msra.mxu0 %v999
  %1351 = vmatprep.subr.bf16.mxu0 0
  %1352 = vmatpush2.bf16.msra.mxu0 %v998
  %1353 = vmatprep.subr.bf16.mxu0 0
  %1354 = vmatpush2.bf16.msra.mxu0 %v997
  %1355 = vmatprep.subr.bf16.mxu0 0
  %1356 = vmatpush2.bf16.msra.mxu0 %v996
  %1357 = vmatprep.mubr.bf16.mxu0 %v591
  %1358 = vmatmul.mubr.bf16.gmra.mxu0 %v590
  %v1359 = vpop.f32.mrf.mxu0
  %v1360 = vadd.f32 %v1071, %v1359
  %v1361 = vpop.f32.mrf.mxu0
  %v1362 = vpop.f32.mrf.mxu0
  %v1363 = vadd.f32 %v1074, %v1362
  %v1364 = vpop.f32.mrf.mxu0
  %1365 = vmatprep.mubr.bf16.mxu0 %v595
  %1366 = vmatmul.mubr.bf16.gmra.mxu0 %v594
  %v1367 = vpop.f32.mrf.mxu0
  %v1368 = vadd.f32 %v1079, %v1367
  %v1369 = vpop.f32.mrf.mxu0
  %v1370 = vpop.f32.mrf.mxu0
  %v1371 = vadd.f32 %v1082, %v1370
  %v1372 = vpop.f32.mrf.mxu0
  %1373 = vmatprep.mubr.bf16.mxu0 %v599
  %1374 = vmatmul.mubr.bf16.gmra.mxu0 %v598
  %v1375 = vpop.f32.mrf.mxu0
  %v1376 = vadd.f32 %v1087, %v1375
  %v1377 = vpop.f32.mrf.mxu0
  %v1378 = vpop.f32.mrf.mxu0
  %v1379 = vadd.f32 %v1090, %v1378
  %v1380 = vpop.f32.mrf.mxu0
  %1381 = vmatprep.mubr.bf16.mxu0 %v603
  %1382 = vmatmul.mubr.bf16.gmra.mxu0 %v602
  %v1383 = vpop.f32.mrf.mxu0
  %v1384 = vadd.f32 %v1095, %v1383
  %v1385 = vpop.f32.mrf.mxu0
  %v1386 = vpop.f32.mrf.mxu0
  %v1387 = vadd.f32 %v1098, %v1386
  %v1388 = vpop.f32.mrf.mxu0
  %1389 = vmatprep.mubr.bf16.mxu0 %v607
  %1390 = vmatmul.mubr.bf16.gmra.mxu0 %v606
  %v1391 = vpop.f32.mrf.mxu0
  %v1392 = vadd.f32 %v1103, %v1391
  %v1393 = vpop.f32.mrf.mxu0
  %v1394 = vpop.f32.mrf.mxu0
  %v1395 = vadd.f32 %v1106, %v1394
  %v1396 = vpop.f32.mrf.mxu0
  %1397 = vmatprep.mubr.bf16.mxu0 %v611
  %1398 = vmatmul.mubr.bf16.gmra.mxu0 %v610
  %v1399 = vpop.f32.mrf.mxu0
  %v1400 = vadd.f32 %v1111, %v1399
  %v1401 = vpop.f32.mrf.mxu0
  %v1402 = vpop.f32.mrf.mxu0
  %v1403 = vadd.f32 %v1114, %v1402
  %v1404 = vpop.f32.mrf.mxu0
  %1405 = vmatprep.mubr.bf16.mxu0 %v615
  %1406 = vmatmul.mubr.bf16.gmra.mxu0 %v614
  %v1407 = vpop.f32.mrf.mxu0
  %v1408 = vadd.f32 %v1119, %v1407
  %v1409 = vpop.f32.mrf.mxu0
  %v1410 = vpop.f32.mrf.mxu0
  %v1411 = vadd.f32 %v1122, %v1410
  %v1412 = vpop.f32.mrf.mxu0
  %1413 = vmatprep.mubr.bf16.mxu0 %v619
  %1414 = vmatmul.mubr.bf16.gmra.mxu0 %v618
  %v1415 = vpop.f32.mrf.mxu0
  %v1416 = vadd.f32 %v1127, %v1415
  %v1417 = vpop.f32.mrf.mxu0
  %v1418 = vpop.f32.mrf.mxu0
  %v1419 = vadd.f32 %v1130, %v1418
  %v1420 = vpop.f32.mrf.mxu0
  %1421 = vmatprep.mubr.bf16.mxu0 %v623
  %1422 = vmatmul.mubr.bf16.gmra.mxu0 %v622
  %v1423 = vpop.f32.mrf.mxu0
  %v1424 = vadd.f32 %v1135, %v1423
  %v1425 = vpop.f32.mrf.mxu0
  %v1426 = vpop.f32.mrf.mxu0
  %v1427 = vadd.f32 %v1138, %v1426
  %v1428 = vpop.f32.mrf.mxu0
  %1429 = vmatprep.mubr.bf16.mxu0 %v627
  %1430 = vmatmul.mubr.bf16.gmra.mxu0 %v626
  %v1431 = vpop.f32.mrf.mxu0
  %v1432 = vadd.f32 %v1143, %v1431
  %v1433 = vpop.f32.mrf.mxu0
  %v1434 = vpop.f32.mrf.mxu0
  %v1435 = vadd.f32 %v1146, %v1434
  %v1436 = vpop.f32.mrf.mxu0
  %1437 = vmatprep.mubr.bf16.mxu0 %v631
  %1438 = vmatmul.mubr.bf16.gmra.mxu0 %v630
  %v1439 = vpop.f32.mrf.mxu0
  %v1440 = vadd.f32 %v1151, %v1439
  %v1441 = vpop.f32.mrf.mxu0
  %v1442 = vpop.f32.mrf.mxu0
  %v1443 = vadd.f32 %v1154, %v1442
  %v1444 = vpop.f32.mrf.mxu0
  %1445 = vmatprep.mubr.bf16.mxu0 %v635
  %1446 = vmatmul.mubr.bf16.gmra.mxu0 %v634
  %v1447 = vpop.f32.mrf.mxu0
  %v1448 = vadd.f32 %v1159, %v1447
  %v1449 = vpop.f32.mrf.mxu0
  %v1450 = vpop.f32.mrf.mxu0
  %v1451 = vadd.f32 %v1162, %v1450
  %v1452 = vpop.f32.mrf.mxu0
  %1453 = vmatprep.mubr.bf16.mxu0 %v639
  %1454 = vmatmul.mubr.bf16.gmra.mxu0 %v638
  %v1455 = vpop.f32.mrf.mxu0
  %v1456 = vadd.f32 %v1167, %v1455
  %v1457 = vpop.f32.mrf.mxu0
  %v1458 = vpop.f32.mrf.mxu0
  %v1459 = vadd.f32 %v1170, %v1458
  %v1460 = vpop.f32.mrf.mxu0
  %1461 = vmatprep.mubr.bf16.mxu0 %v643
  %1462 = vmatmul.mubr.bf16.gmra.mxu0 %v642
  %v1463 = vpop.f32.mrf.mxu0
  %v1464 = vadd.f32 %v1175, %v1463
  %v1465 = vpop.f32.mrf.mxu0
  %v1466 = vpop.f32.mrf.mxu0
  %v1467 = vadd.f32 %v1178, %v1466
  %v1468 = vpop.f32.mrf.mxu0
  %1469 = vmatprep.mubr.bf16.mxu0 %v647
  %1470 = vmatmul.mubr.bf16.gmra.mxu0 %v646
  %v1471 = vpop.f32.mrf.mxu0
  %v1472 = vadd.f32 %v1183, %v1471
  %v1473 = vpop.f32.mrf.mxu0
  %v1474 = vpop.f32.mrf.mxu0
  %v1475 = vadd.f32 %v1186, %v1474
  %v1476 = vpop.f32.mrf.mxu0
  %1477 = vmatprep.mubr.bf16.mxu0 %v651
  %1478 = vmatmul.mubr.bf16.gmra.mxu0 %v650
  %v1479 = vpop.f32.mrf.mxu0
  %v1480 = vadd.f32 %v1191, %v1479
  %v1481 = vpop.f32.mrf.mxu0
  %v1482 = vpop.f32.mrf.mxu0
  %v1483 = vadd.f32 %v1194, %v1482
  %v1484 = vpop.f32.mrf.mxu0
  %1485 = vmatprep.mubr.bf16.mxu0 %v655
  %1486 = vmatmul.mubr.bf16.gmra.mxu0 %v654
  %v1487 = vpop.f32.mrf.mxu0
  %v1488 = vadd.f32 %v1199, %v1487
  %v1489 = vpop.f32.mrf.mxu0
  %v1490 = vpop.f32.mrf.mxu0
  %v1491 = vadd.f32 %v1202, %v1490
  %v1492 = vpop.f32.mrf.mxu0
  %1493 = vmatprep.mubr.bf16.mxu0 %v659
  %1494 = vmatmul.mubr.bf16.gmra.mxu0 %v658
  %v1495 = vpop.f32.mrf.mxu0
  %v1496 = vadd.f32 %v1207, %v1495
  %v1497 = vpop.f32.mrf.mxu0
  %v1498 = vpop.f32.mrf.mxu0
  %v1499 = vadd.f32 %v1210, %v1498
  %v1500 = vpop.f32.mrf.mxu0
  %1501 = vmatprep.mubr.bf16.mxu0 %v663
  %1502 = vmatmul.mubr.bf16.gmra.mxu0 %v662
  %v1503 = vpop.f32.mrf.mxu0
  %v1504 = vadd.f32 %v1215, %v1503
  %v1505 = vpop.f32.mrf.mxu0
  %v1506 = vpop.f32.mrf.mxu0
  %v1507 = vadd.f32 %v1218, %v1506
  %v1508 = vpop.f32.mrf.mxu0
  %1509 = vmatprep.mubr.bf16.mxu0 %v667
  %1510 = vmatmul.mubr.bf16.gmra.mxu0 %v666
  %v1511 = vpop.f32.mrf.mxu0
  %v1512 = vadd.f32 %v1223, %v1511
  %v1513 = vpop.f32.mrf.mxu0
  %v1514 = vpop.f32.mrf.mxu0
  %v1515 = vadd.f32 %v1226, %v1514
  %v1516 = vpop.f32.mrf.mxu0
  %1517 = vmatprep.mubr.bf16.mxu0 %v671
  %1518 = vmatmul.mubr.bf16.gmra.mxu0 %v670
  %v1519 = vpop.f32.mrf.mxu0
  %v1520 = vadd.f32 %v1231, %v1519
  %v1521 = vpop.f32.mrf.mxu0
  %v1522 = vpop.f32.mrf.mxu0
  %v1523 = vadd.f32 %v1234, %v1522
  %v1524 = vpop.f32.mrf.mxu0
  %1525 = vmatprep.mubr.bf16.mxu0 %v675
  %1526 = vmatmul.mubr.bf16.gmra.mxu0 %v674
  %v1527 = vpop.f32.mrf.mxu0
  %v1528 = vadd.f32 %v1239, %v1527
  %v1529 = vpop.f32.mrf.mxu0
  %v1530 = vpop.f32.mrf.mxu0
  %v1531 = vadd.f32 %v1242, %v1530
  %v1532 = vpop.f32.mrf.mxu0
  %1533 = vmatprep.mubr.bf16.mxu0 %v679
  %1534 = vmatmul.mubr.bf16.gmra.mxu0 %v678
  %v1535 = vpop.f32.mrf.mxu0
  %v1536 = vadd.f32 %v1247, %v1535
  %v1537 = vpop.f32.mrf.mxu0
  %v1538 = vpop.f32.mrf.mxu0
  %v1539 = vadd.f32 %v1250, %v1538
  %v1540 = vpop.f32.mrf.mxu0
  %1541 = vmatprep.mubr.bf16.mxu0 %v683
  %1542 = vmatmul.mubr.bf16.gmra.mxu0 %v682
  %v1543 = vpop.f32.mrf.mxu0
  %v1544 = vadd.f32 %v1255, %v1543
  %v1545 = vpop.f32.mrf.mxu0
  %v1546 = vpop.f32.mrf.mxu0
  %v1547 = vadd.f32 %v1258, %v1546
  %v1548 = vpop.f32.mrf.mxu0
  %1549 = vmatprep.mubr.bf16.mxu0 %v687
  %1550 = vmatmul.mubr.bf16.gmra.mxu0 %v686
  %v1551 = vpop.f32.mrf.mxu0
  %v1552 = vadd.f32 %v1263, %v1551
  %v1553 = vpop.f32.mrf.mxu0
  %v1554 = vpop.f32.mrf.mxu0
  %v1555 = vadd.f32 %v1266, %v1554
  %v1556 = vpop.f32.mrf.mxu0
  %1557 = vmatprep.mubr.bf16.mxu0 %v691
  %1558 = vmatmul.mubr.bf16.gmra.mxu0 %v690
  %v1559 = vpop.f32.mrf.mxu0
  %v1560 = vadd.f32 %v1271, %v1559
  %v1561 = vpop.f32.mrf.mxu0
  %v1562 = vpop.f32.mrf.mxu0
  %v1563 = vadd.f32 %v1274, %v1562
  %v1564 = vpop.f32.mrf.mxu0
  %1565 = vmatprep.mubr.bf16.mxu0 %v695
  %1566 = vmatmul.mubr.bf16.gmra.mxu0 %v694
  %v1567 = vpop.f32.mrf.mxu0
  %v1568 = vadd.f32 %v1279, %v1567
  %v1569 = vpop.f32.mrf.mxu0
  %v1570 = vpop.f32.mrf.mxu0
  %v1571 = vadd.f32 %v1282, %v1570
  %v1572 = vpop.f32.mrf.mxu0
  %1573 = vmatprep.mubr.bf16.mxu0 %v699
  %1574 = vmatmul.mubr.bf16.gmra.mxu0 %v698
  %v1575 = vpop.f32.mrf.mxu0
  %v1576 = vadd.f32 %v1287, %v1575
  %v1577 = vpop.f32.mrf.mxu0
  %v1578 = vpop.f32.mrf.mxu0
  %v1579 = vadd.f32 %v1290, %v1578
  %v1580 = vpop.f32.mrf.mxu0
  %1581 = vmatprep.mubr.bf16.mxu0 %v703
  %1582 = vmatmul.mubr.bf16.gmra.mxu0 %v702
  %v1583 = vpop.f32.mrf.mxu0
  %v1584 = vadd.f32 %v1295, %v1583
  %v1585 = vpop.f32.mrf.mxu0
  %v1586 = vpop.f32.mrf.mxu0
  %v1587 = vadd.f32 %v1298, %v1586
  %v1588 = vpop.f32.mrf.mxu0
  %1589 = vmatprep.mubr.bf16.mxu0 %v707
  %1590 = vmatmul.mubr.bf16.gmra.mxu0 %v706
  %v1591 = vpop.f32.mrf.mxu0
  %v1592 = vadd.f32 %v1303, %v1591
  %v1593 = vpop.f32.mrf.mxu0
  %v1594 = vpop.f32.mrf.mxu0
  %v1595 = vadd.f32 %v1306, %v1594
  %v1596 = vpop.f32.mrf.mxu0
  %1597 = vmatprep.mubr.bf16.mxu0 %v711
  %1598 = vmatmul.mubr.bf16.gmra.mxu0 %v710
  %v1599 = vpop.f32.mrf.mxu0
  %v1600 = vadd.f32 %v1311, %v1599
  %v1601 = vpop.f32.mrf.mxu0
  %v1602 = vpop.f32.mrf.mxu0
  %v1603 = vadd.f32 %v1314, %v1602
  %v1604 = vpop.f32.mrf.mxu0
  %1605 = vmatprep.mubr.bf16.mxu0 %v715
  %1606 = vmatmul.mubr.bf16.gmra.mxu0 %v714
  %v1607 = vpop.f32.mrf.mxu0
  %v1608 = vadd.f32 %v1319, %v1607
  %v1609 = vpop.f32.mrf.mxu0
  %v1610 = vpop.f32.mrf.mxu0
  %v1611 = vadd.f32 %v1322, %v1610
  %v1612 = vpop.f32.mrf.mxu0
  %1613 = vdwg.mxu0
  %v1614 = vtanh.pop %v1360
  %v1615 = vtanh.pop %v1363
  %v1616 = vtanh.pop %v1368
  %v1617 = vtanh.pop %v1371
  %v1618 = vtanh.pop %v1376
  %v1619 = vtanh.pop %v1379
  %v1620 = vtanh.pop %v1384
  %v1621 = vtanh.pop %v1387
  %v1622 = vtanh.pop %v1392
  %v1623 = vtanh.pop %v1395
  %v1624 = vtanh.pop %v1400
  %v1625 = vtanh.pop %v1403
  %v1626 = vtanh.pop %v1408
  %v1627 = vtanh.pop %v1411
  %v1628 = vtanh.pop %v1416
  %v1629 = vtanh.pop %v1419
  %v1630 = vtanh.pop %v1424
  %v1631 = vtanh.pop %v1427
  %v1632 = vtanh.pop %v1432
  %v1633 = vtanh.pop %v1435
  %v1634 = vtanh.pop %v1440
  %v1635 = vtanh.pop %v1443
  %v1636 = vtanh.pop %v1448
  %v1637 = vtanh.pop %v1451
  %v1638 = vtanh.pop %v1456
  %v1639 = vtanh.pop %v1459
  %v1640 = vtanh.pop %v1464
  %v1641 = vtanh.pop %v1467
  %v1642 = vtanh.pop %v1472
  %v1643 = vtanh.pop %v1475
  %v1644 = vtanh.pop %v1480
  %v1645 = vtanh.pop %v1483
  %v1646 = vtanh.pop %v1488
  %v1647 = vtanh.pop %v1491
  %v1648 = vtanh.pop %v1496
  %v1649 = vtanh.pop %v1499
  %v1650 = vtanh.pop %v1504
  %v1651 = vtanh.pop %v1507
  %v1652 = vtanh.pop %v1512
  %v1653 = vtanh.pop %v1515
  %v1654 = vtanh.pop %v1520
  %v1655 = vtanh.pop %v1523
  %v1656 = vtanh.pop %v1528
  %v1657 = vtanh.pop %v1531
  %v1658 = vtanh.pop %v1536
  %v1659 = vtanh.pop %v1539
  %v1660 = vtanh.pop %v1544
  %v1661 = vtanh.pop %v1547
  %v1662 = vtanh.pop %v1552
  %v1663 = vtanh.pop %v1555
  %v1664 = vtanh.pop %v1560
  %v1665 = vtanh.pop %v1563
  %v1666 = vtanh.pop %v1568
  %v1667 = vtanh.pop %v1571
  %v1668 = vtanh.pop %v1576
  %v1669 = vtanh.pop %v1579
  %v1670 = vtanh.pop %v1584
  %v1671 = vtanh.pop %v1587
  %v1672 = vtanh.pop %v1592
  %v1673 = vtanh.pop %v1595
  %v1674 = vtanh.pop %v1600
  %v1675 = vtanh.pop %v1603
  %v1676 = vtanh.pop %v1608
  %v1677 = vtanh.pop %v1611
  %v1678 = vtanh.pop %v1614
  %v1679 = vtanh.pop %v1615
  %v1680 = vtanh.pop %v1616
  %v1681 = vtanh.pop %v1617
  %v1682 = vtanh.pop %v1618
  %v1683 = vtanh.pop %v1619
  %v1684 = vtanh.pop %v1620
  %v1685 = vtanh.pop %v1621
  %v1686 = vtanh.pop %v1622
  %v1687 = vtanh.pop %v1623
  %v1688 = vtanh.pop %v1624
  %v1689 = vtanh.pop %v1625
  %v1690 = vtanh.pop %v1626
  %v1691 = vtanh.pop %v1627
  %v1692 = vtanh.pop %v1628
  %v1693 = vtanh.pop %v1629
  %v1694 = vtanh.pop %v1630
  %v1695 = vtanh.pop %v1631
  %v1696 = vtanh.pop %v1632
  %v1697 = vtanh.pop %v1633
  %v1698 = vtanh.pop %v1634
  %v1699 = vtanh.pop %v1635
  %v1700 = vtanh.pop %v1636
  %v1701 = vtanh.pop %v1637
  %v1702 = vtanh.pop %v1638
  %v1703 = vtanh.pop %v1639
  %v1704 = vtanh.pop %v1640
  %v1705 = vtanh.pop %v1641
  %v1706 = vtanh.pop %v1642
  %v1707 = vtanh.pop %v1643
  %v1708 = vtanh.pop %v1644
  %v1709 = vtanh.pop %v1645
  %v1710 = vtanh.pop %v1646
  %v1711 = vtanh.pop %v1647
  %v1712 = vtanh.pop %v1648
  %v1713 = vtanh.pop %v1649
  %v1714 = vtanh.pop %v1650
  %v1715 = vtanh.pop %v1651
  %v1716 = vtanh.pop %v1652
  %v1717 = vtanh.pop %v1653
  %v1718 = vtanh.pop %v1654
  %v1719 = vtanh.pop %v1655
  %v1720 = vtanh.pop %v1656
  %v1721 = vtanh.pop %v1657
  %v1722 = vtanh.pop %v1658
  %v1723 = vtanh.pop %v1659
  %v1724 = vtanh.pop %v1660
  %v1725 = vtanh.pop %v1661
  %v1726 = vtanh.pop %v1662
  %v1727 = vtanh.pop %v1663
  %v1728 = vtanh.pop %v1664
  %v1729 = vtanh.pop %v1665
  %v1730 = vtanh.pop %v1666
  %v1731 = vtanh.pop %v1667
  %v1732 = vtanh.pop %v1668
  %v1733 = vtanh.pop %v1669
  %v1734 = vtanh.pop %v1670
  %v1735 = vtanh.pop %v1671
  %v1736 = vtanh.pop %v1672
  %v1737 = vtanh.pop %v1673
  %v1738 = vtanh.pop %v1674
  %v1739 = vtanh.pop %v1675
  %v1740 = vtanh.pop %v1676
  %v1741 = vtanh.pop %v1677
  %1742 = vst [vmem:[%s2] sm:$0xff] %v1678
  %1743 = vst [vmem:[%s2 + $0x8] sm:$0xff] %v1679
  %1744 = vst [vmem:[%s2 + $0x10] sm:$0xff] %v1680
  %1745 = vst [vmem:[%s2 + $0x18] sm:$0xff] %v1681
  %1746 = vst [vmem:[%s2 + $0x20] sm:$0xff] %v1682
  %1747 = vst [vmem:[%s2 + $0x28] sm:$0xff] %v1683
  %1748 = vst [vmem:[%s2 + $0x30] sm:$0xff] %v1684
  %1749 = vst [vmem:[%s2 + $0x38] sm:$0xff] %v1685
  %1750 = vst [vmem:[%s2 + $0x40] sm:$0xff] %v1686
  %1751 = vst [vmem:[%s2 + $0x48] sm:$0xff] %v1687
  %1752 = vst [vmem:[%s2 + $0x50] sm:$0xff] %v1688
  %1753 = vst [vmem:[%s2 + $0x58] sm:$0xff] %v1689
  %1754 = vst [vmem:[%s2 + $0x60] sm:$0xff] %v1690
  %1755 = vst [vmem:[%s2 + $0x68] sm:$0xff] %v1691
  %1756 = vst [vmem:[%s2 + $0x70] sm:$0xff] %v1692
  %1757 = vst [vmem:[%s2 + $0x78] sm:$0xff] %v1693
  %1758 = vst [vmem:[%s2 + $0x80] sm:$0xff] %v1694
  %1759 = vst [vmem:[%s2 + $0x88] sm:$0xff] %v1695
  %1760 = vst [vmem:[%s2 + $0x90] sm:$0xff] %v1696
  %1761 = vst [vmem:[%s2 + $0x98] sm:$0xff] %v1697
  %1762 = vst [vmem:[%s2 + $0xa0] sm:$0xff] %v1698
  %1763 = vst [vmem:[%s2 + $0xa8] sm:$0xff] %v1699
  %1764 = vst [vmem:[%s2 + $0xb0] sm:$0xff] %v1700
  %1765 = vst [vmem:[%s2 + $0xb8] sm:$0xff] %v1701
  %1766 = vst [vmem:[%s2 + $0xc0] sm:$0xff] %v1702
  %1767 = vst [vmem:[%s2 + $0xc8] sm:$0xff] %v1703
  %1768 = vst [vmem:[%s2 + $0xd0] sm:$0xff] %v1704
  %1769 = vst [vmem:[%s2 + $0xd8] sm:$0xff] %v1705
  %1770 = vst [vmem:[%s2 + $0xe0] sm:$0xff] %v1706
  %1771 = vst [vmem:[%s2 + $0xe8] sm:$0xff] %v1707
  %1772 = vst [vmem:[%s2 + $0xf0] sm:$0xff] %v1708
  %1773 = vst [vmem:[%s2 + $0xf8] sm:$0xff] %v1709
  %1774 = vst [vmem:[%s2 + $0x100] sm:$0xff] %v1710
  %1775 = vst [vmem:[%s2 + $0x108] sm:$0xff] %v1711
  %1776 = vst [vmem:[%s2 + $0x110] sm:$0xff] %v1712
  %1777 = vst [vmem:[%s2 + $0x118] sm:$0xff] %v1713
  %1778 = vst [vmem:[%s2 + $0x120] sm:$0xff] %v1714
  %1779 = vst [vmem:[%s2 + $0x128] sm:$0xff] %v1715
  %1780 = vst [vmem:[%s2 + $0x130] sm:$0xff] %v1716
  %1781 = vst [vmem:[%s2 + $0x138] sm:$0xff] %v1717
  %1782 = vst [vmem:[%s2 + $0x140] sm:$0xff] %v1718
  %1783 = vst [vmem:[%s2 + $0x148] sm:$0xff] %v1719
  %1784 = vst [vmem:[%s2 + $0x150] sm:$0xff] %v1720
  %1785 = vst [vmem:[%s2 + $0x158] sm:$0xff] %v1721
  %1786 = vst [vmem:[%s2 + $0x160] sm:$0xff] %v1722
  %1787 = vst [vmem:[%s2 + $0x168] sm:$0xff] %v1723
  %1788 = vst [vmem:[%s2 + $0x170] sm:$0xff] %v1724
  %1789 = vst [vmem:[%s2 + $0x178] sm:$0xff] %v1725
  %1790 = vst [vmem:[%s2 + $0x180] sm:$0xff] %v1726
  %1791 = vst [vmem:[%s2 + $0x188] sm:$0xff] %v1727
  %1792 = vst [vmem:[%s2 + $0x190] sm:$0xff] %v1728
  %1793 = vst [vmem:[%s2 + $0x198] sm:$0xff] %v1729
  %1794 = vst [vmem:[%s2 + $0x1a0] sm:$0xff] %v1730
  %1795 = vst [vmem:[%s2 + $0x1a8] sm:$0xff] %v1731
  %1796 = vst [vmem:[%s2 + $0x1b0] sm:$0xff] %v1732
  %1797 = vst [vmem:[%s2 + $0x1b8] sm:$0xff] %v1733
  %1798 = vst [vmem:[%s2 + $0x1c0] sm:$0xff] %v1734
  %1799 = vst [vmem:[%s2 + $0x1c8] sm:$0xff] %v1735
  %1800 = vst [vmem:[%s2 + $0x1d0] sm:$0xff] %v1736
  %1801 = vst [vmem:[%s2 + $0x1d8] sm:$0xff] %v1737
  %1802 = vst [vmem:[%s2 + $0x1e0] sm:$0xff] %v1738
  %1803 = vst [vmem:[%s2 + $0x1e8] sm:$0xff] %v1739
  %1804 = vst [vmem:[%s2 + $0x1f0] sm:$0xff] %v1740
  %1805 = vst [vmem:[%s2 + $0x1f8] sm:$0xff] %v1741
  // Predicated region
  $region10: #{cycle_generator_forward.19} parent=0 // pred_check
    _
  $region11: #{cycle_generator_forward.19} parent=0 // pred_check_branch
    %1807 = sbr.rel (0) target = $region13
  $region12: #{cycle_generator_forward.19} parent=0 // pred_region
    _
  $region13: #{cycle_generator_forward.19} parent=0 // pred_fallthru
    _
  // Predicated region
  $region14: #{cycle_generator_forward.19} parent=0 // pred_check
    _
  $region15: #{cycle_generator_forward.19} parent=0 // pred_check_branch
    %1809 = sbr.rel (0) target = $region17
  $region16: #{cycle_generator_forward.19} parent=0 // pred_region
    _
  $region17: #{cycle_generator_forward.19} parent=0 // pred_fallthru
    _

</llo_original>
